<compile_context>
chip_gen: v7x
topology: tpu7x:2x2x1
jax: 0.10.0
libtpu: 0.0.40
codegen_flags: <defaults>
</compile_context>

<pallas_src>
import math

import jax
import jax.numpy as jnp
from jax.experimental import pallas as pl
from jax.experimental.pallas import tpu as pltpu

# ---- model dims (small, consistent with the forward) ----
B = 2                        # batch
C = 4                        # latent channels
H = W = 16                   # latent spatial
P = 2                        # patch size
N = (H // P) * (W // P)      # 64 latent tokens per batch element
PD = C * P * P               # 16 patch dim
D = 32                       # hidden / cross-attention dim
TXT = 8                      # text sequence length
NUM_TOKENS = 4               # ip-adapter image tokens
E = 64                       # CLIP image embedding dim
SINDIM = 32                  # sinusoidal timestep embedding dim
HALF = SINDIM // 2
EPS = 1e-6                   # LayerNorm eps of the synthesized Lumina-style blocks
LANES = 128

BN = B * N                   # 128 token rows (batch folded into the block)
S_TXT = B * TXT              # 16 flattened text context rows
S_ALL = S_TXT + B * NUM_TOKENS   # 24 total context rows (text + ip tokens)

# ---- weight-slab row offsets (one (W_ROWS, 128) f32 table) ----
WP0 = 0                      # (E, NUM_TOKENS*D) packed image-proj weight
WT1_0 = WP0 + E              # (SINDIM, D)  timestep MLP layer 1
WT2A_0 = WT1_0 + SINDIM      # (D, D)       timestep MLP layer 2, scale half
WT2B_0 = WT2A_0 + D          # (D, D)       timestep MLP layer 2, shift half
WPE0 = WT2B_0 + D            # (PD, D)      patch embed
WQ0 = WPE0 + PD              # (D, D)       query proj
WK0 = WQ0 + D                # (D, D)       key proj
WVO0 = WK0 + D               # (D, D)       value proj with wo folded in (wv @ wo)
WM1_0 = WVO0 + D             # (D, 4D)      MLP up
WM2_0 = WM1_0 + D            # (4D, D)      MLP down
WOUT0 = WM2_0 + 4 * D        # (PD, D)      final proj, pre-transposed
MASK0 = WOUT0 + PD           # (BN, S_ALL)  additive block-diagonal attention bias
OH0 = MASK0 + BN             # (BN, B)      batch one-hot for adaLN broadcast
VEC0 = OH0 + BN              # (VEC_ROWS, 128) packed bias/gain/freq rows
VEC_ROWS = 16
BOUT0 = VEC0 + VEC_ROWS      # (PD, 1)      output bias as a column
W_ROWS = BOUT0 + PD          # 736 rows total

# rows inside the VEC block
ROW_BPE, ROW_G2, ROW_B2, ROW_BM1, ROW_BM2, ROW_GF, ROW_BF = 0, 1, 2, 3, 4, 5, 6
ROW_BPROJ, ROW_GP, ROW_BETAP, ROW_BT1, ROW_BT2A, ROW_BT2B, ROW_FREQS = 7, 8, 9, 10, 11, 12, 13

# ---- activation-slab row offsets (one (A_ROWS, 128) f32 table) ----
APATCH0 = 0                  # (BN, PD) patchified latents
AEHS0 = APATCH0 + BN         # (S_TXT, D) flattened text context
AEMB0 = AEHS0 + S_TXT        # (B, E) image embeds
AT0 = AEMB0 + 8              # (B, 1) timesteps
A_ROWS = AT0 + 8             # 160 rows total


def _ln(x, eps=EPS):
    m = jnp.mean(x, axis=-1, keepdims=True)
    v = jnp.mean((x - m) ** 2, axis=-1, keepdims=True)
    return (x - m) * jax.lax.rsqrt(v + eps)


# --------------------------- fused forward kernel ---------------------------
def fused_kernel(w_ref, a_ref, o_ref, ctx_ref):
    def vec(row, n=D):                       # (1, n) bias/gain row, sliced per use
        r = VEC0 + row
        return w_ref[r:r + 1, 0:n]

    # ---- timestep embedding MLP -> per-batch adaLN scale / shift -----------
    t = a_ref[AT0:AT0 + B, 0:1]                                   # (B, 1)
    freqs = vec(ROW_FREQS, HALF)                                  # (1, HALF) precomputed
    args = t * freqs                                              # (B, HALF)
    temb = (jnp.dot(jnp.cos(args), w_ref[WT1_0:WT1_0 + HALF, 0:D],
                    preferred_element_type=jnp.float32)
            + jnp.dot(jnp.sin(args), w_ref[WT1_0 + HALF:WT1_0 + SINDIM, 0:D],
                      preferred_element_type=jnp.float32)
            + vec(ROW_BT1))
    temb = temb * jax.nn.sigmoid(temb)                            # SiLU (f32)
    tscale = (jnp.dot(temb, w_ref[WT2A_0:WT2A_0 + D, 0:D],
                      preferred_element_type=jnp.float32) + vec(ROW_BT2A))   # (B, D)
    tshift = (jnp.dot(temb, w_ref[WT2B_0:WT2B_0 + D, 0:D],
                      preferred_element_type=jnp.float32) + vec(ROW_BT2B))   # (B, D)

    onehot = w_ref[OH0:OH0 + BN, 0:B]                             # (BN, B) precomputed
    scale = jnp.dot(onehot, tscale, preferred_element_type=jnp.float32)      # (BN, D)
    shift = jnp.dot(onehot, tshift, preferred_element_type=jnp.float32)      # (BN, D)

    # ---- image_proj_model + context assembly into VMEM scratch -------------
    ctx_ref[0:S_TXT, :] = a_ref[AEHS0:AEHS0 + S_TXT, 0:D]         # text rows 0..15

    emb = a_ref[AEMB0:AEMB0 + B, 0:E]                             # (B, E)
    proj = (jnp.dot(emb, w_ref[WP0:WP0 + E, :],
                    preferred_element_type=jnp.float32)
            + vec(ROW_BPROJ, NUM_TOKENS * D))                     # (B, NUM_TOKENS*D)
    gp = vec(ROW_GP)
    betap = vec(ROW_BETAP)
    for tok in range(NUM_TOKENS):                                 # ip rows 16..23
        ch = proj[:, tok * D:(tok + 1) * D]                       # (B, D)
        ctx_ref[S_TXT + tok * B:S_TXT + (tok + 1) * B, :] = _ln(ch) * gp + betap

    # ---- DiT block on the full (BN, D) token slab ---------------------------
    x = (jnp.dot(a_ref[APATCH0:APATCH0 + BN, 0:PD], w_ref[WPE0:WPE0 + PD, 0:D],
                 preferred_element_type=jnp.float32) + vec(ROW_BPE))          # (BN, D)

    # adaLN-modulated cross attention (single head), block-diagonal over batch
    hmod = _ln(x) * (1.0 + scale) + shift
    q = jnp.dot(hmod, w_ref[WQ0:WQ0 + D, 0:D], preferred_element_type=jnp.float32)
    ctx = ctx_ref[...]                                            # (S_ALL, D)
    k = jnp.dot(ctx, w_ref[WK0:WK0 + D, 0:D], preferred_element_type=jnp.float32)
    v = jnp.dot(ctx, w_ref[WVO0:WVO0 + D, 0:D], preferred_element_type=jnp.float32)  # wo folded

    s = jax.lax.dot_general(q, k, (((1,), (1,)), ((), ())),
                            preferred_element_type=jnp.float32) * (1.0 / (D ** 0.5))
    s = s + w_ref[MASK0:MASK0 + BN, 0:S_ALL]                      # precomputed 0/-1e30 bias
    s = s - jnp.max(s, axis=-1, keepdims=True)
    es = jnp.exp(s)
    p = es * pl.reciprocal(jnp.sum(es, axis=-1, keepdims=True), approx=True)
    x = x + jnp.dot(p, v, preferred_element_type=jnp.float32)     # output proj already in v

    # feed-forward
    h2 = _ln(x) * vec(ROW_G2) + vec(ROW_B2)
    m = (jnp.dot(h2, w_ref[WM1_0:WM1_0 + D, :], preferred_element_type=jnp.float32)
         + vec(ROW_BM1, 4 * D))                                   # (BN, 4D)
    m = jax.nn.gelu(m)   # tanh-approx gelu; matches the synthesized DiT reference
    x = (x + jnp.dot(m, w_ref[WM2_0:WM2_0 + 4 * D, 0:D],
                     preferred_element_type=jnp.float32) + vec(ROW_BM2))

    # final norm + projection back to patch dim, emitted LANE-DENSE as (PD, BN)
    h3 = _ln(x) * vec(ROW_GF) + vec(ROW_BF)
    yT = jax.lax.dot_general(w_ref[WOUT0:WOUT0 + PD, 0:D], h3,
                             (((1,), (1,)), ((), ())),
                             preferred_element_type=jnp.float32)  # (PD, BN) = (16, 128)
    o_ref[...] = yT + w_ref[BOUT0:BOUT0 + PD, 0:1]


# ------------------------------ wrapper glue --------------------------------
def patchify(x, p):
    b, c, h, w = x.shape
    x = x.reshape(b, c, h // p, p, w // p, p)
    x = x.transpose(0, 2, 4, 1, 3, 5)
    return x.reshape(b, (h // p) * (w // p), c * p * p)


def unpatchify(x, p, c, h, w):
    b = x.shape[0]
    x = x.reshape(b, h // p, w // p, c, p, p)
    x = x.transpose(0, 3, 1, 4, 2, 5)
    return x.reshape(b, c, h, w)


def ip_adapter_forward(params, noisy_latents, timesteps, encoder_hidden_states, image_embeds):
    patches = patchify(noisy_latents, P).reshape(BN, PD)              # (128, 16)
    ehs_flat = encoder_hidden_states.reshape(S_TXT, D)                # (16, 32)
    t2d = timesteps.astype(jnp.float32).reshape(B, 1)                 # (2, 1)

    # pack per-call activations into one lane-dense slab (single DMA)
    aslab = jnp.zeros((A_ROWS, LANES), jnp.float32)
    aslab = aslab.at[APATCH0:APATCH0 + BN, 0:PD].set(patches)
    aslab = aslab.at[AEHS0:AEHS0 + S_TXT, 0:D].set(ehs_flat)
    aslab = aslab.at[AEMB0:AEMB0 + B, 0:E].set(image_embeds.astype(jnp.float32))
    aslab = aslab.at[AT0:AT0 + B, 0:1].set(t2d)

    vmem = pltpu.MemorySpace.VMEM
    out_t = pl.pallas_call(
        fused_kernel,
        out_shape=jax.ShapeDtypeStruct((PD, BN), jnp.float32),
        in_specs=[pl.BlockSpec(memory_space=vmem),    # weight/constant slab
                  pl.BlockSpec(memory_space=vmem)],   # activation slab
        out_specs=pl.BlockSpec(memory_space=vmem),
        scratch_shapes=[pltpu.VMEM((S_ALL, D), jnp.float32)],  # context buffer
    )(params["wslab"], aslab)

    y = out_t.T.reshape(B, N, PD)     # wrapper-side layout plumbing only
    return unpatchify(y, P, C, H, W)


# ------------------------------- parameters ---------------------------------
def init_params(key):
    ks = jax.random.split(key, 12)

    def nrm(k, shape, scale=0.02):
        return (scale * jax.random.normal(k, shape)).astype(jnp.float32)

    # image_proj_model: per-token Linear (NUM_TOKENS, E, D) + shared LayerNorm
    w_proj = nrm(ks[0], (NUM_TOKENS, E, D))
    b_proj = jnp.zeros((NUM_TOKENS, D), jnp.float32)
    gp = jnp.ones((D,), jnp.float32)
    betap = jnp.zeros((D,), jnp.float32)

    # DiT block
    wpe = nrm(ks[1], (PD, D)); bpe = jnp.zeros((D,), jnp.float32)
    wt1 = nrm(ks[2], (SINDIM, D)); bt1 = jnp.zeros((D,), jnp.float32)
    wt2 = nrm(ks[3], (D, 2 * D)); bt2 = jnp.zeros((2 * D,), jnp.float32)
    wq = nrm(ks[4], (D, D)); wk = nrm(ks[5], (D, D))
    wv = nrm(ks[6], (D, D)); wo = nrm(ks[7], (D, D))
    g2 = jnp.ones((D,), jnp.float32); b2 = jnp.zeros((D,), jnp.float32)
    wm1 = nrm(ks[8], (D, 4 * D)); bm1 = jnp.zeros((4 * D,), jnp.float32)
    wm2 = nrm(ks[9], (4 * D, D)); bm2 = jnp.zeros((D,), jnp.float32)
    gf = jnp.ones((D,), jnp.float32); bf = jnp.zeros((D,), jnp.float32)
    wout = nrm(ks[10], (D, PD)); bout = jnp.zeros((PD,), jnp.float32)

    # ---- host-side folds / constant precompute (all free at init time) ----
    wp_packed = w_proj.transpose(1, 0, 2).reshape(E, NUM_TOKENS * D)  # lane = tok*D + d
    wvo = wv @ wo                                                      # fold output proj into V
    wt2a, wt2b = wt2[:, 0:D], wt2[:, D:2 * D]
    bt2a, bt2b = bt2[0:D], bt2[D:2 * D]
    wout_t = wout.T                                                    # (PD, D)

    freqs = jnp.exp((-math.log(10000.0) / HALF)
                    * jnp.arange(HALF, dtype=jnp.float32))             # (HALF,)
    onehot = (jnp.arange(BN)[:, None] // N
              == jnp.arange(B)[None, :]).astype(jnp.float32)           # (BN, B)
    qb = jnp.arange(BN) // N                                           # query-row batch id
    kb = jnp.concatenate([jnp.arange(S_TXT) // TXT,                    # text-row batch id
                          jnp.arange(B * NUM_TOKENS) % B])             # ip-row batch id
    mask = jnp.where(qb[:, None] == kb[None, :], 0.0, -1e30).astype(jnp.float32)

    # ---- pack everything into ONE (W_ROWS, 128) slab (single DMA) ----
    wslab = jnp.zeros((W_ROWS, LANES), jnp.float32)

    def put(slab, r0, mat):
        mat = jnp.asarray(mat, jnp.float32)
        return slab.at[r0:r0 + mat.shape[0], 0:mat.shape[1]].set(mat)

    def putrow(slab, r0, v):
        v = jnp.asarray(v, jnp.float32).reshape(1, -1)
        return slab.at[r0:r0 + 1, 0:v.shape[1]].set(v)

    wslab = put(wslab, WP0, wp_packed)
    wslab = put(wslab, WT1_0, wt1)
    wslab = put(wslab, WT2A_0, wt2a)
    wslab = put(wslab, WT2B_0, wt2b)
    wslab = put(wslab, WPE0, wpe)
    wslab = put(wslab, WQ0, wq)
    wslab = put(wslab, WK0, wk)
    wslab = put(wslab, WVO0, wvo)
    wslab = put(wslab, WM1_0, wm1)
    wslab = put(wslab, WM2_0, wm2)
    wslab = put(wslab, WOUT0, wout_t)
    wslab = put(wslab, MASK0, mask)
    wslab = put(wslab, OH0, onehot)
    wslab = putrow(wslab, VEC0 + ROW_BPE, bpe)
    wslab = putrow(wslab, VEC0 + ROW_G2, g2)
    wslab = putrow(wslab, VEC0 + ROW_B2, b2)
    wslab = putrow(wslab, VEC0 + ROW_BM1, bm1)
    wslab = putrow(wslab, VEC0 + ROW_BM2, bm2)
    wslab = putrow(wslab, VEC0 + ROW_GF, gf)
    wslab = putrow(wslab, VEC0 + ROW_BF, bf)
    wslab = putrow(wslab, VEC0 + ROW_BPROJ, b_proj.reshape(-1))
    wslab = putrow(wslab, VEC0 + ROW_GP, gp)
    wslab = putrow(wslab, VEC0 + ROW_BETAP, betap)
    wslab = putrow(wslab, VEC0 + ROW_BT1, bt1)
    wslab = putrow(wslab, VEC0 + ROW_BT2A, bt2a)
    wslab = putrow(wslab, VEC0 + ROW_BT2B, bt2b)
    wslab = putrow(wslab, VEC0 + ROW_FREQS, freqs)
    wslab = put(wslab, BOUT0, bout.reshape(PD, 1))

    return {"wslab": wslab}


if __name__ == "__main__":
    key = jax.random.PRNGKey(0)
    kp, k1, k2, k3, k4 = jax.random.split(key, 5)
    params = init_params(kp)

    noisy_latents = jax.random.normal(k1, (B, C, H, W), jnp.float32)
    timesteps = jax.random.randint(k2, (B,), 0, 1000).astype(jnp.float32)
    encoder_hidden_states = jax.random.normal(k3, (B, TXT, D), jnp.float32)
    image_embeds = jax.random.normal(k4, (B, E), jnp.float32)

    fwd = jax.jit(ip_adapter_forward)
    noise_pred = fwd(params, noisy_latents, timesteps, encoder_hidden_states, image_embeds)
    jax.block_until_ready(noise_pred)
    assert noise_pred.shape == (B, C, H, W)
    assert bool(jnp.all(jnp.isfinite(noise_pred)))
    print("KERNEL_OK")
</pallas_src>

<mosaic_0001>
module attributes {stable_mosaic.version = 11 : i64} {
  func.func @fused_kernel(%arg0: memref<736x128xf32, #tpu.memory_space<vmem>>, %arg1: memref<160x128xf32, #tpu.memory_space<vmem>>, %arg2: memref<16x128xf32, #tpu.memory_space<vmem>>, %arg3: memref<24x32xf32, #tpu.memory_space<vmem>>) attributes {dimension_semantics = [], scalar_prefetch = 0 : i64, scratch_operands = 1 : i64, tpu.core_type = #tpu.core_type<tc>} {
    %c152 = arith.constant 152 : index
    %c0 = arith.constant 0 : index
    %0 = vector.load %arg1[%c152, %c0] : memref<160x128xf32, #tpu.memory_space<vmem>>, vector<2x1xf32>
    %c717 = arith.constant 717 : index
    %c0_0 = arith.constant 0 : index
    %1 = vector.load %arg0[%c717, %c0_0] : memref<736x128xf32, #tpu.memory_space<vmem>>, vector<1x16xf32>
    %2 = vector.broadcast %0 : vector<2x1xf32> to vector<2x16xf32>
    %3 = vector.broadcast %1 : vector<1x16xf32> to vector<2x16xf32>
    %4 = arith.mulf %2, %3 : vector<2x16xf32>
    %5 = math.cos %4 : vector<2x16xf32>
    %c64 = arith.constant 64 : index
    %c0_1 = arith.constant 0 : index
    %6 = vector.load %arg0[%c64, %c0_1] : memref<736x128xf32, #tpu.memory_space<vmem>>, vector<16x32xf32>
    %cst = arith.constant dense<0.000000e+00> : vector<2x32xf32>
    %7 = tpu.matmul %5, %6, %cst {dimension_numbers = #tpu.dot_dimension_numbers<[1], [0], [0], [1], [0, 0, 1, 1], [], []>} : vector<2x16xf32>, vector<16x32xf32>, vector<2x32xf32> -> vector<2x32xf32>
    %8 = math.sin %4 : vector<2x16xf32>
    %c80 = arith.constant 80 : index
    %c0_2 = arith.constant 0 : index
    %9 = vector.load %arg0[%c80, %c0_2] : memref<736x128xf32, #tpu.memory_space<vmem>>, vector<16x32xf32>
    %cst_3 = arith.constant dense<0.000000e+00> : vector<2x32xf32>
    %10 = tpu.matmul %8, %9, %cst_3 {dimension_numbers = #tpu.dot_dimension_numbers<[1], [0], [0], [1], [0, 0, 1, 1], [], []>} : vector<2x16xf32>, vector<16x32xf32>, vector<2x32xf32> -> vector<2x32xf32>
    %11 = arith.addf %7, %10 : vector<2x32xf32>
    %c714 = arith.constant 714 : index
    %c0_4 = arith.constant 0 : index
    %12 = vector.load %arg0[%c714, %c0_4] : memref<736x128xf32, #tpu.memory_space<vmem>>, vector<1x32xf32>
    %13 = vector.broadcast %12 : vector<1x32xf32> to vector<2x32xf32>
    %14 = arith.addf %11, %13 : vector<2x32xf32>
    %15 = arith.negf %14 : vector<2x32xf32>
    %16 = math.exp %15 : vector<2x32xf32>
    %cst_5 = arith.constant 1.000000e+00 : f32
    %17 = vector.broadcast %cst_5 : f32 to vector<2x32xf32>
    %18 = arith.addf %17, %16 : vector<2x32xf32>
    %19 = arith.divf %17, %18 : vector<2x32xf32>
    %20 = arith.mulf %14, %19 : vector<2x32xf32>
    %c96 = arith.constant 96 : index
    %c0_6 = arith.constant 0 : index
    %21 = vector.load %arg0[%c96, %c0_6] : memref<736x128xf32, #tpu.memory_space<vmem>>, vector<32x32xf32>
    %cst_7 = arith.constant dense<0.000000e+00> : vector<2x32xf32>
    %22 = tpu.matmul %20, %21, %cst_7 {dimension_numbers = #tpu.dot_dimension_numbers<[1], [0], [0], [1], [0, 0, 1, 1], [], []>} : vector<2x32xf32>, vector<32x32xf32>, vector<2x32xf32> -> vector<2x32xf32>
    %c715 = arith.constant 715 : index
    %c0_8 = arith.constant 0 : index
    %23 = vector.load %arg0[%c715, %c0_8] : memref<736x128xf32, #tpu.memory_space<vmem>>, vector<1x32xf32>
    %24 = vector.broadcast %23 : vector<1x32xf32> to vector<2x32xf32>
    %25 = arith.addf %22, %24 : vector<2x32xf32>
    %c128 = arith.constant 128 : index
    %c0_9 = arith.constant 0 : index
    %26 = vector.load %arg0[%c128, %c0_9] : memref<736x128xf32, #tpu.memory_space<vmem>>, vector<32x32xf32>
    %cst_10 = arith.constant dense<0.000000e+00> : vector<2x32xf32>
    %27 = tpu.matmul %20, %26, %cst_10 {dimension_numbers = #tpu.dot_dimension_numbers<[1], [0], [0], [1], [0, 0, 1, 1], [], []>} : vector<2x32xf32>, vector<32x32xf32>, vector<2x32xf32> -> vector<2x32xf32>
    %c716 = arith.constant 716 : index
    %c0_11 = arith.constant 0 : index
    %28 = vector.load %arg0[%c716, %c0_11] : memref<736x128xf32, #tpu.memory_space<vmem>>, vector<1x32xf32>
    %29 = vector.broadcast %28 : vector<1x32xf32> to vector<2x32xf32>
    %30 = arith.addf %27, %29 : vector<2x32xf32>
    %c576 = arith.constant 576 : index
    %c0_12 = arith.constant 0 : index
    %31 = vector.load %arg0[%c576, %c0_12] : memref<736x128xf32, #tpu.memory_space<vmem>>, vector<128x2xf32>
    %cst_13 = arith.constant dense<0.000000e+00> : vector<128x32xf32>
    %32 = tpu.matmul %31, %25, %cst_13 {dimension_numbers = #tpu.dot_dimension_numbers<[1], [0], [0], [1], [0, 0, 1, 1], [], []>} : vector<128x2xf32>, vector<2x32xf32>, vector<128x32xf32> -> vector<128x32xf32>
    %cst_14 = arith.constant dense<0.000000e+00> : vector<128x32xf32>
    %33 = tpu.matmul %31, %30, %cst_14 {dimension_numbers = #tpu.dot_dimension_numbers<[1], [0], [0], [1], [0, 0, 1, 1], [], []>} : vector<128x2xf32>, vector<2x32xf32>, vector<128x32xf32> -> vector<128x32xf32>
    %c128_15 = arith.constant 128 : index
    %c0_16 = arith.constant 0 : index
    %34 = vector.load %arg1[%c128_15, %c0_16] : memref<160x128xf32, #tpu.memory_space<vmem>>, vector<16x32xf32>
    %c0_17 = arith.constant 0 : index
    %c0_18 = arith.constant 0 : index
    %35 = vector.load %arg3[%c0_17, %c0_18] : memref<24x32xf32, #tpu.memory_space<vmem>>, vector<16x32xf32>
    tpu.vector_store %arg3[%c0_17, %c0_18], %34 {strides = array<i32>} : memref<24x32xf32, #tpu.memory_space<vmem>>, vector<16x32xf32>,
    %c144 = arith.constant 144 : index
    %c0_19 = arith.constant 0 : index
    %36 = vector.load %arg1[%c144, %c0_19] : memref<160x128xf32, #tpu.memory_space<vmem>>, vector<2x64xf32>
    %c0_20 = arith.constant 0 : index
    %c0_21 = arith.constant 0 : index
    %37 = vector.load %arg0[%c0_20, %c0_21] : memref<736x128xf32, #tpu.memory_space<vmem>>, vector<64x128xf32>
    %cst_22 = arith.constant dense<0.000000e+00> : vector<2x128xf32>
    %38 = tpu.matmul %36, %37, %cst_22 {dimension_numbers = #tpu.dot_dimension_numbers<[1], [0], [0], [1], [0, 0, 1, 1], [], []>} : vector<2x64xf32>, vector<64x128xf32>, vector<2x128xf32> -> vector<2x128xf32>
    %c711 = arith.constant 711 : index
    %c0_23 = arith.constant 0 : index
    %39 = vector.load %arg0[%c711, %c0_23] : memref<736x128xf32, #tpu.memory_space<vmem>>, vector<1x128xf32>
    %40 = vector.broadcast %39 : vector<1x128xf32> to vector<2x128xf32>
    %41 = arith.addf %38, %40 : vector<2x128xf32>
    %c712 = arith.constant 712 : index
    %c0_24 = arith.constant 0 : index
    %42 = vector.load %arg0[%c712, %c0_24] : memref<736x128xf32, #tpu.memory_space<vmem>>, vector<1x32xf32>
    %c713 = arith.constant 713 : index
    %c0_25 = arith.constant 0 : index
    %43 = vector.load %arg0[%c713, %c0_25] : memref<736x128xf32, #tpu.memory_space<vmem>>, vector<1x32xf32>
    %44 = vector.extract_strided_slice %41 {offsets = [0, 0], sizes = [2, 32], strides = [1, 1]} : vector<2x128xf32> to vector<2x32xf32>
    %cst_26 = arith.constant dense<0.000000e+00> : vector<2xf32>
    %45 = vector.multi_reduction <add>, %44, %cst_26 [1] : vector<2x32xf32> to vector<2xf32>
    %46 = vector.shape_cast %45 : vector<2xf32> to vector<2x1xf32>
    %cst_27 = arith.constant 3.200000e+01 : f32
    %47 = vector.broadcast %cst_27 : f32 to vector<2x1xf32>
    %48 = arith.divf %46, %47 : vector<2x1xf32>
    %49 = vector.broadcast %48 : vector<2x1xf32> to vector<2x32xf32>
    %50 = arith.subf %44, %49 : vector<2x32xf32>
    %51 = arith.mulf %50, %50 : vector<2x32xf32>
    %cst_28 = arith.constant dense<0.000000e+00> : vector<2xf32>
    %52 = vector.multi_reduction <add>, %51, %cst_28 [1] : vector<2x32xf32> to vector<2xf32>
    %53 = vector.shape_cast %52 : vector<2xf32> to vector<2x1xf32>
    %cst_29 = arith.constant 3.200000e+01 : f32
    %54 = vector.broadcast %cst_29 : f32 to vector<2x1xf32>
    %55 = arith.divf %53, %54 : vector<2x1xf32>
    %56 = vector.broadcast %48 : vector<2x1xf32> to vector<2x32xf32>
    %57 = arith.subf %44, %56 : vector<2x32xf32>
    %cst_30 = arith.constant 9.99999997E-7 : f32
    %58 = vector.broadcast %cst_30 : f32 to vector<2x1xf32>
    %59 = arith.addf %55, %58 : vector<2x1xf32>
    %60 = math.rsqrt %59 : vector<2x1xf32>
    %61 = vector.broadcast %60 : vector<2x1xf32> to vector<2x32xf32>
    %62 = arith.mulf %57, %61 : vector<2x32xf32>
    %63 = vector.broadcast %42 : vector<1x32xf32> to vector<2x32xf32>
    %64 = arith.mulf %62, %63 : vector<2x32xf32>
    %65 = vector.broadcast %43 : vector<1x32xf32> to vector<2x32xf32>
    %66 = arith.addf %64, %65 : vector<2x32xf32>
    %c16 = arith.constant 16 : index
    %c0_31 = arith.constant 0 : index
    %67 = vector.load %arg3[%c16, %c0_31] : memref<24x32xf32, #tpu.memory_space<vmem>>, vector<2x32xf32>
    tpu.vector_store %arg3[%c16, %c0_31], %66 {strides = array<i32>} : memref<24x32xf32, #tpu.memory_space<vmem>>, vector<2x32xf32>,
    %68 = vector.extract_strided_slice %41 {offsets = [0, 32], sizes = [2, 32], strides = [1, 1]} : vector<2x128xf32> to vector<2x32xf32>
    %cst_32 = arith.constant dense<0.000000e+00> : vector<2xf32>
    %69 = vector.multi_reduction <add>, %68, %cst_32 [1] : vector<2x32xf32> to vector<2xf32>
    %70 = vector.shape_cast %69 : vector<2xf32> to vector<2x1xf32>
    %cst_33 = arith.constant 3.200000e+01 : f32
    %71 = vector.broadcast %cst_33 : f32 to vector<2x1xf32>
    %72 = arith.divf %70, %71 : vector<2x1xf32>
    %73 = vector.broadcast %72 : vector<2x1xf32> to vector<2x32xf32>
    %74 = arith.subf %68, %73 : vector<2x32xf32>
    %75 = arith.mulf %74, %74 : vector<2x32xf32>
    %cst_34 = arith.constant dense<0.000000e+00> : vector<2xf32>
    %76 = vector.multi_reduction <add>, %75, %cst_34 [1] : vector<2x32xf32> to vector<2xf32>
    %77 = vector.shape_cast %76 : vector<2xf32> to vector<2x1xf32>
    %cst_35 = arith.constant 3.200000e+01 : f32
    %78 = vector.broadcast %cst_35 : f32 to vector<2x1xf32>
    %79 = arith.divf %77, %78 : vector<2x1xf32>
    %80 = vector.broadcast %72 : vector<2x1xf32> to vector<2x32xf32>
    %81 = arith.subf %68, %80 : vector<2x32xf32>
    %cst_36 = arith.constant 9.99999997E-7 : f32
    %82 = vector.broadcast %cst_36 : f32 to vector<2x1xf32>
    %83 = arith.addf %79, %82 : vector<2x1xf32>
    %84 = math.rsqrt %83 : vector<2x1xf32>
    %85 = vector.broadcast %84 : vector<2x1xf32> to vector<2x32xf32>
    %86 = arith.mulf %81, %85 : vector<2x32xf32>
    %87 = vector.broadcast %42 : vector<1x32xf32> to vector<2x32xf32>
    %88 = arith.mulf %86, %87 : vector<2x32xf32>
    %89 = vector.broadcast %43 : vector<1x32xf32> to vector<2x32xf32>
    %90 = arith.addf %88, %89 : vector<2x32xf32>
    %c18 = arith.constant 18 : index
    %c0_37 = arith.constant 0 : index
    %91 = vector.load %arg3[%c18, %c0_37] : memref<24x32xf32, #tpu.memory_space<vmem>>, vector<2x32xf32>
    tpu.vector_store %arg3[%c18, %c0_37], %90 {strides = array<i32>} : memref<24x32xf32, #tpu.memory_space<vmem>>, vector<2x32xf32>,
    %92 = vector.extract_strided_slice %41 {offsets = [0, 64], sizes = [2, 32], strides = [1, 1]} : vector<2x128xf32> to vector<2x32xf32>
    %cst_38 = arith.constant dense<0.000000e+00> : vector<2xf32>
    %93 = vector.multi_reduction <add>, %92, %cst_38 [1] : vector<2x32xf32> to vector<2xf32>
    %94 = vector.shape_cast %93 : vector<2xf32> to vector<2x1xf32>
    %cst_39 = arith.constant 3.200000e+01 : f32
    %95 = vector.broadcast %cst_39 : f32 to vector<2x1xf32>
    %96 = arith.divf %94, %95 : vector<2x1xf32>
    %97 = vector.broadcast %96 : vector<2x1xf32> to vector<2x32xf32>
    %98 = arith.subf %92, %97 : vector<2x32xf32>
    %99 = arith.mulf %98, %98 : vector<2x32xf32>
    %cst_40 = arith.constant dense<0.000000e+00> : vector<2xf32>
    %100 = vector.multi_reduction <add>, %99, %cst_40 [1] : vector<2x32xf32> to vector<2xf32>
    %101 = vector.shape_cast %100 : vector<2xf32> to vector<2x1xf32>
    %cst_41 = arith.constant 3.200000e+01 : f32
    %102 = vector.broadcast %cst_41 : f32 to vector<2x1xf32>
    %103 = arith.divf %101, %102 : vector<2x1xf32>
    %104 = vector.broadcast %96 : vector<2x1xf32> to vector<2x32xf32>
    %105 = arith.subf %92, %104 : vector<2x32xf32>
    %cst_42 = arith.constant 9.99999997E-7 : f32
    %106 = vector.broadcast %cst_42 : f32 to vector<2x1xf32>
    %107 = arith.addf %103, %106 : vector<2x1xf32>
    %108 = math.rsqrt %107 : vector<2x1xf32>
    %109 = vector.broadcast %108 : vector<2x1xf32> to vector<2x32xf32>
    %110 = arith.mulf %105, %109 : vector<2x32xf32>
    %111 = vector.broadcast %42 : vector<1x32xf32> to vector<2x32xf32>
    %112 = arith.mulf %110, %111 : vector<2x32xf32>
    %113 = vector.broadcast %43 : vector<1x32xf32> to vector<2x32xf32>
    %114 = arith.addf %112, %113 : vector<2x32xf32>
    %c20 = arith.constant 20 : index
    %c0_43 = arith.constant 0 : index
    %115 = vector.load %arg3[%c20, %c0_43] : memref<24x32xf32, #tpu.memory_space<vmem>>, vector<2x32xf32>
    tpu.vector_store %arg3[%c20, %c0_43], %114 {strides = array<i32>} : memref<24x32xf32, #tpu.memory_space<vmem>>, vector<2x32xf32>,
    %116 = vector.extract_strided_slice %41 {offsets = [0, 96], sizes = [2, 32], strides = [1, 1]} : vector<2x128xf32> to vector<2x32xf32>
    %cst_44 = arith.constant dense<0.000000e+00> : vector<2xf32>
    %117 = vector.multi_reduction <add>, %116, %cst_44 [1] : vector<2x32xf32> to vector<2xf32>
    %118 = vector.shape_cast %117 : vector<2xf32> to vector<2x1xf32>
    %cst_45 = arith.constant 3.200000e+01 : f32
    %119 = vector.broadcast %cst_45 : f32 to vector<2x1xf32>
    %120 = arith.divf %118, %119 : vector<2x1xf32>
    %121 = vector.broadcast %120 : vector<2x1xf32> to vector<2x32xf32>
    %122 = arith.subf %116, %121 : vector<2x32xf32>
    %123 = arith.mulf %122, %122 : vector<2x32xf32>
    %cst_46 = arith.constant dense<0.000000e+00> : vector<2xf32>
    %124 = vector.multi_reduction <add>, %123, %cst_46 [1] : vector<2x32xf32> to vector<2xf32>
    %125 = vector.shape_cast %124 : vector<2xf32> to vector<2x1xf32>
    %cst_47 = arith.constant 3.200000e+01 : f32
    %126 = vector.broadcast %cst_47 : f32 to vector<2x1xf32>
    %127 = arith.divf %125, %126 : vector<2x1xf32>
    %128 = vector.broadcast %120 : vector<2x1xf32> to vector<2x32xf32>
    %129 = arith.subf %116, %128 : vector<2x32xf32>
    %cst_48 = arith.constant 9.99999997E-7 : f32
    %130 = vector.broadcast %cst_48 : f32 to vector<2x1xf32>
    %131 = arith.addf %127, %130 : vector<2x1xf32>
    %132 = math.rsqrt %131 : vector<2x1xf32>
    %133 = vector.broadcast %132 : vector<2x1xf32> to vector<2x32xf32>
    %134 = arith.mulf %129, %133 : vector<2x32xf32>
    %135 = vector.broadcast %42 : vector<1x32xf32> to vector<2x32xf32>
    %136 = arith.mulf %134, %135 : vector<2x32xf32>
    %137 = vector.broadcast %43 : vector<1x32xf32> to vector<2x32xf32>
    %138 = arith.addf %136, %137 : vector<2x32xf32>
    %c22 = arith.constant 22 : index
    %c0_49 = arith.constant 0 : index
    %139 = vector.load %arg3[%c22, %c0_49] : memref<24x32xf32, #tpu.memory_space<vmem>>, vector<2x32xf32>
    tpu.vector_store %arg3[%c22, %c0_49], %138 {strides = array<i32>} : memref<24x32xf32, #tpu.memory_space<vmem>>, vector<2x32xf32>,
    %c0_50 = arith.constant 0 : index
    %c0_51 = arith.constant 0 : index
    %140 = vector.load %arg1[%c0_50, %c0_51] : memref<160x128xf32, #tpu.memory_space<vmem>>, vector<128x16xf32>
    %c160 = arith.constant 160 : index
    %c0_52 = arith.constant 0 : index
    %141 = vector.load %arg0[%c160, %c0_52] : memref<736x128xf32, #tpu.memory_space<vmem>>, vector<16x32xf32>
    %cst_53 = arith.constant dense<0.000000e+00> : vector<128x32xf32>
    %142 = tpu.matmul %140, %141, %cst_53 {dimension_numbers = #tpu.dot_dimension_numbers<[1], [0], [0], [1], [0, 0, 1, 1], [], []>} : vector<128x16xf32>, vector<16x32xf32>, vector<128x32xf32> -> vector<128x32xf32>
    %c704 = arith.constant 704 : index
    %c0_54 = arith.constant 0 : index
    %143 = vector.load %arg0[%c704, %c0_54] : memref<736x128xf32, #tpu.memory_space<vmem>>, vector<1x32xf32>
    %144 = vector.broadcast %143 : vector<1x32xf32> to vector<128x32xf32>
    %145 = arith.addf %142, %144 : vector<128x32xf32>
    %cst_55 = arith.constant dense<0.000000e+00> : vector<128xf32>
    %146 = vector.multi_reduction <add>, %145, %cst_55 [1] : vector<128x32xf32> to vector<128xf32>
    %147 = vector.shape_cast %146 : vector<128xf32> to vector<128x1xf32>
    %cst_56 = arith.constant 3.200000e+01 : f32
    %148 = vector.broadcast %cst_56 : f32 to vector<128x1xf32>
    %149 = arith.divf %147, %148 : vector<128x1xf32>
    %150 = vector.broadcast %149 : vector<128x1xf32> to vector<128x32xf32>
    %151 = arith.subf %145, %150 : vector<128x32xf32>
    %152 = arith.mulf %151, %151 : vector<128x32xf32>
    %cst_57 = arith.constant dense<0.000000e+00> : vector<128xf32>
    %153 = vector.multi_reduction <add>, %152, %cst_57 [1] : vector<128x32xf32> to vector<128xf32>
    %154 = vector.shape_cast %153 : vector<128xf32> to vector<128x1xf32>
    %cst_58 = arith.constant 3.200000e+01 : f32
    %155 = vector.broadcast %cst_58 : f32 to vector<128x1xf32>
    %156 = arith.divf %154, %155 : vector<128x1xf32>
    %157 = vector.broadcast %149 : vector<128x1xf32> to vector<128x32xf32>
    %158 = arith.subf %145, %157 : vector<128x32xf32>
    %cst_59 = arith.constant 9.99999997E-7 : f32
    %159 = vector.broadcast %cst_59 : f32 to vector<128x1xf32>
    %160 = arith.addf %156, %159 : vector<128x1xf32>
    %161 = math.rsqrt %160 : vector<128x1xf32>
    %162 = vector.broadcast %161 : vector<128x1xf32> to vector<128x32xf32>
    %163 = arith.mulf %158, %162 : vector<128x32xf32>
    %cst_60 = arith.constant 1.000000e+00 : f32
    %164 = vector.broadcast %cst_60 : f32 to vector<128x32xf32>
    %165 = arith.addf %164, %32 : vector<128x32xf32>
    %166 = arith.mulf %163, %165 : vector<128x32xf32>
    %167 = arith.addf %166, %33 : vector<128x32xf32>
    %c176 = arith.constant 176 : index
    %c0_61 = arith.constant 0 : index
    %168 = vector.load %arg0[%c176, %c0_61] : memref<736x128xf32, #tpu.memory_space<vmem>>, vector<32x32xf32>
    %cst_62 = arith.constant dense<0.000000e+00> : vector<128x32xf32>
    %169 = tpu.matmul %167, %168, %cst_62 {dimension_numbers = #tpu.dot_dimension_numbers<[1], [0], [0], [1], [0, 0, 1, 1], [], []>} : vector<128x32xf32>, vector<32x32xf32>, vector<128x32xf32> -> vector<128x32xf32>
    %c0_63 = arith.constant 0 : index
    %c0_64 = arith.constant 0 : index
    %170 = vector.load %arg3[%c0_63, %c0_64] : memref<24x32xf32, #tpu.memory_space<vmem>>, vector<24x32xf32>
    %c208 = arith.constant 208 : index
    %c0_65 = arith.constant 0 : index
    %171 = vector.load %arg0[%c208, %c0_65] : memref<736x128xf32, #tpu.memory_space<vmem>>, vector<32x32xf32>
    %cst_66 = arith.constant dense<0.000000e+00> : vector<24x32xf32>
    %172 = tpu.matmul %170, %171, %cst_66 {dimension_numbers = #tpu.dot_dimension_numbers<[1], [0], [0], [1], [0, 0, 1, 1], [], []>} : vector<24x32xf32>, vector<32x32xf32>, vector<24x32xf32> -> vector<24x32xf32>
    %c240 = arith.constant 240 : index
    %c0_67 = arith.constant 0 : index
    %173 = vector.load %arg0[%c240, %c0_67] : memref<736x128xf32, #tpu.memory_space<vmem>>, vector<32x32xf32>
    %cst_68 = arith.constant dense<0.000000e+00> : vector<24x32xf32>
    %174 = tpu.matmul %170, %173, %cst_68 {dimension_numbers = #tpu.dot_dimension_numbers<[1], [0], [0], [1], [0, 0, 1, 1], [], []>} : vector<24x32xf32>, vector<32x32xf32>, vector<24x32xf32> -> vector<24x32xf32>
    %cst_69 = arith.constant dense<0.000000e+00> : vector<128x24xf32>
    %175 = tpu.matmul %169, %172, %cst_69 {dimension_numbers = #tpu.dot_dimension_numbers<[1], [1], [0], [0], [0, 0, 1, 0], [], []>} : vector<128x32xf32>, vector<24x32xf32>, vector<128x24xf32> -> vector<128x24xf32>
    %cst_70 = arith.constant 0.176776692 : f32
    %176 = vector.broadcast %cst_70 : f32 to vector<128x24xf32>
    %177 = arith.mulf %175, %176 : vector<128x24xf32>
    %c448 = arith.constant 448 : index
    %c0_71 = arith.constant 0 : index
    %178 = vector.load %arg0[%c448, %c0_71] : memref<736x128xf32, #tpu.memory_space<vmem>>, vector<128x24xf32>
    %179 = arith.addf %177, %178 : vector<128x24xf32>
    %cst_72 = arith.constant dense<0xFF800000> : vector<128xf32>
    %180 = vector.multi_reduction <maximumf>, %179, %cst_72 [1] : vector<128x24xf32> to vector<128xf32>
    %181 = vector.shape_cast %180 : vector<128xf32> to vector<128x1xf32>
    %182 = vector.broadcast %181 : vector<128x1xf32> to vector<128x24xf32>
    %183 = arith.subf %179, %182 : vector<128x24xf32>
    %184 = math.exp %183 : vector<128x24xf32>
    %cst_73 = arith.constant dense<0.000000e+00> : vector<128xf32>
    %185 = vector.multi_reduction <add>, %184, %cst_73 [1] : vector<128x24xf32> to vector<128xf32>
    %186 = vector.shape_cast %185 : vector<128xf32> to vector<128x1xf32>
    %187 = tpu.reciprocal %186 {approx = true} : vector<128x1xf32> -> vector<128x1xf32>
    %188 = vector.broadcast %187 : vector<128x1xf32> to vector<128x24xf32>
    %189 = arith.mulf %184, %188 : vector<128x24xf32>
    %cst_74 = arith.constant dense<0.000000e+00> : vector<128x32xf32>
    %190 = tpu.matmul %189, %174, %cst_74 {dimension_numbers = #tpu.dot_dimension_numbers<[1], [0], [0], [1], [0, 0, 1, 1], [], []>} : vector<128x24xf32>, vector<24x32xf32>, vector<128x32xf32> -> vector<128x32xf32>
    %191 = arith.addf %145, %190 : vector<128x32xf32>
    %cst_75 = arith.constant dense<0.000000e+00> : vector<128xf32>
    %192 = vector.multi_reduction <add>, %191, %cst_75 [1] : vector<128x32xf32> to vector<128xf32>
    %193 = vector.shape_cast %192 : vector<128xf32> to vector<128x1xf32>
    %cst_76 = arith.constant 3.200000e+01 : f32
    %194 = vector.broadcast %cst_76 : f32 to vector<128x1xf32>
    %195 = arith.divf %193, %194 : vector<128x1xf32>
    %196 = vector.broadcast %195 : vector<128x1xf32> to vector<128x32xf32>
    %197 = arith.subf %191, %196 : vector<128x32xf32>
    %198 = arith.mulf %197, %197 : vector<128x32xf32>
    %cst_77 = arith.constant dense<0.000000e+00> : vector<128xf32>
    %199 = vector.multi_reduction <add>, %198, %cst_77 [1] : vector<128x32xf32> to vector<128xf32>
    %200 = vector.shape_cast %199 : vector<128xf32> to vector<128x1xf32>
    %cst_78 = arith.constant 3.200000e+01 : f32
    %201 = vector.broadcast %cst_78 : f32 to vector<128x1xf32>
    %202 = arith.divf %200, %201 : vector<128x1xf32>
    %203 = vector.broadcast %195 : vector<128x1xf32> to vector<128x32xf32>
    %204 = arith.subf %191, %203 : vector<128x32xf32>
    %cst_79 = arith.constant 9.99999997E-7 : f32
    %205 = vector.broadcast %cst_79 : f32 to vector<128x1xf32>
    %206 = arith.addf %202, %205 : vector<128x1xf32>
    %207 = math.rsqrt %206 : vector<128x1xf32>
    %208 = vector.broadcast %207 : vector<128x1xf32> to vector<128x32xf32>
    %209 = arith.mulf %204, %208 : vector<128x32xf32>
    %c705 = arith.constant 705 : index
    %c0_80 = arith.constant 0 : index
    %210 = vector.load %arg0[%c705, %c0_80] : memref<736x128xf32, #tpu.memory_space<vmem>>, vector<1x32xf32>
    %211 = vector.broadcast %210 : vector<1x32xf32> to vector<128x32xf32>
    %212 = arith.mulf %209, %211 : vector<128x32xf32>
    %c706 = arith.constant 706 : index
    %c0_81 = arith.constant 0 : index
    %213 = vector.load %arg0[%c706, %c0_81] : memref<736x128xf32, #tpu.memory_space<vmem>>, vector<1x32xf32>
    %214 = vector.broadcast %213 : vector<1x32xf32> to vector<128x32xf32>
    %215 = arith.addf %212, %214 : vector<128x32xf32>
    %c272 = arith.constant 272 : index
    %c0_82 = arith.constant 0 : index
    %216 = vector.load %arg0[%c272, %c0_82] : memref<736x128xf32, #tpu.memory_space<vmem>>, vector<32x128xf32>
    %cst_83 = arith.constant dense<0.000000e+00> : vector<128x128xf32>
    %217 = tpu.matmul %215, %216, %cst_83 {dimension_numbers = #tpu.dot_dimension_numbers<[1], [0], [0], [1], [0, 0, 1, 1], [], []>} : vector<128x32xf32>, vector<32x128xf32>, vector<128x128xf32> -> vector<128x128xf32>
    %c707 = arith.constant 707 : index
    %c0_84 = arith.constant 0 : index
    %218 = vector.load %arg0[%c707, %c0_84] : memref<736x128xf32, #tpu.memory_space<vmem>>, vector<1x128xf32>
    %219 = vector.broadcast %218 : vector<1x128xf32> to vector<128x128xf32>
    %220 = arith.addf %217, %219 : vector<128x128xf32>
    %221 = arith.mulf %220, %220 : vector<128x128xf32>
    %222 = arith.mulf %220, %221 : vector<128x128xf32>
    %cst_85 = arith.constant 4.471500e-02 : f32
    %223 = vector.broadcast %cst_85 : f32 to vector<128x128xf32>
    %224 = arith.mulf %223, %222 : vector<128x128xf32>
    %225 = arith.addf %220, %224 : vector<128x128xf32>
    %cst_86 = arith.constant 0.797884583 : f32
    %226 = vector.broadcast %cst_86 : f32 to vector<128x128xf32>
    %227 = arith.mulf %226, %225 : vector<128x128xf32>
    %228 = math.tanh %227 : vector<128x128xf32>
    %cst_87 = arith.constant 1.000000e+00 : f32
    %229 = vector.broadcast %cst_87 : f32 to vector<128x128xf32>
    %230 = arith.addf %229, %228 : vector<128x128xf32>
    %cst_88 = arith.constant 5.000000e-01 : f32
    %231 = vector.broadcast %cst_88 : f32 to vector<128x128xf32>
    %232 = arith.mulf %231, %230 : vector<128x128xf32>
    %233 = arith.mulf %220, %232 : vector<128x128xf32>
    %c304 = arith.constant 304 : index
    %c0_89 = arith.constant 0 : index
    %234 = vector.load %arg0[%c304, %c0_89] : memref<736x128xf32, #tpu.memory_space<vmem>>, vector<128x32xf32>
    %cst_90 = arith.constant dense<0.000000e+00> : vector<128x32xf32>
    %235 = tpu.matmul %233, %234, %cst_90 {dimension_numbers = #tpu.dot_dimension_numbers<[1], [0], [0], [1], [0, 0, 1, 1], [], []>} : vector<128x128xf32>, vector<128x32xf32>, vector<128x32xf32> -> vector<128x32xf32>
    %236 = arith.addf %191, %235 : vector<128x32xf32>
    %c708 = arith.constant 708 : index
    %c0_91 = arith.constant 0 : index
    %237 = vector.load %arg0[%c708, %c0_91] : memref<736x128xf32, #tpu.memory_space<vmem>>, vector<1x32xf32>
    %238 = vector.broadcast %237 : vector<1x32xf32> to vector<128x32xf32>
    %239 = arith.addf %236, %238 : vector<128x32xf32>
    %cst_92 = arith.constant dense<0.000000e+00> : vector<128xf32>
    %240 = vector.multi_reduction <add>, %239, %cst_92 [1] : vector<128x32xf32> to vector<128xf32>
    %241 = vector.shape_cast %240 : vector<128xf32> to vector<128x1xf32>
    %cst_93 = arith.constant 3.200000e+01 : f32
    %242 = vector.broadcast %cst_93 : f32 to vector<128x1xf32>
    %243 = arith.divf %241, %242 : vector<128x1xf32>
    %244 = vector.broadcast %243 : vector<128x1xf32> to vector<128x32xf32>
    %245 = arith.subf %239, %244 : vector<128x32xf32>
    %246 = arith.mulf %245, %245 : vector<128x32xf32>
    %cst_94 = arith.constant dense<0.000000e+00> : vector<128xf32>
    %247 = vector.multi_reduction <add>, %246, %cst_94 [1] : vector<128x32xf32> to vector<128xf32>
    %248 = vector.shape_cast %247 : vector<128xf32> to vector<128x1xf32>
    %cst_95 = arith.constant 3.200000e+01 : f32
    %249 = vector.broadcast %cst_95 : f32 to vector<128x1xf32>
    %250 = arith.divf %248, %249 : vector<128x1xf32>
    %251 = vector.broadcast %243 : vector<128x1xf32> to vector<128x32xf32>
    %252 = arith.subf %239, %251 : vector<128x32xf32>
    %cst_96 = arith.constant 9.99999997E-7 : f32
    %253 = vector.broadcast %cst_96 : f32 to vector<128x1xf32>
    %254 = arith.addf %250, %253 : vector<128x1xf32>
    %255 = math.rsqrt %254 : vector<128x1xf32>
    %256 = vector.broadcast %255 : vector<128x1xf32> to vector<128x32xf32>
    %257 = arith.mulf %252, %256 : vector<128x32xf32>
    %c709 = arith.constant 709 : index
    %c0_97 = arith.constant 0 : index
    %258 = vector.load %arg0[%c709, %c0_97] : memref<736x128xf32, #tpu.memory_space<vmem>>, vector<1x32xf32>
    %259 = vector.broadcast %258 : vector<1x32xf32> to vector<128x32xf32>
    %260 = arith.mulf %257, %259 : vector<128x32xf32>
    %c710 = arith.constant 710 : index
    %c0_98 = arith.constant 0 : index
    %261 = vector.load %arg0[%c710, %c0_98] : memref<736x128xf32, #tpu.memory_space<vmem>>, vector<1x32xf32>
    %262 = vector.broadcast %261 : vector<1x32xf32> to vector<128x32xf32>
    %263 = arith.addf %260, %262 : vector<128x32xf32>
    %c432 = arith.constant 432 : index
    %c0_99 = arith.constant 0 : index
    %264 = vector.load %arg0[%c432, %c0_99] : memref<736x128xf32, #tpu.memory_space<vmem>>, vector<16x32xf32>
    %cst_100 = arith.constant dense<0.000000e+00> : vector<16x128xf32>
    %265 = tpu.matmul %264, %263, %cst_100 {dimension_numbers = #tpu.dot_dimension_numbers<[1], [1], [0], [0], [0, 0, 1, 0], [], []>} : vector<16x32xf32>, vector<128x32xf32>, vector<16x128xf32> -> vector<16x128xf32>
    %c720 = arith.constant 720 : index
    %c0_101 = arith.constant 0 : index
    %266 = vector.load %arg0[%c720, %c0_101] : memref<736x128xf32, #tpu.memory_space<vmem>>, vector<16x1xf32>
    %267 = vector.broadcast %266 : vector<16x1xf32> to vector<16x128xf32>
    %268 = arith.addf %265, %267 : vector<16x128xf32>
    %c0_102 = arith.constant 0 : index
    %c0_103 = arith.constant 0 : index
    %269 = vector.load %arg2[%c0_102, %c0_103] : memref<16x128xf32, #tpu.memory_space<vmem>>, vector<16x128xf32>
    tpu.vector_store %arg2[%c0_102, %c0_103], %268 {strides = array<i32>} : memref<16x128xf32, #tpu.memory_space<vmem>>, vector<16x128xf32>,
    return
  }
}

</mosaic_0001>

<llo_original>
// kernel: ip_adapter_forward.1
$region0: #{ip_adapter_forward.1}
  #allocation0 [shape = 'u32[]', space=smem, size = 0x4, offset = 0x4, fixed_abs, tag = 'smem constant byte address 0x4 - core index']
  #allocation1 [shape = 'u32[144,128]{1,0:T(1,128)}', space=vmem, size = 0x12000, scoped, tag = 'internal scratch']
  #allocation2 [shape = 'f32[24,32]{1,0:T(8,128)}', space=vmem, size = 0x3000, scoped, tag = 'scratch operand']
  %s0 = inlined_call_operand.vmem [shape: f32[736,128], index: 0, kind: input, shape index: {}]
  %s1 = inlined_call_operand.vmem [shape: f32[160,128], index: 1, kind: input, shape index: {}]
  %s2 = inlined_call_operand.vmem [shape: f32[16,128], index: 2, kind: output, shape index: {}]
  %s3 = sld [smem:[#allocation0]]
  $region18: #{ip_adapter_forward.1} parent=0
    _
  %s5 = ssub.s32 1, %s3
  %s6 = scalar_select 0, %s5, %s3
  // Predicated region
  $region2: #{ip_adapter_forward.1} parent=0 // pred_check
    _
  $region3: #{ip_adapter_forward.1} parent=0 // pred_check_branch
    %8 = sbr.rel (0) target = $region5
  $region4: #{ip_adapter_forward.1} parent=0 // pred_region
    _
  $region5: #{ip_adapter_forward.1} parent=0 // pred_fallthru
    _
  // Predicated region
  $region6: #{ip_adapter_forward.1} parent=0 // pred_check
    _
  $region7: #{ip_adapter_forward.1} parent=0 // pred_check_branch
    %10 = sbr.rel (0) target = $region9
  $region8: #{ip_adapter_forward.1} parent=0 // pred_region
    _
  $region9: #{ip_adapter_forward.1} parent=0 // pred_fallthru
    _
  %v11 = vld [vmem:[%s1 + $0x98] sm:$0x3]
  %v12 = vld [vmem:[%s0 + $0x2cd] sm:$0x1]
  %14 = vset.pattern.permute.xlu0 0
  %15 = vperm.xlu0 %14, %v11
  %v16 = vpop.permute.xlu0 %15
  %v18 = vlaneseq
  %v19 = vshrl.u32 %v18, 7
  %v20 = vsub.s32 0, %v19
  %v21 = vrot.slane %v12, %v20
  %v22 = vmul.f32 %v16, %v21
  %v23 = vand.u32 2147483647, %v22
  %vm24 = vcmp.le.f32.partialorder %v23, 0.7853982
  %vm25 = vcmp.lt.s32.totalorder %v22, 0
  %v26 = vand.u32 %v22, 2139095040
  %v27 = vshrl.u32 %v26, 23
  %v28 = vsub.s32 %v27, 127
  %v29 = vand.u32 2147483647, %v22
  %v30 = vand.u32 %v29, 8388607
  %v31 = vor.u32 %v30, 8388608
  %v32 = vsub.s32 0, %v31
  %v33 = vadd.s32 %v28, 1
  %vm34 = vcmp.gt.s32.totalorder %v33, 0
  %v35 = vsel %vm34, %v33, 0
  %v36 = vshrl.u32 %v35, 5
  %v37 = vand.u32 %v35, 31
  %v38 = vsub.s32 32, %v37
  %v39 = vshrl.u32 683565275, %v38
  %v40 = vshll.u32 683565275, %v37
  %v41 = vshrl.u32 2475754826, %v38
  %v42 = vor.u32 %v40, %v41
  %v43 = vshll.u32 2475754826, %v37
  %v44 = vshrl.u32 2131351028, %v38
  %v45 = vor.u32 %v43, %v44
  %v46 = vshll.u32 2131351028, %v37
  %v47 = vshrl.u32 2102212464, %v38
  %v48 = vor.u32 %v46, %v47
  %v49 = vshll.u32 2102212464, %v37
  %v50 = vshrl.u32 920167782, %v38
  %v51 = vor.u32 %v49, %v50
  %v52 = vshll.u32 920167782, %v37
  %v53 = vshrl.u32 1326507024, %v38
  %v54 = vor.u32 %v52, %v53
  %vm55 = vcmp.lt.s32.totalorder %v36, 1
  %vm56 = vcmp.lt.s32.totalorder %v36, 2
  %vm57 = vcmp.lt.s32.totalorder %v36, 3
  %vm58 = vcmp.lt.s32.totalorder %v36, 4
  %v59 = vsel %vm55, %v39, %v42
  %v60 = vsel %vm58, %v48, 2102212464
  %v61 = vsel %vm57, %v45, %v60
  %v62 = vsel %vm56, %v59, %v61
  %v63 = vsel %vm55, %v42, %v45
  %v64 = vsel %vm58, %v51, 920167782
  %v65 = vsel %vm57, %v48, %v64
  %v66 = vsel %vm56, %v63, %v65
  %v67 = vsel %vm55, %v45, %v48
  %v68 = vsel %vm58, %v54, 1326507024
  %v69 = vsel %vm57, %v51, %v68
  %v70 = vsel %vm56, %v67, %v69
  %v71 = vshll.u32 %v31, 8
  %v72 = vmul.u32.u64.compose %v71, %v70
  %v73 = vextract.low.u32 %v72
  %v74 = vextract.high.u32 %v72
  %v75 = vmul.u32.u64.compose %v71, %v66
  %v76 = vextract.low.u32 %v75
  %v77 = vextract.high.u32 %v75
  %v78 = vmul.u32 %v71, %v62
  %v79 = vadd.s32 %v74, %v76
  %vm80 = vc.u32 %v74, %v76
  %v81 = vadd.s32 %v77, 1
  %v82 = vsel %vm80, %v81, %v77
  %v83 = vadd.s32 %v78, %v82
  %v84 = vadd.s32 %v83, 536870912
  %v85 = vshrl.u32 %v84, 30
  %v86 = vshll.u32 %v85, 30
  %v87 = vsub.s32 %v83, %v86
  %vm88 = vcmp.lt.s32.totalorder %v87, 0
  %v89 = vsub.s32 0, %v87
  %v90 = vsel %vm88, %v89, %v87
  %v91 = vclz %v90
  %v92 = vsub.s32 %v91, 2
  %vm93 = vcmp.gt.s32.totalorder 0, %v92
  %v94 = vsel %vm93, 0, %v92
  %v95 = vsub.s32 32, %v94
  %v96 = vshll.u32 %v87, %v94
  %v97 = vshrl.u32 %v79, %v95
  %v98 = vor.u32 %v96, %v97
  %v99 = vsub.s32 4294967266, %v94
  %v100 = vadd.s32 %v99, 127
  %v101 = vshll.u32 %v100, 23
  %v102 = vor.u32 4788187, %v101
  %v103 = vand.u32 2147483647, %v102
  %v105 = vcvt.s32.f32 %v98
  %v106 = vmul.f32 %v105, %v103
  %v107 = vxor.u32 %v106, 2147483648
  %v108 = vsel %vm25, %v107, %v106
  %v109 = vsub.s32 4, %v85
  %v110 = vsel %vm25, %v109, %v85
  %v111 = vsel %vm24, %v22, %v108
  %v112 = vsel %vm24, 0, %v110
  %v113 = vcosq.f32.pop %v111
  %v114 = vsinq.f32.pop %v111
  %vm115 = vweird.f32 %v22
  %v116 = vand.u32 %v112, 3
  %vm117 = vcmp.lt.s32.totalorder %v116, 2
  %vm118 = vcmp.eq.s32.totalorder %v116, 0
  %v119 = vxor.u32 %v114, 2147483648
  %v120 = vsel %vm118, %v113, %v119
  %vm121 = vcmp.eq.s32.totalorder %v116, 2
  %v122 = vxor.u32 %v113, 2147483648
  %v123 = vsel %vm121, %v122, %v114
  %v124 = vsel %vm117, %v120, %v123
  %v125 = vsel %vm115, nan, %v124
  %v126 = vld [vmem:[%s0 + $0x40] sm:$0xff]
  %v127 = vld [vmem:[%s0 + $0x48] sm:$0xff]
  %v128 = vand.u32 2147483647, %v22
  %vm129 = vcmp.le.f32.partialorder %v128, 0.7853982
  %vm130 = vcmp.lt.s32.totalorder %v22, 0
  %v131 = vand.u32 %v22, 2139095040
  %v132 = vshrl.u32 %v131, 23
  %v133 = vsub.s32 %v132, 127
  %v134 = vand.u32 2147483647, %v22
  %v135 = vand.u32 %v134, 8388607
  %v136 = vor.u32 %v135, 8388608
  %v137 = vsub.s32 0, %v136
  %v138 = vadd.s32 %v133, 1
  %vm139 = vcmp.gt.s32.totalorder %v138, 0
  %v140 = vsel %vm139, %v138, 0
  %v141 = vshrl.u32 %v140, 5
  %v142 = vand.u32 %v140, 31
  %v143 = vsub.s32 32, %v142
  %v144 = vshrl.u32 683565275, %v143
  %v145 = vshll.u32 683565275, %v142
  %v146 = vshrl.u32 2475754826, %v143
  %v147 = vor.u32 %v145, %v146
  %v148 = vshll.u32 2475754826, %v142
  %v149 = vshrl.u32 2131351028, %v143
  %v150 = vor.u32 %v148, %v149
  %v151 = vshll.u32 2131351028, %v142
  %v152 = vshrl.u32 2102212464, %v143
  %v153 = vor.u32 %v151, %v152
  %v154 = vshll.u32 2102212464, %v142
  %v155 = vshrl.u32 920167782, %v143
  %v156 = vor.u32 %v154, %v155
  %v157 = vshll.u32 920167782, %v142
  %v158 = vshrl.u32 1326507024, %v143
  %v159 = vor.u32 %v157, %v158
  %vm160 = vcmp.lt.s32.totalorder %v141, 1
  %vm161 = vcmp.lt.s32.totalorder %v141, 2
  %vm162 = vcmp.lt.s32.totalorder %v141, 3
  %vm163 = vcmp.lt.s32.totalorder %v141, 4
  %v164 = vsel %vm160, %v144, %v147
  %v165 = vsel %vm163, %v153, 2102212464
  %v166 = vsel %vm162, %v150, %v165
  %v167 = vsel %vm161, %v164, %v166
  %v168 = vsel %vm160, %v147, %v150
  %v169 = vsel %vm163, %v156, 920167782
  %v170 = vsel %vm162, %v153, %v169
  %v171 = vsel %vm161, %v168, %v170
  %v172 = vsel %vm160, %v150, %v153
  %v173 = vsel %vm163, %v159, 1326507024
  %v174 = vsel %vm162, %v156, %v173
  %v175 = vsel %vm161, %v172, %v174
  %v176 = vshll.u32 %v136, 8
  %v177 = vmul.u32.u64.compose %v176, %v175
  %v178 = vextract.low.u32 %v177
  %v179 = vextract.high.u32 %v177
  %v180 = vmul.u32.u64.compose %v176, %v171
  %v181 = vextract.low.u32 %v180
  %v182 = vextract.high.u32 %v180
  %v183 = vmul.u32 %v176, %v167
  %v184 = vadd.s32 %v179, %v181
  %vm185 = vc.u32 %v179, %v181
  %v186 = vadd.s32 %v182, 1
  %v187 = vsel %vm185, %v186, %v182
  %v188 = vadd.s32 %v183, %v187
  %v189 = vadd.s32 %v188, 536870912
  %v190 = vshrl.u32 %v189, 30
  %v191 = vshll.u32 %v190, 30
  %v192 = vsub.s32 %v188, %v191
  %vm193 = vcmp.lt.s32.totalorder %v192, 0
  %v194 = vsub.s32 0, %v192
  %v195 = vsel %vm193, %v194, %v192
  %v196 = vclz %v195
  %v197 = vsub.s32 %v196, 2
  %vm198 = vcmp.gt.s32.totalorder 0, %v197
  %v199 = vsel %vm198, 0, %v197
  %v200 = vsub.s32 32, %v199
  %v201 = vshll.u32 %v192, %v199
  %v202 = vshrl.u32 %v184, %v200
  %v203 = vor.u32 %v201, %v202
  %v204 = vsub.s32 4294967266, %v199
  %v205 = vadd.s32 %v204, 127
  %v206 = vshll.u32 %v205, 23
  %v207 = vor.u32 4788187, %v206
  %v208 = vand.u32 2147483647, %v207
  %v210 = vcvt.s32.f32 %v203
  %v211 = vmul.f32 %v210, %v208
  %v212 = vxor.u32 %v211, 2147483648
  %v213 = vsel %vm130, %v212, %v211
  %v214 = vsub.s32 4, %v190
  %v215 = vsel %vm130, %v214, %v190
  %v216 = vsel %vm129, %v22, %v213
  %v217 = vsel %vm129, 0, %v215
  %v218 = vcosq.f32.pop %v216
  %v219 = vsinq.f32.pop %v216
  %vm220 = vweird.f32 %v22
  %v221 = vadd.s32 %v217, 3
  %v222 = vand.u32 %v221, 3
  %vm223 = vcmp.lt.s32.totalorder %v222, 2
  %vm224 = vcmp.eq.s32.totalorder %v222, 0
  %v225 = vxor.u32 %v219, 2147483648
  %v226 = vsel %vm224, %v218, %v225
  %vm227 = vcmp.eq.s32.totalorder %v222, 2
  %v228 = vxor.u32 %v218, 2147483648
  %v229 = vsel %vm227, %v228, %v219
  %v230 = vsel %vm223, %v226, %v229
  %v231 = vsel %vm220, nan, %v230
  %v232 = vld [vmem:[%s0 + $0x50] sm:$0xff]
  %v233 = vld [vmem:[%s0 + $0x58] sm:$0xff]
  %vm234 = vcmask 130048
  %v236 = vsel %vm234, %v231, 0
  %238 = vmatprep.subr.mxu0 0.0
  %239 = vmatpush1.msra.mxu0 %v232
  %240 = vmatprep.subr.mxu0 0.0
  %241 = vmatpush1.msra.mxu0 %v233
  %242 = vmatprep.subr.mxu0 0.0
  %243 = vmatpush1.msra.mxu0 0.0
  %244 = vmatprep.subr.mxu0 0.0
  %245 = vmatpush1.msra.mxu0 0.0
  %246 = vmatprep.subr.mxu0 0.0
  %247 = vmatpush1.msra.mxu0 0.0
  %248 = vmatprep.subr.mxu0 0.0
  %249 = vmatpush1.msra.mxu0 0.0
  %250 = vmatprep.subr.mxu0 0.0
  %251 = vmatpush1.msra.mxu0 0.0
  %252 = vmatprep.subr.mxu0 0.0
  %253 = vmatpush1.msra.mxu0 0.0
  %254 = vmatprep.subr.mxu0 0.0
  %255 = vmatpush1.msra.mxu0 0.0
  %256 = vmatprep.subr.mxu0 0.0
  %257 = vmatpush1.msra.mxu0 0.0
  %258 = vmatprep.subr.mxu0 0.0
  %259 = vmatpush1.msra.mxu0 0.0
  %260 = vmatprep.subr.mxu0 0.0
  %261 = vmatpush1.msra.mxu0 0.0
  %262 = vmatprep.subr.mxu0 0.0
  %263 = vmatpush1.msra.mxu0 0.0
  %264 = vmatprep.subr.mxu0 0.0
  %265 = vmatpush1.msra.mxu0 0.0
  %266 = vmatprep.subr.mxu0 0.0
  %267 = vmatpush1.msra.mxu0 0.0
  %268 = vmatprep.subr.mxu0 0.0
  %269 = vmatpush1.msra.mxu0 0.0
  %270 = vmatprep.subr.mxu0 0.0
  %271 = vmatpush1.msra.mxu0 0.0
  %272 = vmatprep.subr.mxu0 0.0
  %273 = vmatpush1.msra.mxu0 0.0
  %274 = vmatprep.subr.mxu0 0.0
  %275 = vmatpush1.msra.mxu0 0.0
  %276 = vmatprep.subr.mxu0 0.0
  %277 = vmatpush1.msra.mxu0 0.0
  %278 = vmatprep.subr.mxu0 0.0
  %279 = vmatpush1.msra.mxu0 0.0
  %280 = vmatprep.subr.mxu0 0.0
  %281 = vmatpush1.msra.mxu0 0.0
  %282 = vmatprep.subr.mxu0 0.0
  %283 = vmatpush1.msra.mxu0 0.0
  %284 = vmatprep.subr.mxu0 0.0
  %285 = vmatpush1.msra.mxu0 0.0
  %286 = vmatprep.subr.mxu0 0.0
  %287 = vmatpush1.msra.mxu0 0.0
  %288 = vmatprep.subr.mxu0 0.0
  %289 = vmatpush1.msra.mxu0 0.0
  %290 = vmatprep.subr.mxu0 0.0
  %291 = vmatpush1.msra.mxu0 0.0
  %292 = vmatprep.subr.mxu0 0.0
  %293 = vmatpush1.msra.mxu0 0.0
  %294 = vmatprep.subr.mxu0 0.0
  %295 = vmatpush1.msra.mxu0 0.0
  %296 = vmatprep.subr.mxu0 0.0
  %297 = vmatpush1.msra.mxu0 0.0
  %298 = vmatprep.subr.mxu0 0.0
  %299 = vmatpush1.msra.mxu0 0.0
  %300 = vmatprep.subr.mxu0 0.0
  %301 = vmatpush1.msra.mxu0 0.0
  %302 = vmatprep.mubr.f32.mxu0 0.0
  %303 = vmatmul.mubr.f32.gmra.mrb[0].mxu0 %v236
  %v304 = vpop.f32.mrb[0].mxu0
  %v305 = vadd.f32 0.0, %v304
  %v306 = vpop.f32.mrb[0].mxu0
  %307 = vdwg.mxu0
  %v309 = vsel %vm234, %v125, 0
  %311 = vmatprep.subr.mxu0 0.0
  %312 = vmatpush1.msra.mxu0 %v126
  %313 = vmatprep.subr.mxu0 0.0
  %314 = vmatpush1.msra.mxu0 %v127
  %315 = vmatprep.subr.mxu0 0.0
  %316 = vmatpush1.msra.mxu0 0.0
  %317 = vmatprep.subr.mxu0 0.0
  %318 = vmatpush1.msra.mxu0 0.0
  %319 = vmatprep.subr.mxu0 0.0
  %320 = vmatpush1.msra.mxu0 0.0
  %321 = vmatprep.subr.mxu0 0.0
  %322 = vmatpush1.msra.mxu0 0.0
  %323 = vmatprep.subr.mxu0 0.0
  %324 = vmatpush1.msra.mxu0 0.0
  %325 = vmatprep.subr.mxu0 0.0
  %326 = vmatpush1.msra.mxu0 0.0
  %327 = vmatprep.subr.mxu0 0.0
  %328 = vmatpush1.msra.mxu0 0.0
  %329 = vmatprep.subr.mxu0 0.0
  %330 = vmatpush1.msra.mxu0 0.0
  %331 = vmatprep.subr.mxu0 0.0
  %332 = vmatpush1.msra.mxu0 0.0
  %333 = vmatprep.subr.mxu0 0.0
  %334 = vmatpush1.msra.mxu0 0.0
  %335 = vmatprep.subr.mxu0 0.0
  %336 = vmatpush1.msra.mxu0 0.0
  %337 = vmatprep.subr.mxu0 0.0
  %338 = vmatpush1.msra.mxu0 0.0
  %339 = vmatprep.subr.mxu0 0.0
  %340 = vmatpush1.msra.mxu0 0.0
  %341 = vmatprep.subr.mxu0 0.0
  %342 = vmatpush1.msra.mxu0 0.0
  %343 = vmatprep.subr.mxu0 0.0
  %344 = vmatpush1.msra.mxu0 0.0
  %345 = vmatprep.subr.mxu0 0.0
  %346 = vmatpush1.msra.mxu0 0.0
  %347 = vmatprep.subr.mxu0 0.0
  %348 = vmatpush1.msra.mxu0 0.0
  %349 = vmatprep.subr.mxu0 0.0
  %350 = vmatpush1.msra.mxu0 0.0
  %351 = vmatprep.subr.mxu0 0.0
  %352 = vmatpush1.msra.mxu0 0.0
  %353 = vmatprep.subr.mxu0 0.0
  %354 = vmatpush1.msra.mxu0 0.0
  %355 = vmatprep.subr.mxu0 0.0
  %356 = vmatpush1.msra.mxu0 0.0
  %357 = vmatprep.subr.mxu0 0.0
  %358 = vmatpush1.msra.mxu0 0.0
  %359 = vmatprep.subr.mxu0 0.0
  %360 = vmatpush1.msra.mxu0 0.0
  %361 = vmatprep.subr.mxu0 0.0
  %362 = vmatpush1.msra.mxu0 0.0
  %363 = vmatprep.subr.mxu0 0.0
  %364 = vmatpush1.msra.mxu0 0.0
  %365 = vmatprep.subr.mxu0 0.0
  %366 = vmatpush1.msra.mxu0 0.0
  %367 = vmatprep.subr.mxu0 0.0
  %368 = vmatpush1.msra.mxu0 0.0
  %369 = vmatprep.subr.mxu0 0.0
  %370 = vmatpush1.msra.mxu0 0.0
  %371 = vmatprep.subr.mxu0 0.0
  %372 = vmatpush1.msra.mxu0 0.0
  %373 = vmatprep.subr.mxu0 0.0
  %374 = vmatpush1.msra.mxu0 0.0
  %375 = vmatprep.mubr.f32.mxu0 0.0
  %376 = vmatmul.mubr.f32.gmra.mrb[0].mxu0 %v309
  %v377 = vpop.f32.mrb[0].mxu0
  %v378 = vadd.f32 %v305, %v377
  %v379 = vpop.f32.mrb[0].mxu0
  %380 = vdwg.mxu0
  %v381 = vld [vmem:[%s0 + $0x2ca] sm:$0x1]
  %v382 = vlaneseq
  %v383 = vshrl.u32 %v382, 7
  %v384 = vsub.s32 0, %v383
  %v385 = vrot.slane %v381, %v384
  %v386 = vadd.f32 %v378, %v385
  %v387 = vxor.u32 %v386, 2147483648
  %v388 = vmul.f32 %v387, 1.442695
  %v389 = vpow.pop %v388
  %v390 = vadd.f32 %v389, 1.0
  %v391 = vrcp.pop %v390
  %v392 = vmul.f32 1.0, %v391
  %v393 = vmul.f32 %v386, %v392
  %v394 = vld [vmem:[%s0 + $0x60] sm:$0xff]
  %v395 = vld [vmem:[%s0 + $0x68] sm:$0xff]
  %v396 = vld [vmem:[%s0 + $0x70] sm:$0xff]
  %v397 = vld [vmem:[%s0 + $0x78] sm:$0xff]
  %v398 = vld [vmem:[%s0 + $0x2cb] sm:$0x1]
  %v399 = vlaneseq
  %v400 = vshrl.u32 %v399, 7
  %v401 = vsub.s32 0, %v400
  %v402 = vrot.slane %v398, %v401
  %vm403 = vcmask 261120
  %v405 = vsel %vm403, %v393, 0
  %407 = vmatprep.subr.mxu0 0.0
  %408 = vmatpush1.msra.mxu0 %v394
  %409 = vmatprep.subr.mxu0 0.0
  %410 = vmatpush1.msra.mxu0 %v395
  %411 = vmatprep.subr.mxu0 0.0
  %412 = vmatpush1.msra.mxu0 %v396
  %413 = vmatprep.subr.mxu0 0.0
  %414 = vmatpush1.msra.mxu0 %v397
  %415 = vmatprep.subr.mxu0 0.0
  %416 = vmatpush1.msra.mxu0 0.0
  %417 = vmatprep.subr.mxu0 0.0
  %418 = vmatpush1.msra.mxu0 0.0
  %419 = vmatprep.subr.mxu0 0.0
  %420 = vmatpush1.msra.mxu0 0.0
  %421 = vmatprep.subr.mxu0 0.0
  %422 = vmatpush1.msra.mxu0 0.0
  %423 = vmatprep.subr.mxu0 0.0
  %424 = vmatpush1.msra.mxu0 0.0
  %425 = vmatprep.subr.mxu0 0.0
  %426 = vmatpush1.msra.mxu0 0.0
  %427 = vmatprep.subr.mxu0 0.0
  %428 = vmatpush1.msra.mxu0 0.0
  %429 = vmatprep.subr.mxu0 0.0
  %430 = vmatpush1.msra.mxu0 0.0
  %431 = vmatprep.subr.mxu0 0.0
  %432 = vmatpush1.msra.mxu0 0.0
  %433 = vmatprep.subr.mxu0 0.0
  %434 = vmatpush1.msra.mxu0 0.0
  %435 = vmatprep.subr.mxu0 0.0
  %436 = vmatpush1.msra.mxu0 0.0
  %437 = vmatprep.subr.mxu0 0.0
  %438 = vmatpush1.msra.mxu0 0.0
  %439 = vmatprep.subr.mxu0 0.0
  %440 = vmatpush1.msra.mxu0 0.0
  %441 = vmatprep.subr.mxu0 0.0
  %442 = vmatpush1.msra.mxu0 0.0
  %443 = vmatprep.subr.mxu0 0.0
  %444 = vmatpush1.msra.mxu0 0.0
  %445 = vmatprep.subr.mxu0 0.0
  %446 = vmatpush1.msra.mxu0 0.0
  %447 = vmatprep.subr.mxu0 0.0
  %448 = vmatpush1.msra.mxu0 0.0
  %449 = vmatprep.subr.mxu0 0.0
  %450 = vmatpush1.msra.mxu0 0.0
  %451 = vmatprep.subr.mxu0 0.0
  %452 = vmatpush1.msra.mxu0 0.0
  %453 = vmatprep.subr.mxu0 0.0
  %454 = vmatpush1.msra.mxu0 0.0
  %455 = vmatprep.subr.mxu0 0.0
  %456 = vmatpush1.msra.mxu0 0.0
  %457 = vmatprep.subr.mxu0 0.0
  %458 = vmatpush1.msra.mxu0 0.0
  %459 = vmatprep.subr.mxu0 0.0
  %460 = vmatpush1.msra.mxu0 0.0
  %461 = vmatprep.subr.mxu0 0.0
  %462 = vmatpush1.msra.mxu0 0.0
  %463 = vmatprep.subr.mxu0 0.0
  %464 = vmatpush1.msra.mxu0 0.0
  %465 = vmatprep.subr.mxu0 0.0
  %466 = vmatpush1.msra.mxu0 0.0
  %467 = vmatprep.subr.mxu0 0.0
  %468 = vmatpush1.msra.mxu0 0.0
  %469 = vmatprep.subr.mxu0 0.0
  %470 = vmatpush1.msra.mxu0 0.0
  %471 = vmatprep.mubr.f32.mxu0 0.0
  %472 = vmatmul.mubr.f32.gmra.mrb[0].mxu0 %v405
  %v473 = vpop.f32.mrb[0].mxu0
  %v474 = vadd.f32 %v402, %v473
  %v475 = vpop.f32.mrb[0].mxu0
  %476 = vdwg.mxu0
  %v477 = vld [vmem:[%s0 + $0x80] sm:$0xff]
  %v478 = vld [vmem:[%s0 + $0x88] sm:$0xff]
  %v479 = vld [vmem:[%s0 + $0x90] sm:$0xff]
  %v480 = vld [vmem:[%s0 + $0x98] sm:$0xff]
  %v481 = vld [vmem:[%s0 + $0x2cc] sm:$0x1]
  %v482 = vlaneseq
  %v483 = vshrl.u32 %v482, 7
  %v484 = vsub.s32 0, %v483
  %v485 = vrot.slane %v481, %v484
  %486 = vmatprep.subr.mxu0 0.0
  %487 = vmatpush1.msra.mxu0 %v477
  %488 = vmatprep.subr.mxu0 0.0
  %489 = vmatpush1.msra.mxu0 %v478
  %490 = vmatprep.subr.mxu0 0.0
  %491 = vmatpush1.msra.mxu0 %v479
  %492 = vmatprep.subr.mxu0 0.0
  %493 = vmatpush1.msra.mxu0 %v480
  %494 = vmatprep.subr.mxu0 0.0
  %495 = vmatpush1.msra.mxu0 0.0
  %496 = vmatprep.subr.mxu0 0.0
  %497 = vmatpush1.msra.mxu0 0.0
  %498 = vmatprep.subr.mxu0 0.0
  %499 = vmatpush1.msra.mxu0 0.0
  %500 = vmatprep.subr.mxu0 0.0
  %501 = vmatpush1.msra.mxu0 0.0
  %502 = vmatprep.subr.mxu0 0.0
  %503 = vmatpush1.msra.mxu0 0.0
  %504 = vmatprep.subr.mxu0 0.0
  %505 = vmatpush1.msra.mxu0 0.0
  %506 = vmatprep.subr.mxu0 0.0
  %507 = vmatpush1.msra.mxu0 0.0
  %508 = vmatprep.subr.mxu0 0.0
  %509 = vmatpush1.msra.mxu0 0.0
  %510 = vmatprep.subr.mxu0 0.0
  %511 = vmatpush1.msra.mxu0 0.0
  %512 = vmatprep.subr.mxu0 0.0
  %513 = vmatpush1.msra.mxu0 0.0
  %514 = vmatprep.subr.mxu0 0.0
  %515 = vmatpush1.msra.mxu0 0.0
  %516 = vmatprep.subr.mxu0 0.0
  %517 = vmatpush1.msra.mxu0 0.0
  %518 = vmatprep.subr.mxu0 0.0
  %519 = vmatpush1.msra.mxu0 0.0
  %520 = vmatprep.subr.mxu0 0.0
  %521 = vmatpush1.msra.mxu0 0.0
  %522 = vmatprep.subr.mxu0 0.0
  %523 = vmatpush1.msra.mxu0 0.0
  %524 = vmatprep.subr.mxu0 0.0
  %525 = vmatpush1.msra.mxu0 0.0
  %526 = vmatprep.subr.mxu0 0.0
  %527 = vmatpush1.msra.mxu0 0.0
  %528 = vmatprep.subr.mxu0 0.0
  %529 = vmatpush1.msra.mxu0 0.0
  %530 = vmatprep.subr.mxu0 0.0
  %531 = vmatpush1.msra.mxu0 0.0
  %532 = vmatprep.subr.mxu0 0.0
  %533 = vmatpush1.msra.mxu0 0.0
  %534 = vmatprep.subr.mxu0 0.0
  %535 = vmatpush1.msra.mxu0 0.0
  %536 = vmatprep.subr.mxu0 0.0
  %537 = vmatpush1.msra.mxu0 0.0
  %538 = vmatprep.subr.mxu0 0.0
  %539 = vmatpush1.msra.mxu0 0.0
  %540 = vmatprep.subr.mxu0 0.0
  %541 = vmatpush1.msra.mxu0 0.0
  %542 = vmatprep.subr.mxu0 0.0
  %543 = vmatpush1.msra.mxu0 0.0
  %544 = vmatprep.subr.mxu0 0.0
  %545 = vmatpush1.msra.mxu0 0.0
  %546 = vmatprep.subr.mxu0 0.0
  %547 = vmatpush1.msra.mxu0 0.0
  %548 = vmatprep.subr.mxu0 0.0
  %549 = vmatpush1.msra.mxu0 0.0
  %550 = vmatprep.mubr.f32.mxu0 0.0
  %551 = vmatmul.mubr.f32.gmra.mrb[0].mxu0 %v405
  %v552 = vpop.f32.mrb[0].mxu0
  %v553 = vadd.f32 %v485, %v552
  %v554 = vpop.f32.mrb[0].mxu0
  %555 = vdwg.mxu0
  %v556 = vld [vmem:[%s0 + $0x240] sm:$0xff]
  %v557 = vld [vmem:[%s0 + $0x248] sm:$0xff]
  %v558 = vld [vmem:[%s0 + $0x250] sm:$0xff]
  %v559 = vld [vmem:[%s0 + $0x258] sm:$0xff]
  %v560 = vld [vmem:[%s0 + $0x260] sm:$0xff]
  %v561 = vld [vmem:[%s0 + $0x268] sm:$0xff]
  %v562 = vld [vmem:[%s0 + $0x270] sm:$0xff]
  %v563 = vld [vmem:[%s0 + $0x278] sm:$0xff]
  %v564 = vld [vmem:[%s0 + $0x280] sm:$0xff]
  %v565 = vld [vmem:[%s0 + $0x288] sm:$0xff]
  %v566 = vld [vmem:[%s0 + $0x290] sm:$0xff]
  %v567 = vld [vmem:[%s0 + $0x298] sm:$0xff]
  %v568 = vld [vmem:[%s0 + $0x2a0] sm:$0xff]
  %v569 = vld [vmem:[%s0 + $0x2a8] sm:$0xff]
  %v570 = vld [vmem:[%s0 + $0x2b0] sm:$0xff]
  %v571 = vld [vmem:[%s0 + $0x2b8] sm:$0xff]
  %vm572 = vcmask 15360
  %v574 = vsel %vm572, %v556, 0
  %v577 = vsel %vm572, %v557, 0
  %v580 = vsel %vm572, %v558, 0
  %v583 = vsel %vm572, %v559, 0
  %v586 = vsel %vm572, %v560, 0
  %v589 = vsel %vm572, %v561, 0
  %v592 = vsel %vm572, %v562, 0
  %v595 = vsel %vm572, %v563, 0
  %v598 = vsel %vm572, %v564, 0
  %v601 = vsel %vm572, %v565, 0
  %v604 = vsel %vm572, %v566, 0
  %v607 = vsel %vm572, %v567, 0
  %v610 = vsel %vm572, %v568, 0
  %v613 = vsel %vm572, %v569, 0
  %v616 = vsel %vm572, %v570, 0
  %v619 = vsel %vm572, %v571, 0
  %vm621 = vcmask 1041408
  %v623 = vsel %vm621, %v553, 0
  %625 = vmatprep.subr.mxu0 0.0
  %626 = vmatpush1.msra.mxu0 %v623
  %627 = vmatprep.subr.mxu0 0.0
  %628 = vmatpush1.msra.mxu0 0.0
  %629 = vmatprep.subr.mxu0 0.0
  %630 = vmatpush1.msra.mxu0 0.0
  %631 = vmatprep.subr.mxu0 0.0
  %632 = vmatpush1.msra.mxu0 0.0
  %633 = vmatprep.subr.mxu0 0.0
  %634 = vmatpush1.msra.mxu0 0.0
  %635 = vmatprep.subr.mxu0 0.0
  %636 = vmatpush1.msra.mxu0 0.0
  %637 = vmatprep.subr.mxu0 0.0
  %638 = vmatpush1.msra.mxu0 0.0
  %639 = vmatprep.subr.mxu0 0.0
  %640 = vmatpush1.msra.mxu0 0.0
  %641 = vmatprep.subr.mxu0 0.0
  %642 = vmatpush1.msra.mxu0 0.0
  %643 = vmatprep.subr.mxu0 0.0
  %644 = vmatpush1.msra.mxu0 0.0
  %645 = vmatprep.subr.mxu0 0.0
  %646 = vmatpush1.msra.mxu0 0.0
  %647 = vmatprep.subr.mxu0 0.0
  %648 = vmatpush1.msra.mxu0 0.0
  %649 = vmatprep.subr.mxu0 0.0
  %650 = vmatpush1.msra.mxu0 0.0
  %651 = vmatprep.subr.mxu0 0.0
  %652 = vmatpush1.msra.mxu0 0.0
  %653 = vmatprep.subr.mxu0 0.0
  %654 = vmatpush1.msra.mxu0 0.0
  %655 = vmatprep.subr.mxu0 0.0
  %656 = vmatpush1.msra.mxu0 0.0
  %657 = vmatprep.subr.mxu0 0.0
  %658 = vmatpush1.msra.mxu0 0.0
  %659 = vmatprep.subr.mxu0 0.0
  %660 = vmatpush1.msra.mxu0 0.0
  %661 = vmatprep.subr.mxu0 0.0
  %662 = vmatpush1.msra.mxu0 0.0
  %663 = vmatprep.subr.mxu0 0.0
  %664 = vmatpush1.msra.mxu0 0.0
  %665 = vmatprep.subr.mxu0 0.0
  %666 = vmatpush1.msra.mxu0 0.0
  %667 = vmatprep.subr.mxu0 0.0
  %668 = vmatpush1.msra.mxu0 0.0
  %669 = vmatprep.subr.mxu0 0.0
  %670 = vmatpush1.msra.mxu0 0.0
  %671 = vmatprep.subr.mxu0 0.0
  %672 = vmatpush1.msra.mxu0 0.0
  %673 = vmatprep.subr.mxu0 0.0
  %674 = vmatpush1.msra.mxu0 0.0
  %675 = vmatprep.subr.mxu0 0.0
  %676 = vmatpush1.msra.mxu0 0.0
  %677 = vmatprep.subr.mxu0 0.0
  %678 = vmatpush1.msra.mxu0 0.0
  %679 = vmatprep.subr.mxu0 0.0
  %680 = vmatpush1.msra.mxu0 0.0
  %681 = vmatprep.subr.mxu0 0.0
  %682 = vmatpush1.msra.mxu0 0.0
  %683 = vmatprep.subr.mxu0 0.0
  %684 = vmatpush1.msra.mxu0 0.0
  %685 = vmatprep.subr.mxu0 0.0
  %686 = vmatpush1.msra.mxu0 0.0
  %687 = vmatprep.subr.mxu0 0.0
  %688 = vmatpush1.msra.mxu0 0.0
  %689 = vmatprep.mubr.f32.mxu0 0.0
  %690 = vmatmul.mubr.f32.gmra.mrb[0].mxu0 %v574
  %v691 = vpop.f32.mrb[0].mxu0
  %v692 = vadd.f32 0.0, %v691
  %v693 = vpop.f32.mrb[0].mxu0
  %694 = vmatprep.mubr.f32.mxu0 0.0
  %695 = vmatmul.mubr.f32.gmra.mrb[0].mxu0 %v577
  %v696 = vpop.f32.mrb[0].mxu0
  %v697 = vadd.f32 0.0, %v696
  %v698 = vpop.f32.mrb[0].mxu0
  %699 = vmatprep.mubr.f32.mxu0 0.0
  %700 = vmatmul.mubr.f32.gmra.mrb[0].mxu0 %v580
  %v701 = vpop.f32.mrb[0].mxu0
  %v702 = vadd.f32 0.0, %v701
  %v703 = vpop.f32.mrb[0].mxu0
  %704 = vmatprep.mubr.f32.mxu0 0.0
  %705 = vmatmul.mubr.f32.gmra.mrb[0].mxu0 %v583
  %v706 = vpop.f32.mrb[0].mxu0
  %v707 = vadd.f32 0.0, %v706
  %v708 = vpop.f32.mrb[0].mxu0
  %709 = vmatprep.mubr.f32.mxu0 0.0
  %710 = vmatmul.mubr.f32.gmra.mrb[0].mxu0 %v586
  %v711 = vpop.f32.mrb[0].mxu0
  %v712 = vadd.f32 0.0, %v711
  %v713 = vpop.f32.mrb[0].mxu0
  %714 = vmatprep.mubr.f32.mxu0 0.0
  %715 = vmatmul.mubr.f32.gmra.mrb[0].mxu0 %v589
  %v716 = vpop.f32.mrb[0].mxu0
  %v717 = vadd.f32 0.0, %v716
  %v718 = vpop.f32.mrb[0].mxu0
  %719 = vmatprep.mubr.f32.mxu0 0.0
  %720 = vmatmul.mubr.f32.gmra.mrb[0].mxu0 %v592
  %v721 = vpop.f32.mrb[0].mxu0
  %v722 = vadd.f32 0.0, %v721
  %v723 = vpop.f32.mrb[0].mxu0
  %724 = vmatprep.mubr.f32.mxu0 0.0
  %725 = vmatmul.mubr.f32.gmra.mrb[0].mxu0 %v595
  %v726 = vpop.f32.mrb[0].mxu0
  %v727 = vadd.f32 0.0, %v726
  %v728 = vpop.f32.mrb[0].mxu0
  %729 = vmatprep.mubr.f32.mxu0 0.0
  %730 = vmatmul.mubr.f32.gmra.mrb[0].mxu0 %v598
  %v731 = vpop.f32.mrb[0].mxu0
  %v732 = vadd.f32 0.0, %v731
  %v733 = vpop.f32.mrb[0].mxu0
  %734 = vmatprep.mubr.f32.mxu0 0.0
  %735 = vmatmul.mubr.f32.gmra.mrb[0].mxu0 %v601
  %v736 = vpop.f32.mrb[0].mxu0
  %v737 = vadd.f32 0.0, %v736
  %v738 = vpop.f32.mrb[0].mxu0
  %739 = vmatprep.mubr.f32.mxu0 0.0
  %740 = vmatmul.mubr.f32.gmra.mrb[0].mxu0 %v604
  %v741 = vpop.f32.mrb[0].mxu0
  %v742 = vadd.f32 0.0, %v741
  %v743 = vpop.f32.mrb[0].mxu0
  %744 = vmatprep.mubr.f32.mxu0 0.0
  %745 = vmatmul.mubr.f32.gmra.mrb[0].mxu0 %v607
  %v746 = vpop.f32.mrb[0].mxu0
  %v747 = vadd.f32 0.0, %v746
  %v748 = vpop.f32.mrb[0].mxu0
  %749 = vmatprep.mubr.f32.mxu0 0.0
  %750 = vmatmul.mubr.f32.gmra.mrb[0].mxu0 %v610
  %v751 = vpop.f32.mrb[0].mxu0
  %v752 = vadd.f32 0.0, %v751
  %v753 = vpop.f32.mrb[0].mxu0
  %754 = vmatprep.mubr.f32.mxu0 0.0
  %755 = vmatmul.mubr.f32.gmra.mrb[0].mxu0 %v613
  %v756 = vpop.f32.mrb[0].mxu0
  %v757 = vadd.f32 0.0, %v756
  %v758 = vpop.f32.mrb[0].mxu0
  %759 = vmatprep.mubr.f32.mxu0 0.0
  %760 = vmatmul.mubr.f32.gmra.mrb[0].mxu0 %v616
  %v761 = vpop.f32.mrb[0].mxu0
  %v762 = vadd.f32 0.0, %v761
  %v763 = vpop.f32.mrb[0].mxu0
  %764 = vmatprep.mubr.f32.mxu0 0.0
  %765 = vmatmul.mubr.f32.gmra.mrb[0].mxu0 %v619
  %v766 = vpop.f32.mrb[0].mxu0
  %v767 = vadd.f32 0.0, %v766
  %v768 = vpop.f32.mrb[0].mxu0
  %769 = vdwg.mxu0
  %v770 = vld [vmem:[%s1 + $0x80] sm:$0xff]
  %v771 = vld [vmem:[%s1 + $0x88] sm:$0xff]
  %772 = vst.msk [vmem:[#allocation2] sm:$0xff] %vm403, %v770
  %773 = vst.msk [vmem:[#allocation2 + $0x8] sm:$0xff] %vm403, %v771
  %v774 = vld [vmem:[%s1 + $0x90] sm:$0x3]
  %v775 = vld [vmem:[%s0] sm:$0xff]
  %v776 = vld [vmem:[%s0 + $0x8] sm:$0xff]
  %v777 = vld [vmem:[%s0 + $0x10] sm:$0xff]
  %v778 = vld [vmem:[%s0 + $0x18] sm:$0xff]
  %v779 = vld [vmem:[%s0 + $0x20] sm:$0xff]
  %v780 = vld [vmem:[%s0 + $0x28] sm:$0xff]
  %v781 = vld [vmem:[%s0 + $0x30] sm:$0xff]
  %v782 = vld [vmem:[%s0 + $0x38] sm:$0xff]
  %v783 = vld [vmem:[%s0 + $0x2c7] sm:$0x1]
  %v784 = vlaneseq
  %v785 = vshrl.u32 %v784, 7
  %v786 = vsub.s32 0, %v785
  %v787 = vrot.slane %v783, %v786
  %vm788 = vcmask 523264
  %v790 = vsel %vm788, %v774, 0
  %792 = vmatprep.subr.mxu0 0.0
  %793 = vmatpush1.msra.mxu0 %v775
  %794 = vmatprep.subr.mxu0 0.0
  %795 = vmatpush1.msra.mxu0 %v776
  %796 = vmatprep.subr.mxu0 0.0
  %797 = vmatpush1.msra.mxu0 %v777
  %798 = vmatprep.subr.mxu0 0.0
  %799 = vmatpush1.msra.mxu0 %v778
  %800 = vmatprep.subr.mxu0 0.0
  %801 = vmatpush1.msra.mxu0 %v779
  %802 = vmatprep.subr.mxu0 0.0
  %803 = vmatpush1.msra.mxu0 %v780
  %804 = vmatprep.subr.mxu0 0.0
  %805 = vmatpush1.msra.mxu0 %v781
  %806 = vmatprep.subr.mxu0 0.0
  %807 = vmatpush1.msra.mxu0 %v782
  %808 = vmatprep.subr.mxu0 0.0
  %809 = vmatpush1.msra.mxu0 0.0
  %810 = vmatprep.subr.mxu0 0.0
  %811 = vmatpush1.msra.mxu0 0.0
  %812 = vmatprep.subr.mxu0 0.0
  %813 = vmatpush1.msra.mxu0 0.0
  %814 = vmatprep.subr.mxu0 0.0
  %815 = vmatpush1.msra.mxu0 0.0
  %816 = vmatprep.subr.mxu0 0.0
  %817 = vmatpush1.msra.mxu0 0.0
  %818 = vmatprep.subr.mxu0 0.0
  %819 = vmatpush1.msra.mxu0 0.0
  %820 = vmatprep.subr.mxu0 0.0
  %821 = vmatpush1.msra.mxu0 0.0
  %822 = vmatprep.subr.mxu0 0.0
  %823 = vmatpush1.msra.mxu0 0.0
  %824 = vmatprep.subr.mxu0 0.0
  %825 = vmatpush1.msra.mxu0 0.0
  %826 = vmatprep.subr.mxu0 0.0
  %827 = vmatpush1.msra.mxu0 0.0
  %828 = vmatprep.subr.mxu0 0.0
  %829 = vmatpush1.msra.mxu0 0.0
  %830 = vmatprep.subr.mxu0 0.0
  %831 = vmatpush1.msra.mxu0 0.0
  %832 = vmatprep.subr.mxu0 0.0
  %833 = vmatpush1.msra.mxu0 0.0
  %834 = vmatprep.subr.mxu0 0.0
  %835 = vmatpush1.msra.mxu0 0.0
  %836 = vmatprep.subr.mxu0 0.0
  %837 = vmatpush1.msra.mxu0 0.0
  %838 = vmatprep.subr.mxu0 0.0
  %839 = vmatpush1.msra.mxu0 0.0
  %840 = vmatprep.subr.mxu0 0.0
  %841 = vmatpush1.msra.mxu0 0.0
  %842 = vmatprep.subr.mxu0 0.0
  %843 = vmatpush1.msra.mxu0 0.0
  %844 = vmatprep.subr.mxu0 0.0
  %845 = vmatpush1.msra.mxu0 0.0
  %846 = vmatprep.subr.mxu0 0.0
  %847 = vmatpush1.msra.mxu0 0.0
  %848 = vmatprep.subr.mxu0 0.0
  %849 = vmatpush1.msra.mxu0 0.0
  %850 = vmatprep.subr.mxu0 0.0
  %851 = vmatpush1.msra.mxu0 0.0
  %852 = vmatprep.subr.mxu0 0.0
  %853 = vmatpush1.msra.mxu0 0.0
  %854 = vmatprep.subr.mxu0 0.0
  %855 = vmatpush1.msra.mxu0 0.0
  %856 = vmatprep.mubr.f32.mxu0 0.0
  %857 = vmatmul.mubr.f32.gmra.mrb[0].mxu0 %v790
  %v858 = vpop.f32.mrb[0].mxu0
  %v859 = vadd.f32 %v787, %v858
  %v860 = vpop.f32.mrb[0].mxu0
  %861 = vdwg.mxu0
  %v862 = vld [vmem:[%s0 + $0x2c8] sm:$0x1]
  %v863 = vld [vmem:[%s0 + $0x2c9] sm:$0x1]
  %vm864 = vcmask 254976
  %v865 = vsel %vm864, %v859, 0.0
  %866 = vadd.xlane.f32.xlu0 %v865
  %v867 = vpop.xlane.xlu0 %866
  %v868 = vrcp.pop 32.0
  %v869 = vmul.f32 %v867, %v868
  %v870 = vsub.f32 %v859, %v869
  %v871 = vmul.f32 %v870, %v870
  %v872 = vsel %vm864, %v871, 0.0
  %873 = vadd.xlane.f32.xlu0 %v872
  %v874 = vpop.xlane.xlu0 %873
  %v875 = vmul.f32 %v874, %v868
  %v876 = vadd.f32 %v875, 1e-06
  %v877 = vrsqrt.pop %v876
  %v878 = vmul.f32 %v870, %v877
  %v879 = vlaneseq
  %v880 = vshrl.u32 %v879, 7
  %v881 = vsub.s32 0, %v880
  %v882 = vrot.slane %v862, %v881
  %v883 = vmul.f32 %v878, %v882
  %v884 = vlaneseq
  %v885 = vshrl.u32 %v884, 7
  %v886 = vsub.s32 0, %v885
  %v887 = vrot.slane %v863, %v886
  %v888 = vadd.f32 %v883, %v887
  %889 = vst.msk [vmem:[#allocation2 + $0x10] sm:$0x3] %vm864, %v888
  %891 = vrot.lane.b32.xlu0 %v859, 96
  %v892 = vpop.permute.xlu0 %891
  %v894 = vsel %vm864, %v892, 0.0
  %895 = vadd.xlane.f32.xlu0 %v894
  %v896 = vpop.xlane.xlu0 %895
  %v897 = vmul.f32 %v896, %v868
  %v898 = vsub.f32 %v859, %v897
  %v899 = vmul.f32 %v898, %v898
  %901 = vrot.lane.b32.xlu0 %v899, 96
  %v902 = vpop.permute.xlu0 %901
  %v904 = vsel %vm864, %v902, 0.0
  %905 = vadd.xlane.f32.xlu0 %v904
  %v906 = vpop.xlane.xlu0 %905
  %v907 = vmul.f32 %v906, %v868
  %v908 = vadd.f32 %v907, 1e-06
  %v909 = vrsqrt.pop %v908
  %v910 = vmul.f32 %v898, %v909
  %912 = vrot.lane.b32.xlu0 %v882, 32
  %v913 = vpop.permute.xlu0 %912
  %v915 = vmul.f32 %v910, %v913
  %917 = vrot.lane.b32.xlu0 %v887, 32
  %v918 = vpop.permute.xlu0 %917
  %v920 = vadd.f32 %v915, %v918
  %922 = vrot.lane.b32.xlu0 %v920, 96
  %v923 = vpop.permute.xlu0 %922
  %925 = vst.msk [vmem:[#allocation2 + $0x12] sm:$0x3] %vm864, %v923
  %926 = vrot.lane.b32.xlu0 %v859, 64
  %v927 = vpop.permute.xlu0 %926
  %v929 = vsel %vm864, %v927, 0.0
  %930 = vadd.xlane.f32.xlu0 %v929
  %v931 = vpop.xlane.xlu0 %930
  %v932 = vmul.f32 %v931, %v868
  %v933 = vsub.f32 %v859, %v932
  %v934 = vmul.f32 %v933, %v933
  %936 = vrot.lane.b32.xlu0 %v934, 64
  %v937 = vpop.permute.xlu0 %936
  %v939 = vsel %vm864, %v937, 0.0
  %940 = vadd.xlane.f32.xlu0 %v939
  %v941 = vpop.xlane.xlu0 %940
  %v942 = vmul.f32 %v941, %v868
  %v943 = vadd.f32 %v942, 1e-06
  %v944 = vrsqrt.pop %v943
  %v945 = vmul.f32 %v933, %v944
  %946 = vrot.lane.b32.xlu0 %v882, 64
  %v947 = vpop.permute.xlu0 %946
  %v949 = vmul.f32 %v945, %v947
  %950 = vrot.lane.b32.xlu0 %v887, 64
  %v951 = vpop.permute.xlu0 %950
  %v953 = vadd.f32 %v949, %v951
  %955 = vrot.lane.b32.xlu0 %v953, 64
  %v956 = vpop.permute.xlu0 %955
  %958 = vst.msk [vmem:[#allocation2 + $0x14] sm:$0x3] %vm864, %v956
  %959 = vrot.lane.b32.xlu0 %v859, 32
  %v960 = vpop.permute.xlu0 %959
  %v962 = vsel %vm864, %v960, 0.0
  %963 = vadd.xlane.f32.xlu0 %v962
  %v964 = vpop.xlane.xlu0 %963
  %v965 = vmul.f32 %v964, %v868
  %v966 = vsub.f32 %v859, %v965
  %v967 = vmul.f32 %v966, %v966
  %969 = vrot.lane.b32.xlu0 %v967, 32
  %v970 = vpop.permute.xlu0 %969
  %v972 = vsel %vm864, %v970, 0.0
  %973 = vadd.xlane.f32.xlu0 %v972
  %v974 = vpop.xlane.xlu0 %973
  %v975 = vmul.f32 %v974, %v868
  %v976 = vadd.f32 %v975, 1e-06
  %v977 = vrsqrt.pop %v976
  %v978 = vmul.f32 %v966, %v977
  %979 = vrot.lane.b32.xlu0 %v882, 96
  %v980 = vpop.permute.xlu0 %979
  %v982 = vmul.f32 %v978, %v980
  %983 = vrot.lane.b32.xlu0 %v887, 96
  %v984 = vpop.permute.xlu0 %983
  %v986 = vadd.f32 %v982, %v984
  %988 = vrot.lane.b32.xlu0 %v986, 32
  %v989 = vpop.permute.xlu0 %988
  %991 = vst.msk [vmem:[#allocation2 + $0x16] sm:$0x3] %vm864, %v989
  %v992 = vld [vmem:[%s1] sm:$0xff]
  %v993 = vld [vmem:[%s1 + $0x8] sm:$0xff]
  %v994 = vld [vmem:[%s1 + $0x10] sm:$0xff]
  %v995 = vld [vmem:[%s1 + $0x18] sm:$0xff]
  %v996 = vld [vmem:[%s1 + $0x20] sm:$0xff]
  %v997 = vld [vmem:[%s1 + $0x28] sm:$0xff]
  %v998 = vld [vmem:[%s1 + $0x30] sm:$0xff]
  %v999 = vld [vmem:[%s1 + $0x38] sm:$0xff]
  %v1000 = vld [vmem:[%s1 + $0x40] sm:$0xff]
  %v1001 = vld [vmem:[%s1 + $0x48] sm:$0xff]
  %v1002 = vld [vmem:[%s1 + $0x50] sm:$0xff]
  %v1003 = vld [vmem:[%s1 + $0x58] sm:$0xff]
  %v1004 = vld [vmem:[%s1 + $0x60] sm:$0xff]
  %v1005 = vld [vmem:[%s1 + $0x68] sm:$0xff]
  %v1006 = vld [vmem:[%s1 + $0x70] sm:$0xff]
  %v1007 = vld [vmem:[%s1 + $0x78] sm:$0xff]
  %v1008 = vld [vmem:[%s0 + $0xa0] sm:$0xff]
  %v1009 = vld [vmem:[%s0 + $0xa8] sm:$0xff]
  %v1010 = vld [vmem:[%s0 + $0x2c0] sm:$0x1]
  %v1011 = vlaneseq
  %v1012 = vshrl.u32 %v1011, 7
  %v1013 = vsub.s32 0, %v1012
  %v1014 = vrot.slane %v1010, %v1013
  %v1016 = vsel %vm234, %v992, 0
  %v1019 = vsel %vm234, %v993, 0
  %v1022 = vsel %vm234, %v994, 0
  %v1025 = vsel %vm234, %v995, 0
  %v1028 = vsel %vm234, %v996, 0
  %v1031 = vsel %vm234, %v997, 0
  %v1034 = vsel %vm234, %v998, 0
  %v1037 = vsel %vm234, %v999, 0
  %v1040 = vsel %vm234, %v1000, 0
  %v1043 = vsel %vm234, %v1001, 0
  %v1046 = vsel %vm234, %v1002, 0
  %v1049 = vsel %vm234, %v1003, 0
  %v1052 = vsel %vm234, %v1004, 0
  %v1055 = vsel %vm234, %v1005, 0
  %v1058 = vsel %vm234, %v1006, 0
  %v1061 = vsel %vm234, %v1007, 0
  %1063 = vmatprep.subr.mxu0 0.0
  %1064 = vmatpush1.msra.mxu0 %v1008
  %1065 = vmatprep.subr.mxu0 0.0
  %1066 = vmatpush1.msra.mxu0 %v1009
  %1067 = vmatprep.subr.mxu0 0.0
  %1068 = vmatpush1.msra.mxu0 0.0
  %1069 = vmatprep.subr.mxu0 0.0
  %1070 = vmatpush1.msra.mxu0 0.0
  %1071 = vmatprep.subr.mxu0 0.0
  %1072 = vmatpush1.msra.mxu0 0.0
  %1073 = vmatprep.subr.mxu0 0.0
  %1074 = vmatpush1.msra.mxu0 0.0
  %1075 = vmatprep.subr.mxu0 0.0
  %1076 = vmatpush1.msra.mxu0 0.0
  %1077 = vmatprep.subr.mxu0 0.0
  %1078 = vmatpush1.msra.mxu0 0.0
  %1079 = vmatprep.subr.mxu0 0.0
  %1080 = vmatpush1.msra.mxu0 0.0
  %1081 = vmatprep.subr.mxu0 0.0
  %1082 = vmatpush1.msra.mxu0 0.0
  %1083 = vmatprep.subr.mxu0 0.0
  %1084 = vmatpush1.msra.mxu0 0.0
  %1085 = vmatprep.subr.mxu0 0.0
  %1086 = vmatpush1.msra.mxu0 0.0
  %1087 = vmatprep.subr.mxu0 0.0
  %1088 = vmatpush1.msra.mxu0 0.0
  %1089 = vmatprep.subr.mxu0 0.0
  %1090 = vmatpush1.msra.mxu0 0.0
  %1091 = vmatprep.subr.mxu0 0.0
  %1092 = vmatpush1.msra.mxu0 0.0
  %1093 = vmatprep.subr.mxu0 0.0
  %1094 = vmatpush1.msra.mxu0 0.0
  %1095 = vmatprep.subr.mxu0 0.0
  %1096 = vmatpush1.msra.mxu0 0.0
  %1097 = vmatprep.subr.mxu0 0.0
  %1098 = vmatpush1.msra.mxu0 0.0
  %1099 = vmatprep.subr.mxu0 0.0
  %1100 = vmatpush1.msra.mxu0 0.0
  %1101 = vmatprep.subr.mxu0 0.0
  %1102 = vmatpush1.msra.mxu0 0.0
  %1103 = vmatprep.subr.mxu0 0.0
  %1104 = vmatpush1.msra.mxu0 0.0
  %1105 = vmatprep.subr.mxu0 0.0
  %1106 = vmatpush1.msra.mxu0 0.0
  %1107 = vmatprep.subr.mxu0 0.0
  %1108 = vmatpush1.msra.mxu0 0.0
  %1109 = vmatprep.subr.mxu0 0.0
  %1110 = vmatpush1.msra.mxu0 0.0
  %1111 = vmatprep.subr.mxu0 0.0
  %1112 = vmatpush1.msra.mxu0 0.0
  %1113 = vmatprep.subr.mxu0 0.0
  %1114 = vmatpush1.msra.mxu0 0.0
  %1115 = vmatprep.subr.mxu0 0.0
  %1116 = vmatpush1.msra.mxu0 0.0
  %1117 = vmatprep.subr.mxu0 0.0
  %1118 = vmatpush1.msra.mxu0 0.0
  %1119 = vmatprep.subr.mxu0 0.0
  %1120 = vmatpush1.msra.mxu0 0.0
  %1121 = vmatprep.subr.mxu0 0.0
  %1122 = vmatpush1.msra.mxu0 0.0
  %1123 = vmatprep.subr.mxu0 0.0
  %1124 = vmatpush1.msra.mxu0 0.0
  %1125 = vmatprep.subr.mxu0 0.0
  %1126 = vmatpush1.msra.mxu0 0.0
  %1127 = vmatprep.mubr.f32.mxu0 0.0
  %1128 = vmatmul.mubr.f32.gmra.mrb[0].mxu0 %v1016
  %v1129 = vpop.f32.mrb[0].mxu0
  %v1130 = vadd.f32 %v1014, %v1129
  %v1131 = vpop.f32.mrb[0].mxu0
  %1132 = vmatprep.mubr.f32.mxu0 0.0
  %1133 = vmatmul.mubr.f32.gmra.mrb[0].mxu0 %v1019
  %v1134 = vpop.f32.mrb[0].mxu0
  %v1135 = vadd.f32 %v1014, %v1134
  %v1136 = vpop.f32.mrb[0].mxu0
  %1137 = vmatprep.mubr.f32.mxu0 0.0
  %1138 = vmatmul.mubr.f32.gmra.mrb[0].mxu0 %v1022
  %v1139 = vpop.f32.mrb[0].mxu0
  %v1140 = vadd.f32 %v1014, %v1139
  %v1141 = vpop.f32.mrb[0].mxu0
  %1142 = vmatprep.mubr.f32.mxu0 0.0
  %1143 = vmatmul.mubr.f32.gmra.mrb[0].mxu0 %v1025
  %v1144 = vpop.f32.mrb[0].mxu0
  %v1145 = vadd.f32 %v1014, %v1144
  %v1146 = vpop.f32.mrb[0].mxu0
  %1147 = vmatprep.mubr.f32.mxu0 0.0
  %1148 = vmatmul.mubr.f32.gmra.mrb[0].mxu0 %v1028
  %v1149 = vpop.f32.mrb[0].mxu0
  %v1150 = vadd.f32 %v1014, %v1149
  %v1151 = vpop.f32.mrb[0].mxu0
  %1152 = vmatprep.mubr.f32.mxu0 0.0
  %1153 = vmatmul.mubr.f32.gmra.mrb[0].mxu0 %v1031
  %v1154 = vpop.f32.mrb[0].mxu0
  %v1155 = vadd.f32 %v1014, %v1154
  %v1156 = vpop.f32.mrb[0].mxu0
  %1157 = vmatprep.mubr.f32.mxu0 0.0
  %1158 = vmatmul.mubr.f32.gmra.mrb[0].mxu0 %v1034
  %v1159 = vpop.f32.mrb[0].mxu0
  %v1160 = vadd.f32 %v1014, %v1159
  %v1161 = vpop.f32.mrb[0].mxu0
  %1162 = vmatprep.mubr.f32.mxu0 0.0
  %1163 = vmatmul.mubr.f32.gmra.mrb[0].mxu0 %v1037
  %v1164 = vpop.f32.mrb[0].mxu0
  %v1165 = vadd.f32 %v1014, %v1164
  %v1166 = vpop.f32.mrb[0].mxu0
  %1167 = vmatprep.mubr.f32.mxu0 0.0
  %1168 = vmatmul.mubr.f32.gmra.mrb[0].mxu0 %v1040
  %v1169 = vpop.f32.mrb[0].mxu0
  %v1170 = vadd.f32 %v1014, %v1169
  %v1171 = vpop.f32.mrb[0].mxu0
  %1172 = vmatprep.mubr.f32.mxu0 0.0
  %1173 = vmatmul.mubr.f32.gmra.mrb[0].mxu0 %v1043
  %v1174 = vpop.f32.mrb[0].mxu0
  %v1175 = vadd.f32 %v1014, %v1174
  %v1176 = vpop.f32.mrb[0].mxu0
  %1177 = vmatprep.mubr.f32.mxu0 0.0
  %1178 = vmatmul.mubr.f32.gmra.mrb[0].mxu0 %v1046
  %v1179 = vpop.f32.mrb[0].mxu0
  %v1180 = vadd.f32 %v1014, %v1179
  %v1181 = vpop.f32.mrb[0].mxu0
  %1182 = vmatprep.mubr.f32.mxu0 0.0
  %1183 = vmatmul.mubr.f32.gmra.mrb[0].mxu0 %v1049
  %v1184 = vpop.f32.mrb[0].mxu0
  %v1185 = vadd.f32 %v1014, %v1184
  %v1186 = vpop.f32.mrb[0].mxu0
  %1187 = vmatprep.mubr.f32.mxu0 0.0
  %1188 = vmatmul.mubr.f32.gmra.mrb[0].mxu0 %v1052
  %v1189 = vpop.f32.mrb[0].mxu0
  %v1190 = vadd.f32 %v1014, %v1189
  %v1191 = vpop.f32.mrb[0].mxu0
  %1192 = vmatprep.mubr.f32.mxu0 0.0
  %1193 = vmatmul.mubr.f32.gmra.mrb[0].mxu0 %v1055
  %v1194 = vpop.f32.mrb[0].mxu0
  %v1195 = vadd.f32 %v1014, %v1194
  %v1196 = vpop.f32.mrb[0].mxu0
  %1197 = vmatprep.mubr.f32.mxu0 0.0
  %1198 = vmatmul.mubr.f32.gmra.mrb[0].mxu0 %v1058
  %v1199 = vpop.f32.mrb[0].mxu0
  %v1200 = vadd.f32 %v1014, %v1199
  %v1201 = vpop.f32.mrb[0].mxu0
  %1202 = vmatprep.mubr.f32.mxu0 0.0
  %1203 = vmatmul.mubr.f32.gmra.mrb[0].mxu0 %v1061
  %v1204 = vpop.f32.mrb[0].mxu0
  %v1205 = vadd.f32 %v1014, %v1204
  %v1206 = vpop.f32.mrb[0].mxu0
  %1207 = vdwg.mxu0
  %v1208 = vsel %vm403, %v1130, 0.0
  %1209 = vadd.xlane.f32.xlu0 %v1208
  %v1210 = vpop.xlane.xlu0 %1209
  %v1211 = vsel %vm403, %v1135, 0.0
  %1212 = vadd.xlane.f32.xlu0 %v1211
  %v1213 = vpop.xlane.xlu0 %1212
  %v1214 = vsel %vm403, %v1140, 0.0
  %1215 = vadd.xlane.f32.xlu0 %v1214
  %v1216 = vpop.xlane.xlu0 %1215
  %v1217 = vsel %vm403, %v1145, 0.0
  %1218 = vadd.xlane.f32.xlu0 %v1217
  %v1219 = vpop.xlane.xlu0 %1218
  %v1220 = vsel %vm403, %v1150, 0.0
  %1221 = vadd.xlane.f32.xlu0 %v1220
  %v1222 = vpop.xlane.xlu0 %1221
  %v1223 = vsel %vm403, %v1155, 0.0
  %1224 = vadd.xlane.f32.xlu0 %v1223
  %v1225 = vpop.xlane.xlu0 %1224
  %v1226 = vsel %vm403, %v1160, 0.0
  %1227 = vadd.xlane.f32.xlu0 %v1226
  %v1228 = vpop.xlane.xlu0 %1227
  %v1229 = vsel %vm403, %v1165, 0.0
  %1230 = vadd.xlane.f32.xlu0 %v1229
  %v1231 = vpop.xlane.xlu0 %1230
  %v1232 = vsel %vm403, %v1170, 0.0
  %1233 = vadd.xlane.f32.xlu0 %v1232
  %v1234 = vpop.xlane.xlu0 %1233
  %v1235 = vsel %vm403, %v1175, 0.0
  %1236 = vadd.xlane.f32.xlu0 %v1235
  %v1237 = vpop.xlane.xlu0 %1236
  %v1238 = vsel %vm403, %v1180, 0.0
  %1239 = vadd.xlane.f32.xlu0 %v1238
  %v1240 = vpop.xlane.xlu0 %1239
  %v1241 = vsel %vm403, %v1185, 0.0
  %1242 = vadd.xlane.f32.xlu0 %v1241
  %v1243 = vpop.xlane.xlu0 %1242
  %v1244 = vsel %vm403, %v1190, 0.0
  %1245 = vadd.xlane.f32.xlu0 %v1244
  %v1246 = vpop.xlane.xlu0 %1245
  %v1247 = vsel %vm403, %v1195, 0.0
  %1248 = vadd.xlane.f32.xlu0 %v1247
  %v1249 = vpop.xlane.xlu0 %1248
  %v1250 = vsel %vm403, %v1200, 0.0
  %1251 = vadd.xlane.f32.xlu0 %v1250
  %v1252 = vpop.xlane.xlu0 %1251
  %v1253 = vsel %vm403, %v1205, 0.0
  %1254 = vadd.xlane.f32.xlu0 %v1253
  %v1255 = vpop.xlane.xlu0 %1254
  %v1256 = vmul.f32 %v1210, %v868
  %v1257 = vmul.f32 %v1213, %v868
  %v1258 = vmul.f32 %v1216, %v868
  %v1259 = vmul.f32 %v1219, %v868
  %v1260 = vmul.f32 %v1222, %v868
  %v1261 = vmul.f32 %v1225, %v868
  %v1262 = vmul.f32 %v1228, %v868
  %v1263 = vmul.f32 %v1231, %v868
  %v1264 = vmul.f32 %v1234, %v868
  %v1265 = vmul.f32 %v1237, %v868
  %v1266 = vmul.f32 %v1240, %v868
  %v1267 = vmul.f32 %v1243, %v868
  %v1268 = vmul.f32 %v1246, %v868
  %v1269 = vmul.f32 %v1249, %v868
  %v1270 = vmul.f32 %v1252, %v868
  %v1271 = vmul.f32 %v1255, %v868
  %v1272 = vsub.f32 %v1130, %v1256
  %v1273 = vsub.f32 %v1135, %v1257
  %v1274 = vsub.f32 %v1140, %v1258
  %v1275 = vsub.f32 %v1145, %v1259
  %v1276 = vsub.f32 %v1150, %v1260
  %v1277 = vsub.f32 %v1155, %v1261
  %v1278 = vsub.f32 %v1160, %v1262
  %v1279 = vsub.f32 %v1165, %v1263
  %v1280 = vsub.f32 %v1170, %v1264
  %v1281 = vsub.f32 %v1175, %v1265
  %v1282 = vsub.f32 %v1180, %v1266
  %v1283 = vsub.f32 %v1185, %v1267
  %v1284 = vsub.f32 %v1190, %v1268
  %v1285 = vsub.f32 %v1195, %v1269
  %v1286 = vsub.f32 %v1200, %v1270
  %v1287 = vsub.f32 %v1205, %v1271
  %v1288 = vmul.f32 %v1272, %v1272
  %v1289 = vmul.f32 %v1273, %v1273
  %v1290 = vmul.f32 %v1274, %v1274
  %v1291 = vmul.f32 %v1275, %v1275
  %v1292 = vmul.f32 %v1276, %v1276
  %v1293 = vmul.f32 %v1277, %v1277
  %v1294 = vmul.f32 %v1278, %v1278
  %v1295 = vmul.f32 %v1279, %v1279
  %v1296 = vmul.f32 %v1280, %v1280
  %v1297 = vmul.f32 %v1281, %v1281
  %v1298 = vmul.f32 %v1282, %v1282
  %v1299 = vmul.f32 %v1283, %v1283
  %v1300 = vmul.f32 %v1284, %v1284
  %v1301 = vmul.f32 %v1285, %v1285
  %v1302 = vmul.f32 %v1286, %v1286
  %v1303 = vmul.f32 %v1287, %v1287
  %v1304 = vsel %vm403, %v1288, 0.0
  %1305 = vadd.xlane.f32.xlu0 %v1304
  %v1306 = vpop.xlane.xlu0 %1305
  %v1307 = vsel %vm403, %v1289, 0.0
  %1308 = vadd.xlane.f32.xlu0 %v1307
  %v1309 = vpop.xlane.xlu0 %1308
  %v1310 = vsel %vm403, %v1290, 0.0
  %1311 = vadd.xlane.f32.xlu0 %v1310
  %v1312 = vpop.xlane.xlu0 %1311
  %v1313 = vsel %vm403, %v1291, 0.0
  %1314 = vadd.xlane.f32.xlu0 %v1313
  %v1315 = vpop.xlane.xlu0 %1314
  %v1316 = vsel %vm403, %v1292, 0.0
  %1317 = vadd.xlane.f32.xlu0 %v1316
  %v1318 = vpop.xlane.xlu0 %1317
  %v1319 = vsel %vm403, %v1293, 0.0
  %1320 = vadd.xlane.f32.xlu0 %v1319
  %v1321 = vpop.xlane.xlu0 %1320
  %v1322 = vsel %vm403, %v1294, 0.0
  %1323 = vadd.xlane.f32.xlu0 %v1322
  %v1324 = vpop.xlane.xlu0 %1323
  %v1325 = vsel %vm403, %v1295, 0.0
  %1326 = vadd.xlane.f32.xlu0 %v1325
  %v1327 = vpop.xlane.xlu0 %1326
  %v1328 = vsel %vm403, %v1296, 0.0
  %1329 = vadd.xlane.f32.xlu0 %v1328
  %v1330 = vpop.xlane.xlu0 %1329
  %v1331 = vsel %vm403, %v1297, 0.0
  %1332 = vadd.xlane.f32.xlu0 %v1331
  %v1333 = vpop.xlane.xlu0 %1332
  %v1334 = vsel %vm403, %v1298, 0.0
  %1335 = vadd.xlane.f32.xlu0 %v1334
  %v1336 = vpop.xlane.xlu0 %1335
  %v1337 = vsel %vm403, %v1299, 0.0
  %1338 = vadd.xlane.f32.xlu0 %v1337
  %v1339 = vpop.xlane.xlu0 %1338
  %v1340 = vsel %vm403, %v1300, 0.0
  %1341 = vadd.xlane.f32.xlu0 %v1340
  %v1342 = vpop.xlane.xlu0 %1341
  %v1343 = vsel %vm403, %v1301, 0.0
  %1344 = vadd.xlane.f32.xlu0 %v1343
  %v1345 = vpop.xlane.xlu0 %1344
  %v1346 = vsel %vm403, %v1302, 0.0
  %1347 = vadd.xlane.f32.xlu0 %v1346
  %v1348 = vpop.xlane.xlu0 %1347
  %v1349 = vsel %vm403, %v1303, 0.0
  %1350 = vadd.xlane.f32.xlu0 %v1349
  %v1351 = vpop.xlane.xlu0 %1350
  %v1352 = vmul.f32 %v1306, %v868
  %v1353 = vmul.f32 %v1309, %v868
  %v1354 = vmul.f32 %v1312, %v868
  %v1355 = vmul.f32 %v1315, %v868
  %v1356 = vmul.f32 %v1318, %v868
  %v1357 = vmul.f32 %v1321, %v868
  %v1358 = vmul.f32 %v1324, %v868
  %v1359 = vmul.f32 %v1327, %v868
  %v1360 = vmul.f32 %v1330, %v868
  %v1361 = vmul.f32 %v1333, %v868
  %v1362 = vmul.f32 %v1336, %v868
  %v1363 = vmul.f32 %v1339, %v868
  %v1364 = vmul.f32 %v1342, %v868
  %v1365 = vmul.f32 %v1345, %v868
  %v1366 = vmul.f32 %v1348, %v868
  %v1367 = vmul.f32 %v1351, %v868
  %v1368 = vadd.f32 %v1352, 1e-06
  %v1369 = vadd.f32 %v1353, 1e-06
  %v1370 = vadd.f32 %v1354, 1e-06
  %v1371 = vadd.f32 %v1355, 1e-06
  %v1372 = vadd.f32 %v1356, 1e-06
  %v1373 = vadd.f32 %v1357, 1e-06
  %v1374 = vadd.f32 %v1358, 1e-06
  %v1375 = vadd.f32 %v1359, 1e-06
  %v1376 = vadd.f32 %v1360, 1e-06
  %v1377 = vadd.f32 %v1361, 1e-06
  %v1378 = vadd.f32 %v1362, 1e-06
  %v1379 = vadd.f32 %v1363, 1e-06
  %v1380 = vadd.f32 %v1364, 1e-06
  %v1381 = vadd.f32 %v1365, 1e-06
  %v1382 = vadd.f32 %v1366, 1e-06
  %v1383 = vadd.f32 %v1367, 1e-06
  %v1384 = vrsqrt.pop %v1368
  %v1385 = vrsqrt.pop %v1369
  %v1386 = vrsqrt.pop %v1370
  %v1387 = vrsqrt.pop %v1371
  %v1388 = vrsqrt.pop %v1372
  %v1389 = vrsqrt.pop %v1373
  %v1390 = vrsqrt.pop %v1374
  %v1391 = vrsqrt.pop %v1375
  %v1392 = vrsqrt.pop %v1376
  %v1393 = vrsqrt.pop %v1377
  %v1394 = vrsqrt.pop %v1378
  %v1395 = vrsqrt.pop %v1379
  %v1396 = vrsqrt.pop %v1380
  %v1397 = vrsqrt.pop %v1381
  %v1398 = vrsqrt.pop %v1382
  %v1399 = vrsqrt.pop %v1383
  %v1400 = vmul.f32 %v1272, %v1384
  %v1401 = vmul.f32 %v1273, %v1385
  %v1402 = vmul.f32 %v1274, %v1386
  %v1403 = vmul.f32 %v1275, %v1387
  %v1404 = vmul.f32 %v1276, %v1388
  %v1405 = vmul.f32 %v1277, %v1389
  %v1406 = vmul.f32 %v1278, %v1390
  %v1407 = vmul.f32 %v1279, %v1391
  %v1408 = vmul.f32 %v1280, %v1392
  %v1409 = vmul.f32 %v1281, %v1393
  %v1410 = vmul.f32 %v1282, %v1394
  %v1411 = vmul.f32 %v1283, %v1395
  %v1412 = vmul.f32 %v1284, %v1396
  %v1413 = vmul.f32 %v1285, %v1397
  %v1414 = vmul.f32 %v1286, %v1398
  %v1415 = vmul.f32 %v1287, %v1399
  %v1417 = vsel %vm621, %v474, 0
  %1419 = vmatprep.subr.mxu0 0.0
  %1420 = vmatpush1.msra.mxu0 %v1417
  %1421 = vmatprep.subr.mxu0 0.0
  %1422 = vmatpush1.msra.mxu0 0.0
  %1423 = vmatprep.subr.mxu0 0.0
  %1424 = vmatpush1.msra.mxu0 0.0
  %1425 = vmatprep.subr.mxu0 0.0
  %1426 = vmatpush1.msra.mxu0 0.0
  %1427 = vmatprep.subr.mxu0 0.0
  %1428 = vmatpush1.msra.mxu0 0.0
  %1429 = vmatprep.subr.mxu0 0.0
  %1430 = vmatpush1.msra.mxu0 0.0
  %1431 = vmatprep.subr.mxu0 0.0
  %1432 = vmatpush1.msra.mxu0 0.0
  %1433 = vmatprep.subr.mxu0 0.0
  %1434 = vmatpush1.msra.mxu0 0.0
  %1435 = vmatprep.subr.mxu0 0.0
  %1436 = vmatpush1.msra.mxu0 0.0
  %1437 = vmatprep.subr.mxu0 0.0
  %1438 = vmatpush1.msra.mxu0 0.0
  %1439 = vmatprep.subr.mxu0 0.0
  %1440 = vmatpush1.msra.mxu0 0.0
  %1441 = vmatprep.subr.mxu0 0.0
  %1442 = vmatpush1.msra.mxu0 0.0
  %1443 = vmatprep.subr.mxu0 0.0
  %1444 = vmatpush1.msra.mxu0 0.0
  %1445 = vmatprep.subr.mxu0 0.0
  %1446 = vmatpush1.msra.mxu0 0.0
  %1447 = vmatprep.subr.mxu0 0.0
  %1448 = vmatpush1.msra.mxu0 0.0
  %1449 = vmatprep.subr.mxu0 0.0
  %1450 = vmatpush1.msra.mxu0 0.0
  %1451 = vmatprep.subr.mxu0 0.0
  %1452 = vmatpush1.msra.mxu0 0.0
  %1453 = vmatprep.subr.mxu0 0.0
  %1454 = vmatpush1.msra.mxu0 0.0
  %1455 = vmatprep.subr.mxu0 0.0
  %1456 = vmatpush1.msra.mxu0 0.0
  %1457 = vmatprep.subr.mxu0 0.0
  %1458 = vmatpush1.msra.mxu0 0.0
  %1459 = vmatprep.subr.mxu0 0.0
  %1460 = vmatpush1.msra.mxu0 0.0
  %1461 = vmatprep.subr.mxu0 0.0
  %1462 = vmatpush1.msra.mxu0 0.0
  %1463 = vmatprep.subr.mxu0 0.0
  %1464 = vmatpush1.msra.mxu0 0.0
  %1465 = vmatprep.subr.mxu0 0.0
  %1466 = vmatpush1.msra.mxu0 0.0
  %1467 = vmatprep.subr.mxu0 0.0
  %1468 = vmatpush1.msra.mxu0 0.0
  %1469 = vmatprep.subr.mxu0 0.0
  %1470 = vmatpush1.msra.mxu0 0.0
  %1471 = vmatprep.subr.mxu0 0.0
  %1472 = vmatpush1.msra.mxu0 0.0
  %1473 = vmatprep.subr.mxu0 0.0
  %1474 = vmatpush1.msra.mxu0 0.0
  %1475 = vmatprep.subr.mxu0 0.0
  %1476 = vmatpush1.msra.mxu0 0.0
  %1477 = vmatprep.subr.mxu0 0.0
  %1478 = vmatpush1.msra.mxu0 0.0
  %1479 = vmatprep.subr.mxu0 0.0
  %1480 = vmatpush1.msra.mxu0 0.0
  %1481 = vmatprep.subr.mxu0 0.0
  %1482 = vmatpush1.msra.mxu0 0.0
  %1483 = vmatprep.mubr.f32.mxu0 0.0
  %1484 = vmatmul.mubr.f32.gmra.mrb[0].mxu0 %v574
  %v1485 = vpop.f32.mrb[0].mxu0
  %v1486 = vadd.f32 1.0, %v1485
  %v1487 = vpop.f32.mrb[0].mxu0
  %1488 = vmatprep.mubr.f32.mxu0 0.0
  %1489 = vmatmul.mubr.f32.gmra.mrb[0].mxu0 %v577
  %v1490 = vpop.f32.mrb[0].mxu0
  %v1491 = vadd.f32 1.0, %v1490
  %v1492 = vpop.f32.mrb[0].mxu0
  %1493 = vmatprep.mubr.f32.mxu0 0.0
  %1494 = vmatmul.mubr.f32.gmra.mrb[0].mxu0 %v580
  %v1495 = vpop.f32.mrb[0].mxu0
  %v1496 = vadd.f32 1.0, %v1495
  %v1497 = vpop.f32.mrb[0].mxu0
  %1498 = vmatprep.mubr.f32.mxu0 0.0
  %1499 = vmatmul.mubr.f32.gmra.mrb[0].mxu0 %v583
  %v1500 = vpop.f32.mrb[0].mxu0
  %v1501 = vadd.f32 1.0, %v1500
  %v1502 = vpop.f32.mrb[0].mxu0
  %1503 = vmatprep.mubr.f32.mxu0 0.0
  %1504 = vmatmul.mubr.f32.gmra.mrb[0].mxu0 %v586
  %v1505 = vpop.f32.mrb[0].mxu0
  %v1506 = vadd.f32 1.0, %v1505
  %v1507 = vpop.f32.mrb[0].mxu0
  %1508 = vmatprep.mubr.f32.mxu0 0.0
  %1509 = vmatmul.mubr.f32.gmra.mrb[0].mxu0 %v589
  %v1510 = vpop.f32.mrb[0].mxu0
  %v1511 = vadd.f32 1.0, %v1510
  %v1512 = vpop.f32.mrb[0].mxu0
  %1513 = vmatprep.mubr.f32.mxu0 0.0
  %1514 = vmatmul.mubr.f32.gmra.mrb[0].mxu0 %v592
  %v1515 = vpop.f32.mrb[0].mxu0
  %v1516 = vadd.f32 1.0, %v1515
  %v1517 = vpop.f32.mrb[0].mxu0
  %1518 = vmatprep.mubr.f32.mxu0 0.0
  %1519 = vmatmul.mubr.f32.gmra.mrb[0].mxu0 %v595
  %v1520 = vpop.f32.mrb[0].mxu0
  %v1521 = vadd.f32 1.0, %v1520
  %v1522 = vpop.f32.mrb[0].mxu0
  %1523 = vmatprep.mubr.f32.mxu0 0.0
  %1524 = vmatmul.mubr.f32.gmra.mrb[0].mxu0 %v598
  %v1525 = vpop.f32.mrb[0].mxu0
  %v1526 = vadd.f32 1.0, %v1525
  %v1527 = vpop.f32.mrb[0].mxu0
  %1528 = vmatprep.mubr.f32.mxu0 0.0
  %1529 = vmatmul.mubr.f32.gmra.mrb[0].mxu0 %v601
  %v1530 = vpop.f32.mrb[0].mxu0
  %v1531 = vadd.f32 1.0, %v1530
  %v1532 = vpop.f32.mrb[0].mxu0
  %1533 = vmatprep.mubr.f32.mxu0 0.0
  %1534 = vmatmul.mubr.f32.gmra.mrb[0].mxu0 %v604
  %v1535 = vpop.f32.mrb[0].mxu0
  %v1536 = vadd.f32 1.0, %v1535
  %v1537 = vpop.f32.mrb[0].mxu0
  %1538 = vmatprep.mubr.f32.mxu0 0.0
  %1539 = vmatmul.mubr.f32.gmra.mrb[0].mxu0 %v607
  %v1540 = vpop.f32.mrb[0].mxu0
  %v1541 = vadd.f32 1.0, %v1540
  %v1542 = vpop.f32.mrb[0].mxu0
  %1543 = vmatprep.mubr.f32.mxu0 0.0
  %1544 = vmatmul.mubr.f32.gmra.mrb[0].mxu0 %v610
  %v1545 = vpop.f32.mrb[0].mxu0
  %v1546 = vadd.f32 1.0, %v1545
  %v1547 = vpop.f32.mrb[0].mxu0
  %1548 = vmatprep.mubr.f32.mxu0 0.0
  %1549 = vmatmul.mubr.f32.gmra.mrb[0].mxu0 %v613
  %v1550 = vpop.f32.mrb[0].mxu0
  %v1551 = vadd.f32 1.0, %v1550
  %v1552 = vpop.f32.mrb[0].mxu0
  %1553 = vmatprep.mubr.f32.mxu0 0.0
  %1554 = vmatmul.mubr.f32.gmra.mrb[0].mxu0 %v616
  %v1555 = vpop.f32.mrb[0].mxu0
  %v1556 = vadd.f32 1.0, %v1555
  %v1557 = vpop.f32.mrb[0].mxu0
  %1558 = vmatprep.mubr.f32.mxu0 0.0
  %1559 = vmatmul.mubr.f32.gmra.mrb[0].mxu0 %v619
  %v1560 = vpop.f32.mrb[0].mxu0
  %v1561 = vadd.f32 1.0, %v1560
  %v1562 = vpop.f32.mrb[0].mxu0
  %1563 = vdwg.mxu0
  %v1564 = vmul.f32 %v1400, %v1486
  %v1565 = vmul.f32 %v1401, %v1491
  %v1566 = vmul.f32 %v1402, %v1496
  %v1567 = vmul.f32 %v1403, %v1501
  %v1568 = vmul.f32 %v1404, %v1506
  %v1569 = vmul.f32 %v1405, %v1511
  %v1570 = vmul.f32 %v1406, %v1516
  %v1571 = vmul.f32 %v1407, %v1521
  %v1572 = vmul.f32 %v1408, %v1526
  %v1573 = vmul.f32 %v1409, %v1531
  %v1574 = vmul.f32 %v1410, %v1536
  %v1575 = vmul.f32 %v1411, %v1541
  %v1576 = vmul.f32 %v1412, %v1546
  %v1577 = vmul.f32 %v1413, %v1551
  %v1578 = vmul.f32 %v1414, %v1556
  %v1579 = vmul.f32 %v1415, %v1561
  %v1580 = vadd.f32 %v1564, %v692
  %v1581 = vadd.f32 %v1565, %v697
  %v1582 = vadd.f32 %v1566, %v702
  %v1583 = vadd.f32 %v1567, %v707
  %v1584 = vadd.f32 %v1568, %v712
  %v1585 = vadd.f32 %v1569, %v717
  %v1586 = vadd.f32 %v1570, %v722
  %v1587 = vadd.f32 %v1571, %v727
  %v1588 = vadd.f32 %v1572, %v732
  %v1589 = vadd.f32 %v1573, %v737
  %v1590 = vadd.f32 %v1574, %v742
  %v1591 = vadd.f32 %v1575, %v747
  %v1592 = vadd.f32 %v1576, %v752
  %v1593 = vadd.f32 %v1577, %v757
  %v1594 = vadd.f32 %v1578, %v762
  %v1595 = vadd.f32 %v1579, %v767
  %v1596 = vld [vmem:[%s0 + $0xb0] sm:$0xff]
  %v1597 = vld [vmem:[%s0 + $0xb8] sm:$0xff]
  %v1598 = vld [vmem:[%s0 + $0xc0] sm:$0xff]
  %v1599 = vld [vmem:[%s0 + $0xc8] sm:$0xff]
  %v1601 = vsel %vm403, %v1580, 0
  %v1604 = vsel %vm403, %v1581, 0
  %v1607 = vsel %vm403, %v1582, 0
  %v1610 = vsel %vm403, %v1583, 0
  %v1613 = vsel %vm403, %v1584, 0
  %v1616 = vsel %vm403, %v1585, 0
  %v1619 = vsel %vm403, %v1586, 0
  %v1622 = vsel %vm403, %v1587, 0
  %v1625 = vsel %vm403, %v1588, 0
  %v1628 = vsel %vm403, %v1589, 0
  %v1631 = vsel %vm403, %v1590, 0
  %v1634 = vsel %vm403, %v1591, 0
  %v1637 = vsel %vm403, %v1592, 0
  %v1640 = vsel %vm403, %v1593, 0
  %v1643 = vsel %vm403, %v1594, 0
  %v1646 = vsel %vm403, %v1595, 0
  %1648 = vmatprep.subr.mxu0 0.0
  %1649 = vmatpush1.msra.mxu0 %v1596
  %1650 = vmatprep.subr.mxu0 0.0
  %1651 = vmatpush1.msra.mxu0 %v1597
  %1652 = vmatprep.subr.mxu0 0.0
  %1653 = vmatpush1.msra.mxu0 %v1598
  %1654 = vmatprep.subr.mxu0 0.0
  %1655 = vmatpush1.msra.mxu0 %v1599
  %1656 = vmatprep.subr.mxu0 0.0
  %1657 = vmatpush1.msra.mxu0 0.0
  %1658 = vmatprep.subr.mxu0 0.0
  %1659 = vmatpush1.msra.mxu0 0.0
  %1660 = vmatprep.subr.mxu0 0.0
  %1661 = vmatpush1.msra.mxu0 0.0
  %1662 = vmatprep.subr.mxu0 0.0
  %1663 = vmatpush1.msra.mxu0 0.0
  %1664 = vmatprep.subr.mxu0 0.0
  %1665 = vmatpush1.msra.mxu0 0.0
  %1666 = vmatprep.subr.mxu0 0.0
  %1667 = vmatpush1.msra.mxu0 0.0
  %1668 = vmatprep.subr.mxu0 0.0
  %1669 = vmatpush1.msra.mxu0 0.0
  %1670 = vmatprep.subr.mxu0 0.0
  %1671 = vmatpush1.msra.mxu0 0.0
  %1672 = vmatprep.subr.mxu0 0.0
  %1673 = vmatpush1.msra.mxu0 0.0
  %1674 = vmatprep.subr.mxu0 0.0
  %1675 = vmatpush1.msra.mxu0 0.0
  %1676 = vmatprep.subr.mxu0 0.0
  %1677 = vmatpush1.msra.mxu0 0.0
  %1678 = vmatprep.subr.mxu0 0.0
  %1679 = vmatpush1.msra.mxu0 0.0
  %1680 = vmatprep.subr.mxu0 0.0
  %1681 = vmatpush1.msra.mxu0 0.0
  %1682 = vmatprep.subr.mxu0 0.0
  %1683 = vmatpush1.msra.mxu0 0.0
  %1684 = vmatprep.subr.mxu0 0.0
  %1685 = vmatpush1.msra.mxu0 0.0
  %1686 = vmatprep.subr.mxu0 0.0
  %1687 = vmatpush1.msra.mxu0 0.0
  %1688 = vmatprep.subr.mxu0 0.0
  %1689 = vmatpush1.msra.mxu0 0.0
  %1690 = vmatprep.subr.mxu0 0.0
  %1691 = vmatpush1.msra.mxu0 0.0
  %1692 = vmatprep.subr.mxu0 0.0
  %1693 = vmatpush1.msra.mxu0 0.0
  %1694 = vmatprep.subr.mxu0 0.0
  %1695 = vmatpush1.msra.mxu0 0.0
  %1696 = vmatprep.subr.mxu0 0.0
  %1697 = vmatpush1.msra.mxu0 0.0
  %1698 = vmatprep.subr.mxu0 0.0
  %1699 = vmatpush1.msra.mxu0 0.0
  %1700 = vmatprep.subr.mxu0 0.0
  %1701 = vmatpush1.msra.mxu0 0.0
  %1702 = vmatprep.subr.mxu0 0.0
  %1703 = vmatpush1.msra.mxu0 0.0
  %1704 = vmatprep.subr.mxu0 0.0
  %1705 = vmatpush1.msra.mxu0 0.0
  %1706 = vmatprep.subr.mxu0 0.0
  %1707 = vmatpush1.msra.mxu0 0.0
  %1708 = vmatprep.subr.mxu0 0.0
  %1709 = vmatpush1.msra.mxu0 0.0
  %1710 = vmatprep.subr.mxu0 0.0
  %1711 = vmatpush1.msra.mxu0 0.0
  %1712 = vmatprep.mubr.f32.mxu0 0.0
  %1713 = vmatmul.mubr.f32.gmra.mrb[0].mxu0 %v1601
  %v1714 = vpop.f32.mrb[0].mxu0
  %v1715 = vadd.f32 0.0, %v1714
  %v1716 = vpop.f32.mrb[0].mxu0
  %1717 = vmatprep.mubr.f32.mxu0 0.0
  %1718 = vmatmul.mubr.f32.gmra.mrb[0].mxu0 %v1604
  %v1719 = vpop.f32.mrb[0].mxu0
  %v1720 = vadd.f32 0.0, %v1719
  %v1721 = vpop.f32.mrb[0].mxu0
  %1722 = vmatprep.mubr.f32.mxu0 0.0
  %1723 = vmatmul.mubr.f32.gmra.mrb[0].mxu0 %v1607
  %v1724 = vpop.f32.mrb[0].mxu0
  %v1725 = vadd.f32 0.0, %v1724
  %v1726 = vpop.f32.mrb[0].mxu0
  %1727 = vmatprep.mubr.f32.mxu0 0.0
  %1728 = vmatmul.mubr.f32.gmra.mrb[0].mxu0 %v1610
  %v1729 = vpop.f32.mrb[0].mxu0
  %v1730 = vadd.f32 0.0, %v1729
  %v1731 = vpop.f32.mrb[0].mxu0
  %1732 = vmatprep.mubr.f32.mxu0 0.0
  %1733 = vmatmul.mubr.f32.gmra.mrb[0].mxu0 %v1613
  %v1734 = vpop.f32.mrb[0].mxu0
  %v1735 = vadd.f32 0.0, %v1734
  %v1736 = vpop.f32.mrb[0].mxu0
  %1737 = vmatprep.mubr.f32.mxu0 0.0
  %1738 = vmatmul.mubr.f32.gmra.mrb[0].mxu0 %v1616
  %v1739 = vpop.f32.mrb[0].mxu0
  %v1740 = vadd.f32 0.0, %v1739
  %v1741 = vpop.f32.mrb[0].mxu0
  %1742 = vmatprep.mubr.f32.mxu0 0.0
  %1743 = vmatmul.mubr.f32.gmra.mrb[0].mxu0 %v1619
  %v1744 = vpop.f32.mrb[0].mxu0
  %v1745 = vadd.f32 0.0, %v1744
  %v1746 = vpop.f32.mrb[0].mxu0
  %1747 = vmatprep.mubr.f32.mxu0 0.0
  %1748 = vmatmul.mubr.f32.gmra.mrb[0].mxu0 %v1622
  %v1749 = vpop.f32.mrb[0].mxu0
  %v1750 = vadd.f32 0.0, %v1749
  %v1751 = vpop.f32.mrb[0].mxu0
  %1752 = vmatprep.mubr.f32.mxu0 0.0
  %1753 = vmatmul.mubr.f32.gmra.mrb[0].mxu0 %v1625
  %v1754 = vpop.f32.mrb[0].mxu0
  %v1755 = vadd.f32 0.0, %v1754
  %v1756 = vpop.f32.mrb[0].mxu0
  %1757 = vmatprep.mubr.f32.mxu0 0.0
  %1758 = vmatmul.mubr.f32.gmra.mrb[0].mxu0 %v1628
  %v1759 = vpop.f32.mrb[0].mxu0
  %v1760 = vadd.f32 0.0, %v1759
  %v1761 = vpop.f32.mrb[0].mxu0
  %1762 = vmatprep.mubr.f32.mxu0 0.0
  %1763 = vmatmul.mubr.f32.gmra.mrb[0].mxu0 %v1631
  %v1764 = vpop.f32.mrb[0].mxu0
  %v1765 = vadd.f32 0.0, %v1764
  %v1766 = vpop.f32.mrb[0].mxu0
  %1767 = vmatprep.mubr.f32.mxu0 0.0
  %1768 = vmatmul.mubr.f32.gmra.mrb[0].mxu0 %v1634
  %v1769 = vpop.f32.mrb[0].mxu0
  %v1770 = vadd.f32 0.0, %v1769
  %v1771 = vpop.f32.mrb[0].mxu0
  %1772 = vmatprep.mubr.f32.mxu0 0.0
  %1773 = vmatmul.mubr.f32.gmra.mrb[0].mxu0 %v1637
  %v1774 = vpop.f32.mrb[0].mxu0
  %v1775 = vadd.f32 0.0, %v1774
  %v1776 = vpop.f32.mrb[0].mxu0
  %1777 = vmatprep.mubr.f32.mxu0 0.0
  %1778 = vmatmul.mubr.f32.gmra.mrb[0].mxu0 %v1640
  %v1779 = vpop.f32.mrb[0].mxu0
  %v1780 = vadd.f32 0.0, %v1779
  %v1781 = vpop.f32.mrb[0].mxu0
  %1782 = vmatprep.mubr.f32.mxu0 0.0
  %1783 = vmatmul.mubr.f32.gmra.mrb[0].mxu0 %v1643
  %v1784 = vpop.f32.mrb[0].mxu0
  %v1785 = vadd.f32 0.0, %v1784
  %v1786 = vpop.f32.mrb[0].mxu0
  %1787 = vmatprep.mubr.f32.mxu0 0.0
  %1788 = vmatmul.mubr.f32.gmra.mrb[0].mxu0 %v1646
  %v1789 = vpop.f32.mrb[0].mxu0
  %v1790 = vadd.f32 0.0, %v1789
  %v1791 = vpop.f32.mrb[0].mxu0
  %1792 = vdwg.mxu0
  %v1793 = vld [vmem:[#allocation2] sm:$0xff]
  %v1794 = vld [vmem:[#allocation2 + $0x8] sm:$0xff]
  %v1795 = vld [vmem:[#allocation2 + $0x10] sm:$0xff]
  %v1796 = vld [vmem:[%s0 + $0xd0] sm:$0xff]
  %v1797 = vld [vmem:[%s0 + $0xd8] sm:$0xff]
  %v1798 = vld [vmem:[%s0 + $0xe0] sm:$0xff]
  %v1799 = vld [vmem:[%s0 + $0xe8] sm:$0xff]
  %v1801 = vsel %vm403, %v1793, 0
  %v1804 = vsel %vm403, %v1794, 0
  %v1807 = vsel %vm403, %v1795, 0
  %1809 = vmatprep.subr.mxu0 0.0
  %1810 = vmatpush1.msra.mxu0 %v1796
  %1811 = vmatprep.subr.mxu0 0.0
  %1812 = vmatpush1.msra.mxu0 %v1797
  %1813 = vmatprep.subr.mxu0 0.0
  %1814 = vmatpush1.msra.mxu0 %v1798
  %1815 = vmatprep.subr.mxu0 0.0
  %1816 = vmatpush1.msra.mxu0 %v1799
  %1817 = vmatprep.subr.mxu0 0.0
  %1818 = vmatpush1.msra.mxu0 0.0
  %1819 = vmatprep.subr.mxu0 0.0
  %1820 = vmatpush1.msra.mxu0 0.0
  %1821 = vmatprep.subr.mxu0 0.0
  %1822 = vmatpush1.msra.mxu0 0.0
  %1823 = vmatprep.subr.mxu0 0.0
  %1824 = vmatpush1.msra.mxu0 0.0
  %1825 = vmatprep.subr.mxu0 0.0
  %1826 = vmatpush1.msra.mxu0 0.0
  %1827 = vmatprep.subr.mxu0 0.0
  %1828 = vmatpush1.msra.mxu0 0.0
  %1829 = vmatprep.subr.mxu0 0.0
  %1830 = vmatpush1.msra.mxu0 0.0
  %1831 = vmatprep.subr.mxu0 0.0
  %1832 = vmatpush1.msra.mxu0 0.0
  %1833 = vmatprep.subr.mxu0 0.0
  %1834 = vmatpush1.msra.mxu0 0.0
  %1835 = vmatprep.subr.mxu0 0.0
  %1836 = vmatpush1.msra.mxu0 0.0
  %1837 = vmatprep.subr.mxu0 0.0
  %1838 = vmatpush1.msra.mxu0 0.0
  %1839 = vmatprep.subr.mxu0 0.0
  %1840 = vmatpush1.msra.mxu0 0.0
  %1841 = vmatprep.subr.mxu0 0.0
  %1842 = vmatpush1.msra.mxu0 0.0
  %1843 = vmatprep.subr.mxu0 0.0
  %1844 = vmatpush1.msra.mxu0 0.0
  %1845 = vmatprep.subr.mxu0 0.0
  %1846 = vmatpush1.msra.mxu0 0.0
  %1847 = vmatprep.subr.mxu0 0.0
  %1848 = vmatpush1.msra.mxu0 0.0
  %1849 = vmatprep.subr.mxu0 0.0
  %1850 = vmatpush1.msra.mxu0 0.0
  %1851 = vmatprep.subr.mxu0 0.0
  %1852 = vmatpush1.msra.mxu0 0.0
  %1853 = vmatprep.subr.mxu0 0.0
  %1854 = vmatpush1.msra.mxu0 0.0
  %1855 = vmatprep.subr.mxu0 0.0
  %1856 = vmatpush1.msra.mxu0 0.0
  %1857 = vmatprep.subr.mxu0 0.0
  %1858 = vmatpush1.msra.mxu0 0.0
  %1859 = vmatprep.subr.mxu0 0.0
  %1860 = vmatpush1.msra.mxu0 0.0
  %1861 = vmatprep.subr.mxu0 0.0
  %1862 = vmatpush1.msra.mxu0 0.0
  %1863 = vmatprep.subr.mxu0 0.0
  %1864 = vmatpush1.msra.mxu0 0.0
  %1865 = vmatprep.subr.mxu0 0.0
  %1866 = vmatpush1.msra.mxu0 0.0
  %1867 = vmatprep.subr.mxu0 0.0
  %1868 = vmatpush1.msra.mxu0 0.0
  %1869 = vmatprep.subr.mxu0 0.0
  %1870 = vmatpush1.msra.mxu0 0.0
  %1871 = vmatprep.subr.mxu0 0.0
  %1872 = vmatpush1.msra.mxu0 0.0
  %1873 = vmatprep.mubr.f32.mxu0 0.0
  %1874 = vmatmul.mubr.f32.gmra.mrb[0].mxu0 %v1801
  %v1875 = vpop.f32.mrb[0].mxu0
  %v1876 = vadd.f32 0.0, %v1875
  %v1877 = vpop.f32.mrb[0].mxu0
  %1878 = vmatprep.mubr.f32.mxu0 0.0
  %1879 = vmatmul.mubr.f32.gmra.mrb[0].mxu0 %v1804
  %v1880 = vpop.f32.mrb[0].mxu0
  %v1881 = vadd.f32 0.0, %v1880
  %v1882 = vpop.f32.mrb[0].mxu0
  %1883 = vmatprep.mubr.f32.mxu0 0.0
  %1884 = vmatmul.mubr.f32.gmra.mrb[0].mxu0 %v1807
  %v1885 = vpop.f32.mrb[0].mxu0
  %v1886 = vadd.f32 0.0, %v1885
  %v1887 = vpop.f32.mrb[0].mxu0
  %1888 = vdwg.mxu0
  %v1889 = vld [vmem:[%s0 + $0xf0] sm:$0xff]
  %v1890 = vld [vmem:[%s0 + $0xf8] sm:$0xff]
  %v1891 = vld [vmem:[%s0 + $0x100] sm:$0xff]
  %v1892 = vld [vmem:[%s0 + $0x108] sm:$0xff]
  %1893 = vmatprep.subr.mxu0 0.0
  %1894 = vmatpush1.msra.mxu0 %v1889
  %1895 = vmatprep.subr.mxu0 0.0
  %1896 = vmatpush1.msra.mxu0 %v1890
  %1897 = vmatprep.subr.mxu0 0.0
  %1898 = vmatpush1.msra.mxu0 %v1891
  %1899 = vmatprep.subr.mxu0 0.0
  %1900 = vmatpush1.msra.mxu0 %v1892
  %1901 = vmatprep.subr.mxu0 0.0
  %1902 = vmatpush1.msra.mxu0 0.0
  %1903 = vmatprep.subr.mxu0 0.0
  %1904 = vmatpush1.msra.mxu0 0.0
  %1905 = vmatprep.subr.mxu0 0.0
  %1906 = vmatpush1.msra.mxu0 0.0
  %1907 = vmatprep.subr.mxu0 0.0
  %1908 = vmatpush1.msra.mxu0 0.0
  %1909 = vmatprep.subr.mxu0 0.0
  %1910 = vmatpush1.msra.mxu0 0.0
  %1911 = vmatprep.subr.mxu0 0.0
  %1912 = vmatpush1.msra.mxu0 0.0
  %1913 = vmatprep.subr.mxu0 0.0
  %1914 = vmatpush1.msra.mxu0 0.0
  %1915 = vmatprep.subr.mxu0 0.0
  %1916 = vmatpush1.msra.mxu0 0.0
  %1917 = vmatprep.subr.mxu0 0.0
  %1918 = vmatpush1.msra.mxu0 0.0
  %1919 = vmatprep.subr.mxu0 0.0
  %1920 = vmatpush1.msra.mxu0 0.0
  %1921 = vmatprep.subr.mxu0 0.0
  %1922 = vmatpush1.msra.mxu0 0.0
  %1923 = vmatprep.subr.mxu0 0.0
  %1924 = vmatpush1.msra.mxu0 0.0
  %1925 = vmatprep.subr.mxu0 0.0
  %1926 = vmatpush1.msra.mxu0 0.0
  %1927 = vmatprep.subr.mxu0 0.0
  %1928 = vmatpush1.msra.mxu0 0.0
  %1929 = vmatprep.subr.mxu0 0.0
  %1930 = vmatpush1.msra.mxu0 0.0
  %1931 = vmatprep.subr.mxu0 0.0
  %1932 = vmatpush1.msra.mxu0 0.0
  %1933 = vmatprep.subr.mxu0 0.0
  %1934 = vmatpush1.msra.mxu0 0.0
  %1935 = vmatprep.subr.mxu0 0.0
  %1936 = vmatpush1.msra.mxu0 0.0
  %1937 = vmatprep.subr.mxu0 0.0
  %1938 = vmatpush1.msra.mxu0 0.0
  %1939 = vmatprep.subr.mxu0 0.0
  %1940 = vmatpush1.msra.mxu0 0.0
  %1941 = vmatprep.subr.mxu0 0.0
  %1942 = vmatpush1.msra.mxu0 0.0
  %1943 = vmatprep.subr.mxu0 0.0
  %1944 = vmatpush1.msra.mxu0 0.0
  %1945 = vmatprep.subr.mxu0 0.0
  %1946 = vmatpush1.msra.mxu0 0.0
  %1947 = vmatprep.subr.mxu0 0.0
  %1948 = vmatpush1.msra.mxu0 0.0
  %1949 = vmatprep.subr.mxu0 0.0
  %1950 = vmatpush1.msra.mxu0 0.0
  %1951 = vmatprep.subr.mxu0 0.0
  %1952 = vmatpush1.msra.mxu0 0.0
  %1953 = vmatprep.subr.mxu0 0.0
  %1954 = vmatpush1.msra.mxu0 0.0
  %1955 = vmatprep.subr.mxu0 0.0
  %1956 = vmatpush1.msra.mxu0 0.0
  %1957 = vmatprep.mubr.f32.mxu0 0.0
  %1958 = vmatmul.mubr.f32.gmra.mrb[0].mxu0 %v1801
  %v1959 = vpop.f32.mrb[0].mxu0
  %v1960 = vadd.f32 0.0, %v1959
  %v1961 = vpop.f32.mrb[0].mxu0
  %1962 = vmatprep.mubr.f32.mxu0 0.0
  %1963 = vmatmul.mubr.f32.gmra.mrb[0].mxu0 %v1804
  %v1964 = vpop.f32.mrb[0].mxu0
  %v1965 = vadd.f32 0.0, %v1964
  %v1966 = vpop.f32.mrb[0].mxu0
  %1967 = vmatprep.mubr.f32.mxu0 0.0
  %1968 = vmatmul.mubr.f32.gmra.mrb[0].mxu0 %v1807
  %v1969 = vpop.f32.mrb[0].mxu0
  %v1970 = vadd.f32 0.0, %v1969
  %v1971 = vpop.f32.mrb[0].mxu0
  %1972 = vdwg.mxu0
  %v1974 = vsel %vm403, %v1715, 0
  %v1977 = vsel %vm403, %v1720, 0
  %v1980 = vsel %vm403, %v1725, 0
  %v1983 = vsel %vm403, %v1730, 0
  %v1986 = vsel %vm403, %v1735, 0
  %v1989 = vsel %vm403, %v1740, 0
  %v1992 = vsel %vm403, %v1745, 0
  %v1995 = vsel %vm403, %v1750, 0
  %v1998 = vsel %vm403, %v1755, 0
  %v2001 = vsel %vm403, %v1760, 0
  %v2004 = vsel %vm403, %v1765, 0
  %v2007 = vsel %vm403, %v1770, 0
  %v2010 = vsel %vm403, %v1775, 0
  %v2013 = vsel %vm403, %v1780, 0
  %v2016 = vsel %vm403, %v1785, 0
  %v2019 = vsel %vm403, %v1790, 0
  %v2022 = vsel %vm403, %v1876, 0
  %v2025 = vsel %vm403, %v1881, 0
  %v2028 = vsel %vm403, %v1886, 0
  %2030 = vmatprep.subr.mxu0 0.0
  %2031 = vmatpush1.xpose.msra.mxu0 %v2022
  %2032 = vmatprep.subr.mxu0 0.0
  %2033 = vmatpush1.xpose.msra.mxu0 %v2025
  %2034 = vmatprep.subr.mxu0 0.0
  %2035 = vmatpush1.xpose.msra.mxu0 %v2028
  %2036 = vmatprep.subr.mxu0 0.0
  %2037 = vmatpush1.xpose.msra.mxu0 0.0
  %2038 = vmatprep.subr.mxu0 0.0
  %2039 = vmatpush1.xpose.msra.mxu0 0.0
  %2040 = vmatprep.subr.mxu0 0.0
  %2041 = vmatpush1.xpose.msra.mxu0 0.0
  %2042 = vmatprep.subr.mxu0 0.0
  %2043 = vmatpush1.xpose.msra.mxu0 0.0
  %2044 = vmatprep.subr.mxu0 0.0
  %2045 = vmatpush1.xpose.msra.mxu0 0.0
  %2046 = vmatprep.subr.mxu0 0.0
  %2047 = vmatpush1.xpose.msra.mxu0 0.0
  %2048 = vmatprep.subr.mxu0 0.0
  %2049 = vmatpush1.xpose.msra.mxu0 0.0
  %2050 = vmatprep.subr.mxu0 0.0
  %2051 = vmatpush1.xpose.msra.mxu0 0.0
  %2052 = vmatprep.subr.mxu0 0.0
  %2053 = vmatpush1.xpose.msra.mxu0 0.0
  %2054 = vmatprep.subr.mxu0 0.0
  %2055 = vmatpush1.xpose.msra.mxu0 0.0
  %2056 = vmatprep.subr.mxu0 0.0
  %2057 = vmatpush1.xpose.msra.mxu0 0.0
  %2058 = vmatprep.subr.mxu0 0.0
  %2059 = vmatpush1.xpose.msra.mxu0 0.0
  %2060 = vmatprep.subr.mxu0 0.0
  %2061 = vmatpush1.xpose.msra.mxu0 0.0
  %2062 = vmatprep.subr.mxu0 0.0
  %2063 = vmatpush1.xpose.msra.mxu0 0.0
  %2064 = vmatprep.subr.mxu0 0.0
  %2065 = vmatpush1.xpose.msra.mxu0 0.0
  %2066 = vmatprep.subr.mxu0 0.0
  %2067 = vmatpush1.xpose.msra.mxu0 0.0
  %2068 = vmatprep.subr.mxu0 0.0
  %2069 = vmatpush1.xpose.msra.mxu0 0.0
  %2070 = vmatprep.subr.mxu0 0.0
  %2071 = vmatpush1.xpose.msra.mxu0 0.0
  %2072 = vmatprep.subr.mxu0 0.0
  %2073 = vmatpush1.xpose.msra.mxu0 0.0
  %2074 = vmatprep.subr.mxu0 0.0
  %2075 = vmatpush1.xpose.msra.mxu0 0.0
  %2076 = vmatprep.subr.mxu0 0.0
  %2077 = vmatpush1.xpose.msra.mxu0 0.0
  %2078 = vmatprep.subr.mxu0 0.0
  %2079 = vmatpush1.xpose.msra.mxu0 0.0
  %2080 = vmatprep.subr.mxu0 0.0
  %2081 = vmatpush1.xpose.msra.mxu0 0.0
  %2082 = vmatprep.subr.mxu0 0.0
  %2083 = vmatpush1.xpose.msra.mxu0 0.0
  %2084 = vmatprep.subr.mxu0 0.0
  %2085 = vmatpush1.xpose.msra.mxu0 0.0
  %2086 = vmatprep.subr.mxu0 0.0
  %2087 = vmatpush1.xpose.msra.mxu0 0.0
  %2088 = vmatprep.subr.mxu0 0.0
  %2089 = vmatpush1.xpose.msra.mxu0 0.0
  %2090 = vmatprep.subr.mxu0 0.0
  %2091 = vmatpush1.xpose.msra.mxu0 0.0
  %2092 = vmatprep.subr.mxu0 0.0
  %2093 = vmatpush1.xpose.msra.mxu0 0.0
  %2094 = vmatprep.mubr.f32.mxu0 0.0
  %2095 = vmatmul.mubr.f32.gmra.mrb[0].mxu0 %v1974
  %v2096 = vpop.f32.mrb[0].mxu0
  %v2097 = vadd.f32 0.0, %v2096
  %v2098 = vpop.f32.mrb[0].mxu0
  %2099 = vmatprep.mubr.f32.mxu0 0.0
  %2100 = vmatmul.mubr.f32.gmra.mrb[0].mxu0 %v1977
  %v2101 = vpop.f32.mrb[0].mxu0
  %v2102 = vadd.f32 0.0, %v2101
  %v2103 = vpop.f32.mrb[0].mxu0
  %2104 = vmatprep.mubr.f32.mxu0 0.0
  %2105 = vmatmul.mubr.f32.gmra.mrb[0].mxu0 %v1980
  %v2106 = vpop.f32.mrb[0].mxu0
  %v2107 = vadd.f32 0.0, %v2106
  %v2108 = vpop.f32.mrb[0].mxu0
  %2109 = vmatprep.mubr.f32.mxu0 0.0
  %2110 = vmatmul.mubr.f32.gmra.mrb[0].mxu0 %v1983
  %v2111 = vpop.f32.mrb[0].mxu0
  %v2112 = vadd.f32 0.0, %v2111
  %v2113 = vpop.f32.mrb[0].mxu0
  %2114 = vmatprep.mubr.f32.mxu0 0.0
  %2115 = vmatmul.mubr.f32.gmra.mrb[0].mxu0 %v1986
  %v2116 = vpop.f32.mrb[0].mxu0
  %v2117 = vadd.f32 0.0, %v2116
  %v2118 = vpop.f32.mrb[0].mxu0
  %2119 = vmatprep.mubr.f32.mxu0 0.0
  %2120 = vmatmul.mubr.f32.gmra.mrb[0].mxu0 %v1989
  %v2121 = vpop.f32.mrb[0].mxu0
  %v2122 = vadd.f32 0.0, %v2121
  %v2123 = vpop.f32.mrb[0].mxu0
  %2124 = vmatprep.mubr.f32.mxu0 0.0
  %2125 = vmatmul.mubr.f32.gmra.mrb[0].mxu0 %v1992
  %v2126 = vpop.f32.mrb[0].mxu0
  %v2127 = vadd.f32 0.0, %v2126
  %v2128 = vpop.f32.mrb[0].mxu0
  %2129 = vmatprep.mubr.f32.mxu0 0.0
  %2130 = vmatmul.mubr.f32.gmra.mrb[0].mxu0 %v1995
  %v2131 = vpop.f32.mrb[0].mxu0
  %v2132 = vadd.f32 0.0, %v2131
  %v2133 = vpop.f32.mrb[0].mxu0
  %2134 = vmatprep.mubr.f32.mxu0 0.0
  %2135 = vmatmul.mubr.f32.gmra.mrb[0].mxu0 %v1998
  %v2136 = vpop.f32.mrb[0].mxu0
  %v2137 = vadd.f32 0.0, %v2136
  %v2138 = vpop.f32.mrb[0].mxu0
  %2139 = vmatprep.mubr.f32.mxu0 0.0
  %2140 = vmatmul.mubr.f32.gmra.mrb[0].mxu0 %v2001
  %v2141 = vpop.f32.mrb[0].mxu0
  %v2142 = vadd.f32 0.0, %v2141
  %v2143 = vpop.f32.mrb[0].mxu0
  %2144 = vmatprep.mubr.f32.mxu0 0.0
  %2145 = vmatmul.mubr.f32.gmra.mrb[0].mxu0 %v2004
  %v2146 = vpop.f32.mrb[0].mxu0
  %v2147 = vadd.f32 0.0, %v2146
  %v2148 = vpop.f32.mrb[0].mxu0
  %2149 = vmatprep.mubr.f32.mxu0 0.0
  %2150 = vmatmul.mubr.f32.gmra.mrb[0].mxu0 %v2007
  %v2151 = vpop.f32.mrb[0].mxu0
  %v2152 = vadd.f32 0.0, %v2151
  %v2153 = vpop.f32.mrb[0].mxu0
  %2154 = vmatprep.mubr.f32.mxu0 0.0
  %2155 = vmatmul.mubr.f32.gmra.mrb[0].mxu0 %v2010
  %v2156 = vpop.f32.mrb[0].mxu0
  %v2157 = vadd.f32 0.0, %v2156
  %v2158 = vpop.f32.mrb[0].mxu0
  %2159 = vmatprep.mubr.f32.mxu0 0.0
  %2160 = vmatmul.mubr.f32.gmra.mrb[0].mxu0 %v2013
  %v2161 = vpop.f32.mrb[0].mxu0
  %v2162 = vadd.f32 0.0, %v2161
  %v2163 = vpop.f32.mrb[0].mxu0
  %2164 = vmatprep.mubr.f32.mxu0 0.0
  %2165 = vmatmul.mubr.f32.gmra.mrb[0].mxu0 %v2016
  %v2166 = vpop.f32.mrb[0].mxu0
  %v2167 = vadd.f32 0.0, %v2166
  %v2168 = vpop.f32.mrb[0].mxu0
  %2169 = vmatprep.mubr.f32.mxu0 0.0
  %2170 = vmatmul.mubr.f32.gmra.mrb[0].mxu0 %v2019
  %v2171 = vpop.f32.mrb[0].mxu0
  %v2172 = vadd.f32 0.0, %v2171
  %v2173 = vpop.f32.mrb[0].mxu0
  %2174 = vdwg.mxu0
  %v2175 = vmul.f32 %v2097, 0.17677669
  %v2176 = vmul.f32 %v2102, 0.17677669
  %v2177 = vmul.f32 %v2107, 0.17677669
  %v2178 = vmul.f32 %v2112, 0.17677669
  %v2179 = vmul.f32 %v2117, 0.17677669
  %v2180 = vmul.f32 %v2122, 0.17677669
  %v2181 = vmul.f32 %v2127, 0.17677669
  %v2182 = vmul.f32 %v2132, 0.17677669
  %v2183 = vmul.f32 %v2137, 0.17677669
  %v2184 = vmul.f32 %v2142, 0.17677669
  %v2185 = vmul.f32 %v2147, 0.17677669
  %v2186 = vmul.f32 %v2152, 0.17677669
  %v2187 = vmul.f32 %v2157, 0.17677669
  %v2188 = vmul.f32 %v2162, 0.17677669
  %v2189 = vmul.f32 %v2167, 0.17677669
  %v2190 = vmul.f32 %v2172, 0.17677669
  %v2191 = vld [vmem:[%s0 + $0x1c0] sm:$0xff]
  %v2192 = vld [vmem:[%s0 + $0x1c8] sm:$0xff]
  %v2193 = vld [vmem:[%s0 + $0x1d0] sm:$0xff]
  %v2194 = vld [vmem:[%s0 + $0x1d8] sm:$0xff]
  %v2195 = vld [vmem:[%s0 + $0x1e0] sm:$0xff]
  %v2196 = vld [vmem:[%s0 + $0x1e8] sm:$0xff]
  %v2197 = vld [vmem:[%s0 + $0x1f0] sm:$0xff]
  %v2198 = vld [vmem:[%s0 + $0x1f8] sm:$0xff]
  %v2199 = vld [vmem:[%s0 + $0x200] sm:$0xff]
  %v2200 = vld [vmem:[%s0 + $0x208] sm:$0xff]
  %v2201 = vld [vmem:[%s0 + $0x210] sm:$0xff]
  %v2202 = vld [vmem:[%s0 + $0x218] sm:$0xff]
  %v2203 = vld [vmem:[%s0 + $0x220] sm:$0xff]
  %v2204 = vld [vmem:[%s0 + $0x228] sm:$0xff]
  %v2205 = vld [vmem:[%s0 + $0x230] sm:$0xff]
  %v2206 = vld [vmem:[%s0 + $0x238] sm:$0xff]
  %v2207 = vadd.f32 %v2175, %v2191
  %v2208 = vadd.f32 %v2176, %v2192
  %v2209 = vadd.f32 %v2177, %v2193
  %v2210 = vadd.f32 %v2178, %v2194
  %v2211 = vadd.f32 %v2179, %v2195
  %v2212 = vadd.f32 %v2180, %v2196
  %v2213 = vadd.f32 %v2181, %v2197
  %v2214 = vadd.f32 %v2182, %v2198
  %v2215 = vadd.f32 %v2183, %v2199
  %v2216 = vadd.f32 %v2184, %v2200
  %v2217 = vadd.f32 %v2185, %v2201
  %v2218 = vadd.f32 %v2186, %v2202
  %v2219 = vadd.f32 %v2187, %v2203
  %v2220 = vadd.f32 %v2188, %v2204
  %v2221 = vadd.f32 %v2189, %v2205
  %v2222 = vadd.f32 %v2190, %v2206
  %vm2223 = vcmask 195584
  %v2224 = vsel %vm2223, %v2207, -inf
  %2225 = vmax.xlane.f32.xlu0 %v2224
  %v2226 = vpop.xlane.xlu0 %2225
  %v2227 = vsel %vm2223, %v2208, -inf
  %2228 = vmax.xlane.f32.xlu0 %v2227
  %v2229 = vpop.xlane.xlu0 %2228
  %v2230 = vsel %vm2223, %v2209, -inf
  %2231 = vmax.xlane.f32.xlu0 %v2230
  %v2232 = vpop.xlane.xlu0 %2231
  %v2233 = vsel %vm2223, %v2210, -inf
  %2234 = vmax.xlane.f32.xlu0 %v2233
  %v2235 = vpop.xlane.xlu0 %2234
  %v2236 = vsel %vm2223, %v2211, -inf
  %2237 = vmax.xlane.f32.xlu0 %v2236
  %v2238 = vpop.xlane.xlu0 %2237
  %v2239 = vsel %vm2223, %v2212, -inf
  %2240 = vmax.xlane.f32.xlu0 %v2239
  %v2241 = vpop.xlane.xlu0 %2240
  %v2242 = vsel %vm2223, %v2213, -inf
  %2243 = vmax.xlane.f32.xlu0 %v2242
  %v2244 = vpop.xlane.xlu0 %2243
  %v2245 = vsel %vm2223, %v2214, -inf
  %2246 = vmax.xlane.f32.xlu0 %v2245
  %v2247 = vpop.xlane.xlu0 %2246
  %v2248 = vsel %vm2223, %v2215, -inf
  %2249 = vmax.xlane.f32.xlu0 %v2248
  %v2250 = vpop.xlane.xlu0 %2249
  %v2251 = vsel %vm2223, %v2216, -inf
  %2252 = vmax.xlane.f32.xlu0 %v2251
  %v2253 = vpop.xlane.xlu0 %2252
  %v2254 = vsel %vm2223, %v2217, -inf
  %2255 = vmax.xlane.f32.xlu0 %v2254
  %v2256 = vpop.xlane.xlu0 %2255
  %v2257 = vsel %vm2223, %v2218, -inf
  %2258 = vmax.xlane.f32.xlu0 %v2257
  %v2259 = vpop.xlane.xlu0 %2258
  %v2260 = vsel %vm2223, %v2219, -inf
  %2261 = vmax.xlane.f32.xlu0 %v2260
  %v2262 = vpop.xlane.xlu0 %2261
  %v2263 = vsel %vm2223, %v2220, -inf
  %2264 = vmax.xlane.f32.xlu0 %v2263
  %v2265 = vpop.xlane.xlu0 %2264
  %v2266 = vsel %vm2223, %v2221, -inf
  %2267 = vmax.xlane.f32.xlu0 %v2266
  %v2268 = vpop.xlane.xlu0 %2267
  %v2269 = vsel %vm2223, %v2222, -inf
  %2270 = vmax.xlane.f32.xlu0 %v2269
  %v2271 = vpop.xlane.xlu0 %2270
  %v2272 = vsub.f32 %v2207, %v2226
  %v2273 = vsub.f32 %v2208, %v2229
  %v2274 = vsub.f32 %v2209, %v2232
  %v2275 = vsub.f32 %v2210, %v2235
  %v2276 = vsub.f32 %v2211, %v2238
  %v2277 = vsub.f32 %v2212, %v2241
  %v2278 = vsub.f32 %v2213, %v2244
  %v2279 = vsub.f32 %v2214, %v2247
  %v2280 = vsub.f32 %v2215, %v2250
  %v2281 = vsub.f32 %v2216, %v2253
  %v2282 = vsub.f32 %v2217, %v2256
  %v2283 = vsub.f32 %v2218, %v2259
  %v2284 = vsub.f32 %v2219, %v2262
  %v2285 = vsub.f32 %v2220, %v2265
  %v2286 = vsub.f32 %v2221, %v2268
  %v2287 = vsub.f32 %v2222, %v2271
  %v2288 = vmul.f32 %v2272, 1.442695
  %v2289 = vpow.pop %v2288
  %v2290 = vmul.f32 %v2273, 1.442695
  %v2291 = vpow.pop %v2290
  %v2292 = vmul.f32 %v2274, 1.442695
  %v2293 = vpow.pop %v2292
  %v2294 = vmul.f32 %v2275, 1.442695
  %v2295 = vpow.pop %v2294
  %v2296 = vmul.f32 %v2276, 1.442695
  %v2297 = vpow.pop %v2296
  %v2298 = vmul.f32 %v2277, 1.442695
  %v2299 = vpow.pop %v2298
  %v2300 = vmul.f32 %v2278, 1.442695
  %v2301 = vpow.pop %v2300
  %v2302 = vmul.f32 %v2279, 1.442695
  %v2303 = vpow.pop %v2302
  %v2304 = vmul.f32 %v2280, 1.442695
  %v2305 = vpow.pop %v2304
  %v2306 = vmul.f32 %v2281, 1.442695
  %v2307 = vpow.pop %v2306
  %v2308 = vmul.f32 %v2282, 1.442695
  %v2309 = vpow.pop %v2308
  %v2310 = vmul.f32 %v2283, 1.442695
  %v2311 = vpow.pop %v2310
  %v2312 = vmul.f32 %v2284, 1.442695
  %v2313 = vpow.pop %v2312
  %v2314 = vmul.f32 %v2285, 1.442695
  %v2315 = vpow.pop %v2314
  %v2316 = vmul.f32 %v2286, 1.442695
  %v2317 = vpow.pop %v2316
  %v2318 = vmul.f32 %v2287, 1.442695
  %v2319 = vpow.pop %v2318
  %v2320 = vsel %vm2223, %v2289, 0.0
  %2321 = vadd.xlane.f32.xlu0 %v2320
  %v2322 = vpop.xlane.xlu0 %2321
  %v2323 = vsel %vm2223, %v2291, 0.0
  %2324 = vadd.xlane.f32.xlu0 %v2323
  %v2325 = vpop.xlane.xlu0 %2324
  %v2326 = vsel %vm2223, %v2293, 0.0
  %2327 = vadd.xlane.f32.xlu0 %v2326
  %v2328 = vpop.xlane.xlu0 %2327
  %v2329 = vsel %vm2223, %v2295, 0.0
  %2330 = vadd.xlane.f32.xlu0 %v2329
  %v2331 = vpop.xlane.xlu0 %2330
  %v2332 = vsel %vm2223, %v2297, 0.0
  %2333 = vadd.xlane.f32.xlu0 %v2332
  %v2334 = vpop.xlane.xlu0 %2333
  %v2335 = vsel %vm2223, %v2299, 0.0
  %2336 = vadd.xlane.f32.xlu0 %v2335
  %v2337 = vpop.xlane.xlu0 %2336
  %v2338 = vsel %vm2223, %v2301, 0.0
  %2339 = vadd.xlane.f32.xlu0 %v2338
  %v2340 = vpop.xlane.xlu0 %2339
  %v2341 = vsel %vm2223, %v2303, 0.0
  %2342 = vadd.xlane.f32.xlu0 %v2341
  %v2343 = vpop.xlane.xlu0 %2342
  %v2344 = vsel %vm2223, %v2305, 0.0
  %2345 = vadd.xlane.f32.xlu0 %v2344
  %v2346 = vpop.xlane.xlu0 %2345
  %v2347 = vsel %vm2223, %v2307, 0.0
  %2348 = vadd.xlane.f32.xlu0 %v2347
  %v2349 = vpop.xlane.xlu0 %2348
  %v2350 = vsel %vm2223, %v2309, 0.0
  %2351 = vadd.xlane.f32.xlu0 %v2350
  %v2352 = vpop.xlane.xlu0 %2351
  %v2353 = vsel %vm2223, %v2311, 0.0
  %2354 = vadd.xlane.f32.xlu0 %v2353
  %v2355 = vpop.xlane.xlu0 %2354
  %v2356 = vsel %vm2223, %v2313, 0.0
  %2357 = vadd.xlane.f32.xlu0 %v2356
  %v2358 = vpop.xlane.xlu0 %2357
  %v2359 = vsel %vm2223, %v2315, 0.0
  %2360 = vadd.xlane.f32.xlu0 %v2359
  %v2361 = vpop.xlane.xlu0 %2360
  %v2362 = vsel %vm2223, %v2317, 0.0
  %2363 = vadd.xlane.f32.xlu0 %v2362
  %v2364 = vpop.xlane.xlu0 %2363
  %v2365 = vsel %vm2223, %v2319, 0.0
  %2366 = vadd.xlane.f32.xlu0 %v2365
  %v2367 = vpop.xlane.xlu0 %2366
  %v2368 = vrcp.pop %v2322
  %v2369 = vrcp.pop %v2325
  %v2370 = vrcp.pop %v2328
  %v2371 = vrcp.pop %v2331
  %v2372 = vrcp.pop %v2334
  %v2373 = vrcp.pop %v2337
  %v2374 = vrcp.pop %v2340
  %v2375 = vrcp.pop %v2343
  %v2376 = vrcp.pop %v2346
  %v2377 = vrcp.pop %v2349
  %v2378 = vrcp.pop %v2352
  %v2379 = vrcp.pop %v2355
  %v2380 = vrcp.pop %v2358
  %v2381 = vrcp.pop %v2361
  %v2382 = vrcp.pop %v2364
  %v2383 = vrcp.pop %v2367
  %v2384 = vmul.f32 %v2289, %v2368
  %v2385 = vmul.f32 %v2291, %v2369
  %v2386 = vmul.f32 %v2293, %v2370
  %v2387 = vmul.f32 %v2295, %v2371
  %v2388 = vmul.f32 %v2297, %v2372
  %v2389 = vmul.f32 %v2299, %v2373
  %v2390 = vmul.f32 %v2301, %v2374
  %v2391 = vmul.f32 %v2303, %v2375
  %v2392 = vmul.f32 %v2305, %v2376
  %v2393 = vmul.f32 %v2307, %v2377
  %v2394 = vmul.f32 %v2309, %v2378
  %v2395 = vmul.f32 %v2311, %v2379
  %v2396 = vmul.f32 %v2313, %v2380
  %v2397 = vmul.f32 %v2315, %v2381
  %v2398 = vmul.f32 %v2317, %v2382
  %v2399 = vmul.f32 %v2319, %v2383
  %v2401 = vsel %vm2223, %v2384, 0
  %v2404 = vsel %vm2223, %v2385, 0
  %v2407 = vsel %vm2223, %v2386, 0
  %v2410 = vsel %vm2223, %v2387, 0
  %v2413 = vsel %vm2223, %v2388, 0
  %v2416 = vsel %vm2223, %v2389, 0
  %v2419 = vsel %vm2223, %v2390, 0
  %v2422 = vsel %vm2223, %v2391, 0
  %v2425 = vsel %vm2223, %v2392, 0
  %v2428 = vsel %vm2223, %v2393, 0
  %v2431 = vsel %vm2223, %v2394, 0
  %v2434 = vsel %vm2223, %v2395, 0
  %v2437 = vsel %vm2223, %v2396, 0
  %v2440 = vsel %vm2223, %v2397, 0
  %v2443 = vsel %vm2223, %v2398, 0
  %v2446 = vsel %vm2223, %v2399, 0
  %2448 = vmatprep.subr.mxu0 0.0
  %2449 = vmatpush1.msra.mxu0 %v1960
  %2450 = vmatprep.subr.mxu0 0.0
  %2451 = vmatpush1.msra.mxu0 %v1965
  %2452 = vmatprep.subr.mxu0 0.0
  %2453 = vmatpush1.msra.mxu0 %v1970
  %2454 = vmatprep.subr.mxu0 0.0
  %2455 = vmatpush1.msra.mxu0 0.0
  %2456 = vmatprep.subr.mxu0 0.0
  %2457 = vmatpush1.msra.mxu0 0.0
  %2458 = vmatprep.subr.mxu0 0.0
  %2459 = vmatpush1.msra.mxu0 0.0
  %2460 = vmatprep.subr.mxu0 0.0
  %2461 = vmatpush1.msra.mxu0 0.0
  %2462 = vmatprep.subr.mxu0 0.0
  %2463 = vmatpush1.msra.mxu0 0.0
  %2464 = vmatprep.subr.mxu0 0.0
  %2465 = vmatpush1.msra.mxu0 0.0
  %2466 = vmatprep.subr.mxu0 0.0
  %2467 = vmatpush1.msra.mxu0 0.0
  %2468 = vmatprep.subr.mxu0 0.0
  %2469 = vmatpush1.msra.mxu0 0.0
  %2470 = vmatprep.subr.mxu0 0.0
  %2471 = vmatpush1.msra.mxu0 0.0
  %2472 = vmatprep.subr.mxu0 0.0
  %2473 = vmatpush1.msra.mxu0 0.0
  %2474 = vmatprep.subr.mxu0 0.0
  %2475 = vmatpush1.msra.mxu0 0.0
  %2476 = vmatprep.subr.mxu0 0.0
  %2477 = vmatpush1.msra.mxu0 0.0
  %2478 = vmatprep.subr.mxu0 0.0
  %2479 = vmatpush1.msra.mxu0 0.0
  %2480 = vmatprep.subr.mxu0 0.0
  %2481 = vmatpush1.msra.mxu0 0.0
  %2482 = vmatprep.subr.mxu0 0.0
  %2483 = vmatpush1.msra.mxu0 0.0
  %2484 = vmatprep.subr.mxu0 0.0
  %2485 = vmatpush1.msra.mxu0 0.0
  %2486 = vmatprep.subr.mxu0 0.0
  %2487 = vmatpush1.msra.mxu0 0.0
  %2488 = vmatprep.subr.mxu0 0.0
  %2489 = vmatpush1.msra.mxu0 0.0
  %2490 = vmatprep.subr.mxu0 0.0
  %2491 = vmatpush1.msra.mxu0 0.0
  %2492 = vmatprep.subr.mxu0 0.0
  %2493 = vmatpush1.msra.mxu0 0.0
  %2494 = vmatprep.subr.mxu0 0.0
  %2495 = vmatpush1.msra.mxu0 0.0
  %2496 = vmatprep.subr.mxu0 0.0
  %2497 = vmatpush1.msra.mxu0 0.0
  %2498 = vmatprep.subr.mxu0 0.0
  %2499 = vmatpush1.msra.mxu0 0.0
  %2500 = vmatprep.subr.mxu0 0.0
  %2501 = vmatpush1.msra.mxu0 0.0
  %2502 = vmatprep.subr.mxu0 0.0
  %2503 = vmatpush1.msra.mxu0 0.0
  %2504 = vmatprep.subr.mxu0 0.0
  %2505 = vmatpush1.msra.mxu0 0.0
  %2506 = vmatprep.subr.mxu0 0.0
  %2507 = vmatpush1.msra.mxu0 0.0
  %2508 = vmatprep.subr.mxu0 0.0
  %2509 = vmatpush1.msra.mxu0 0.0
  %2510 = vmatprep.subr.mxu0 0.0
  %2511 = vmatpush1.msra.mxu0 0.0
  %2512 = vmatprep.mubr.f32.mxu0 0.0
  %2513 = vmatmul.mubr.f32.gmra.mrb[0].mxu0 %v2401
  %v2514 = vpop.f32.mrb[0].mxu0
  %v2515 = vadd.f32 0.0, %v2514
  %v2516 = vpop.f32.mrb[0].mxu0
  %2517 = vmatprep.mubr.f32.mxu0 0.0
  %2518 = vmatmul.mubr.f32.gmra.mrb[0].mxu0 %v2404
  %v2519 = vpop.f32.mrb[0].mxu0
  %v2520 = vadd.f32 0.0, %v2519
  %v2521 = vpop.f32.mrb[0].mxu0
  %2522 = vmatprep.mubr.f32.mxu0 0.0
  %2523 = vmatmul.mubr.f32.gmra.mrb[0].mxu0 %v2407
  %v2524 = vpop.f32.mrb[0].mxu0
  %v2525 = vadd.f32 0.0, %v2524
  %v2526 = vpop.f32.mrb[0].mxu0
  %2527 = vmatprep.mubr.f32.mxu0 0.0
  %2528 = vmatmul.mubr.f32.gmra.mrb[0].mxu0 %v2410
  %v2529 = vpop.f32.mrb[0].mxu0
  %v2530 = vadd.f32 0.0, %v2529
  %v2531 = vpop.f32.mrb[0].mxu0
  %2532 = vmatprep.mubr.f32.mxu0 0.0
  %2533 = vmatmul.mubr.f32.gmra.mrb[0].mxu0 %v2413
  %v2534 = vpop.f32.mrb[0].mxu0
  %v2535 = vadd.f32 0.0, %v2534
  %v2536 = vpop.f32.mrb[0].mxu0
  %2537 = vmatprep.mubr.f32.mxu0 0.0
  %2538 = vmatmul.mubr.f32.gmra.mrb[0].mxu0 %v2416
  %v2539 = vpop.f32.mrb[0].mxu0
  %v2540 = vadd.f32 0.0, %v2539
  %v2541 = vpop.f32.mrb[0].mxu0
  %2542 = vmatprep.mubr.f32.mxu0 0.0
  %2543 = vmatmul.mubr.f32.gmra.mrb[0].mxu0 %v2419
  %v2544 = vpop.f32.mrb[0].mxu0
  %v2545 = vadd.f32 0.0, %v2544
  %v2546 = vpop.f32.mrb[0].mxu0
  %2547 = vmatprep.mubr.f32.mxu0 0.0
  %2548 = vmatmul.mubr.f32.gmra.mrb[0].mxu0 %v2422
  %v2549 = vpop.f32.mrb[0].mxu0
  %v2550 = vadd.f32 0.0, %v2549
  %v2551 = vpop.f32.mrb[0].mxu0
  %2552 = vmatprep.mubr.f32.mxu0 0.0
  %2553 = vmatmul.mubr.f32.gmra.mrb[0].mxu0 %v2425
  %v2554 = vpop.f32.mrb[0].mxu0
  %v2555 = vadd.f32 0.0, %v2554
  %v2556 = vpop.f32.mrb[0].mxu0
  %2557 = vmatprep.mubr.f32.mxu0 0.0
  %2558 = vmatmul.mubr.f32.gmra.mrb[0].mxu0 %v2428
  %v2559 = vpop.f32.mrb[0].mxu0
  %v2560 = vadd.f32 0.0, %v2559
  %v2561 = vpop.f32.mrb[0].mxu0
  %2562 = vmatprep.mubr.f32.mxu0 0.0
  %2563 = vmatmul.mubr.f32.gmra.mrb[0].mxu0 %v2431
  %v2564 = vpop.f32.mrb[0].mxu0
  %v2565 = vadd.f32 0.0, %v2564
  %v2566 = vpop.f32.mrb[0].mxu0
  %2567 = vmatprep.mubr.f32.mxu0 0.0
  %2568 = vmatmul.mubr.f32.gmra.mrb[0].mxu0 %v2434
  %v2569 = vpop.f32.mrb[0].mxu0
  %v2570 = vadd.f32 0.0, %v2569
  %v2571 = vpop.f32.mrb[0].mxu0
  %2572 = vmatprep.mubr.f32.mxu0 0.0
  %2573 = vmatmul.mubr.f32.gmra.mrb[0].mxu0 %v2437
  %v2574 = vpop.f32.mrb[0].mxu0
  %v2575 = vadd.f32 0.0, %v2574
  %v2576 = vpop.f32.mrb[0].mxu0
  %2577 = vmatprep.mubr.f32.mxu0 0.0
  %2578 = vmatmul.mubr.f32.gmra.mrb[0].mxu0 %v2440
  %v2579 = vpop.f32.mrb[0].mxu0
  %v2580 = vadd.f32 0.0, %v2579
  %v2581 = vpop.f32.mrb[0].mxu0
  %2582 = vmatprep.mubr.f32.mxu0 0.0
  %2583 = vmatmul.mubr.f32.gmra.mrb[0].mxu0 %v2443
  %v2584 = vpop.f32.mrb[0].mxu0
  %v2585 = vadd.f32 0.0, %v2584
  %v2586 = vpop.f32.mrb[0].mxu0
  %2587 = vmatprep.mubr.f32.mxu0 0.0
  %2588 = vmatmul.mubr.f32.gmra.mrb[0].mxu0 %v2446
  %v2589 = vpop.f32.mrb[0].mxu0
  %v2590 = vadd.f32 0.0, %v2589
  %v2591 = vpop.f32.mrb[0].mxu0
  %2592 = vdwg.mxu0
  %v2593 = vadd.f32 %v1130, %v2515
  %v2594 = vadd.f32 %v1135, %v2520
  %v2595 = vadd.f32 %v1140, %v2525
  %v2596 = vadd.f32 %v1145, %v2530
  %v2597 = vadd.f32 %v1150, %v2535
  %v2598 = vadd.f32 %v1155, %v2540
  %v2599 = vadd.f32 %v1160, %v2545
  %v2600 = vadd.f32 %v1165, %v2550
  %v2601 = vadd.f32 %v1170, %v2555
  %v2602 = vadd.f32 %v1175, %v2560
  %v2603 = vadd.f32 %v1180, %v2565
  %v2604 = vadd.f32 %v1185, %v2570
  %v2605 = vadd.f32 %v1190, %v2575
  %v2606 = vadd.f32 %v1195, %v2580
  %v2607 = vadd.f32 %v1200, %v2585
  %v2608 = vadd.f32 %v1205, %v2590
  %v2609 = vsel %vm403, %v2593, 0.0
  %2610 = vadd.xlane.f32.xlu0 %v2609
  %v2611 = vpop.xlane.xlu0 %2610
  %v2612 = vsel %vm403, %v2594, 0.0
  %2613 = vadd.xlane.f32.xlu0 %v2612
  %v2614 = vpop.xlane.xlu0 %2613
  %v2615 = vsel %vm403, %v2595, 0.0
  %2616 = vadd.xlane.f32.xlu0 %v2615
  %v2617 = vpop.xlane.xlu0 %2616
  %v2618 = vsel %vm403, %v2596, 0.0
  %2619 = vadd.xlane.f32.xlu0 %v2618
  %v2620 = vpop.xlane.xlu0 %2619
  %v2621 = vsel %vm403, %v2597, 0.0
  %2622 = vadd.xlane.f32.xlu0 %v2621
  %v2623 = vpop.xlane.xlu0 %2622
  %v2624 = vsel %vm403, %v2598, 0.0
  %2625 = vadd.xlane.f32.xlu0 %v2624
  %v2626 = vpop.xlane.xlu0 %2625
  %v2627 = vsel %vm403, %v2599, 0.0
  %2628 = vadd.xlane.f32.xlu0 %v2627
  %v2629 = vpop.xlane.xlu0 %2628
  %v2630 = vsel %vm403, %v2600, 0.0
  %2631 = vadd.xlane.f32.xlu0 %v2630
  %v2632 = vpop.xlane.xlu0 %2631
  %v2633 = vsel %vm403, %v2601, 0.0
  %2634 = vadd.xlane.f32.xlu0 %v2633
  %v2635 = vpop.xlane.xlu0 %2634
  %v2636 = vsel %vm403, %v2602, 0.0
  %2637 = vadd.xlane.f32.xlu0 %v2636
  %v2638 = vpop.xlane.xlu0 %2637
  %v2639 = vsel %vm403, %v2603, 0.0
  %2640 = vadd.xlane.f32.xlu0 %v2639
  %v2641 = vpop.xlane.xlu0 %2640
  %v2642 = vsel %vm403, %v2604, 0.0
  %2643 = vadd.xlane.f32.xlu0 %v2642
  %v2644 = vpop.xlane.xlu0 %2643
  %v2645 = vsel %vm403, %v2605, 0.0
  %2646 = vadd.xlane.f32.xlu0 %v2645
  %v2647 = vpop.xlane.xlu0 %2646
  %v2648 = vsel %vm403, %v2606, 0.0
  %2649 = vadd.xlane.f32.xlu0 %v2648
  %v2650 = vpop.xlane.xlu0 %2649
  %v2651 = vsel %vm403, %v2607, 0.0
  %2652 = vadd.xlane.f32.xlu0 %v2651
  %v2653 = vpop.xlane.xlu0 %2652
  %v2654 = vsel %vm403, %v2608, 0.0
  %2655 = vadd.xlane.f32.xlu0 %v2654
  %v2656 = vpop.xlane.xlu0 %2655
  %v2657 = vmul.f32 %v2611, %v868
  %v2658 = vmul.f32 %v2614, %v868
  %v2659 = vmul.f32 %v2617, %v868
  %v2660 = vmul.f32 %v2620, %v868
  %v2661 = vmul.f32 %v2623, %v868
  %v2662 = vmul.f32 %v2626, %v868
  %v2663 = vmul.f32 %v2629, %v868
  %v2664 = vmul.f32 %v2632, %v868
  %v2665 = vmul.f32 %v2635, %v868
  %v2666 = vmul.f32 %v2638, %v868
  %v2667 = vmul.f32 %v2641, %v868
  %v2668 = vmul.f32 %v2644, %v868
  %v2669 = vmul.f32 %v2647, %v868
  %v2670 = vmul.f32 %v2650, %v868
  %v2671 = vmul.f32 %v2653, %v868
  %v2672 = vmul.f32 %v2656, %v868
  %v2673 = vsub.f32 %v2593, %v2657
  %v2674 = vsub.f32 %v2594, %v2658
  %v2675 = vsub.f32 %v2595, %v2659
  %v2676 = vsub.f32 %v2596, %v2660
  %v2677 = vsub.f32 %v2597, %v2661
  %v2678 = vsub.f32 %v2598, %v2662
  %v2679 = vsub.f32 %v2599, %v2663
  %v2680 = vsub.f32 %v2600, %v2664
  %v2681 = vsub.f32 %v2601, %v2665
  %v2682 = vsub.f32 %v2602, %v2666
  %v2683 = vsub.f32 %v2603, %v2667
  %v2684 = vsub.f32 %v2604, %v2668
  %v2685 = vsub.f32 %v2605, %v2669
  %v2686 = vsub.f32 %v2606, %v2670
  %v2687 = vsub.f32 %v2607, %v2671
  %v2688 = vsub.f32 %v2608, %v2672
  %v2689 = vmul.f32 %v2673, %v2673
  %v2690 = vmul.f32 %v2674, %v2674
  %v2691 = vmul.f32 %v2675, %v2675
  %v2692 = vmul.f32 %v2676, %v2676
  %v2693 = vmul.f32 %v2677, %v2677
  %v2694 = vmul.f32 %v2678, %v2678
  %v2695 = vmul.f32 %v2679, %v2679
  %v2696 = vmul.f32 %v2680, %v2680
  %v2697 = vmul.f32 %v2681, %v2681
  %v2698 = vmul.f32 %v2682, %v2682
  %v2699 = vmul.f32 %v2683, %v2683
  %v2700 = vmul.f32 %v2684, %v2684
  %v2701 = vmul.f32 %v2685, %v2685
  %v2702 = vmul.f32 %v2686, %v2686
  %v2703 = vmul.f32 %v2687, %v2687
  %v2704 = vmul.f32 %v2688, %v2688
  %v2705 = vsel %vm403, %v2689, 0.0
  %2706 = vadd.xlane.f32.xlu0 %v2705
  %v2707 = vpop.xlane.xlu0 %2706
  %v2708 = vsel %vm403, %v2690, 0.0
  %2709 = vadd.xlane.f32.xlu0 %v2708
  %v2710 = vpop.xlane.xlu0 %2709
  %v2711 = vsel %vm403, %v2691, 0.0
  %2712 = vadd.xlane.f32.xlu0 %v2711
  %v2713 = vpop.xlane.xlu0 %2712
  %v2714 = vsel %vm403, %v2692, 0.0
  %2715 = vadd.xlane.f32.xlu0 %v2714
  %v2716 = vpop.xlane.xlu0 %2715
  %v2717 = vsel %vm403, %v2693, 0.0
  %2718 = vadd.xlane.f32.xlu0 %v2717
  %v2719 = vpop.xlane.xlu0 %2718
  %v2720 = vsel %vm403, %v2694, 0.0
  %2721 = vadd.xlane.f32.xlu0 %v2720
  %v2722 = vpop.xlane.xlu0 %2721
  %v2723 = vsel %vm403, %v2695, 0.0
  %2724 = vadd.xlane.f32.xlu0 %v2723
  %v2725 = vpop.xlane.xlu0 %2724
  %v2726 = vsel %vm403, %v2696, 0.0
  %2727 = vadd.xlane.f32.xlu0 %v2726
  %v2728 = vpop.xlane.xlu0 %2727
  %v2729 = vsel %vm403, %v2697, 0.0
  %2730 = vadd.xlane.f32.xlu0 %v2729
  %v2731 = vpop.xlane.xlu0 %2730
  %v2732 = vsel %vm403, %v2698, 0.0
  %2733 = vadd.xlane.f32.xlu0 %v2732
  %v2734 = vpop.xlane.xlu0 %2733
  %v2735 = vsel %vm403, %v2699, 0.0
  %2736 = vadd.xlane.f32.xlu0 %v2735
  %v2737 = vpop.xlane.xlu0 %2736
  %v2738 = vsel %vm403, %v2700, 0.0
  %2739 = vadd.xlane.f32.xlu0 %v2738
  %v2740 = vpop.xlane.xlu0 %2739
  %v2741 = vsel %vm403, %v2701, 0.0
  %2742 = vadd.xlane.f32.xlu0 %v2741
  %v2743 = vpop.xlane.xlu0 %2742
  %v2744 = vsel %vm403, %v2702, 0.0
  %2745 = vadd.xlane.f32.xlu0 %v2744
  %v2746 = vpop.xlane.xlu0 %2745
  %v2747 = vsel %vm403, %v2703, 0.0
  %2748 = vadd.xlane.f32.xlu0 %v2747
  %v2749 = vpop.xlane.xlu0 %2748
  %v2750 = vsel %vm403, %v2704, 0.0
  %2751 = vadd.xlane.f32.xlu0 %v2750
  %v2752 = vpop.xlane.xlu0 %2751
  %v2753 = vmul.f32 %v2707, %v868
  %v2754 = vmul.f32 %v2710, %v868
  %v2755 = vmul.f32 %v2713, %v868
  %v2756 = vmul.f32 %v2716, %v868
  %v2757 = vmul.f32 %v2719, %v868
  %v2758 = vmul.f32 %v2722, %v868
  %v2759 = vmul.f32 %v2725, %v868
  %v2760 = vmul.f32 %v2728, %v868
  %v2761 = vmul.f32 %v2731, %v868
  %v2762 = vmul.f32 %v2734, %v868
  %v2763 = vmul.f32 %v2737, %v868
  %v2764 = vmul.f32 %v2740, %v868
  %v2765 = vmul.f32 %v2743, %v868
  %v2766 = vmul.f32 %v2746, %v868
  %v2767 = vmul.f32 %v2749, %v868
  %v2768 = vmul.f32 %v2752, %v868
  %v2769 = vadd.f32 %v2753, 1e-06
  %v2770 = vadd.f32 %v2754, 1e-06
  %v2771 = vadd.f32 %v2755, 1e-06
  %v2772 = vadd.f32 %v2756, 1e-06
  %v2773 = vadd.f32 %v2757, 1e-06
  %v2774 = vadd.f32 %v2758, 1e-06
  %v2775 = vadd.f32 %v2759, 1e-06
  %v2776 = vadd.f32 %v2760, 1e-06
  %v2777 = vadd.f32 %v2761, 1e-06
  %v2778 = vadd.f32 %v2762, 1e-06
  %v2779 = vadd.f32 %v2763, 1e-06
  %v2780 = vadd.f32 %v2764, 1e-06
  %v2781 = vadd.f32 %v2765, 1e-06
  %v2782 = vadd.f32 %v2766, 1e-06
  %v2783 = vadd.f32 %v2767, 1e-06
  %v2784 = vadd.f32 %v2768, 1e-06
  %v2785 = vrsqrt.pop %v2769
  %v2786 = vrsqrt.pop %v2770
  %v2787 = vrsqrt.pop %v2771
  %v2788 = vrsqrt.pop %v2772
  %v2789 = vrsqrt.pop %v2773
  %v2790 = vrsqrt.pop %v2774
  %v2791 = vrsqrt.pop %v2775
  %v2792 = vrsqrt.pop %v2776
  %v2793 = vrsqrt.pop %v2777
  %v2794 = vrsqrt.pop %v2778
  %v2795 = vrsqrt.pop %v2779
  %v2796 = vrsqrt.pop %v2780
  %v2797 = vrsqrt.pop %v2781
  %v2798 = vrsqrt.pop %v2782
  %v2799 = vrsqrt.pop %v2783
  %v2800 = vrsqrt.pop %v2784
  %v2801 = vmul.f32 %v2673, %v2785
  %v2802 = vmul.f32 %v2674, %v2786
  %v2803 = vmul.f32 %v2675, %v2787
  %v2804 = vmul.f32 %v2676, %v2788
  %v2805 = vmul.f32 %v2677, %v2789
  %v2806 = vmul.f32 %v2678, %v2790
  %v2807 = vmul.f32 %v2679, %v2791
  %v2808 = vmul.f32 %v2680, %v2792
  %v2809 = vmul.f32 %v2681, %v2793
  %v2810 = vmul.f32 %v2682, %v2794
  %v2811 = vmul.f32 %v2683, %v2795
  %v2812 = vmul.f32 %v2684, %v2796
  %v2813 = vmul.f32 %v2685, %v2797
  %v2814 = vmul.f32 %v2686, %v2798
  %v2815 = vmul.f32 %v2687, %v2799
  %v2816 = vmul.f32 %v2688, %v2800
  %v2817 = vld [vmem:[%s0 + $0x2c1] sm:$0x1]
  %v2818 = vlaneseq
  %v2819 = vshrl.u32 %v2818, 7
  %v2820 = vsub.s32 0, %v2819
  %v2821 = vrot.slane %v2817, %v2820
  %v2822 = vmul.f32 %v2801, %v2821
  %v2823 = vmul.f32 %v2802, %v2821
  %v2824 = vmul.f32 %v2803, %v2821
  %v2825 = vmul.f32 %v2804, %v2821
  %v2826 = vmul.f32 %v2805, %v2821
  %v2827 = vmul.f32 %v2806, %v2821
  %v2828 = vmul.f32 %v2807, %v2821
  %v2829 = vmul.f32 %v2808, %v2821
  %v2830 = vmul.f32 %v2809, %v2821
  %v2831 = vmul.f32 %v2810, %v2821
  %v2832 = vmul.f32 %v2811, %v2821
  %v2833 = vmul.f32 %v2812, %v2821
  %v2834 = vmul.f32 %v2813, %v2821
  %v2835 = vmul.f32 %v2814, %v2821
  %v2836 = vmul.f32 %v2815, %v2821
  %v2837 = vmul.f32 %v2816, %v2821
  %v2838 = vld [vmem:[%s0 + $0x2c2] sm:$0x1]
  %v2839 = vlaneseq
  %v2840 = vshrl.u32 %v2839, 7
  %v2841 = vsub.s32 0, %v2840
  %v2842 = vrot.slane %v2838, %v2841
  %v2843 = vadd.f32 %v2822, %v2842
  %v2844 = vadd.f32 %v2823, %v2842
  %v2845 = vadd.f32 %v2824, %v2842
  %v2846 = vadd.f32 %v2825, %v2842
  %v2847 = vadd.f32 %v2826, %v2842
  %v2848 = vadd.f32 %v2827, %v2842
  %v2849 = vadd.f32 %v2828, %v2842
  %v2850 = vadd.f32 %v2829, %v2842
  %v2851 = vadd.f32 %v2830, %v2842
  %v2852 = vadd.f32 %v2831, %v2842
  %v2853 = vadd.f32 %v2832, %v2842
  %v2854 = vadd.f32 %v2833, %v2842
  %v2855 = vadd.f32 %v2834, %v2842
  %v2856 = vadd.f32 %v2835, %v2842
  %v2857 = vadd.f32 %v2836, %v2842
  %v2858 = vadd.f32 %v2837, %v2842
  %v2859 = vld [vmem:[%s0 + $0x110] sm:$0xff]
  %v2860 = vld [vmem:[%s0 + $0x118] sm:$0xff]
  %v2861 = vld [vmem:[%s0 + $0x120] sm:$0xff]
  %v2862 = vld [vmem:[%s0 + $0x128] sm:$0xff]
  %v2863 = vld [vmem:[%s0 + $0x2c3] sm:$0x1]
  %v2864 = vlaneseq
  %v2865 = vshrl.u32 %v2864, 7
  %v2866 = vsub.s32 0, %v2865
  %v2867 = vrot.slane %v2863, %v2866
  %v2869 = vsel %vm403, %v2843, 0
  %v2872 = vsel %vm403, %v2844, 0
  %v2875 = vsel %vm403, %v2845, 0
  %v2878 = vsel %vm403, %v2846, 0
  %v2881 = vsel %vm403, %v2847, 0
  %v2884 = vsel %vm403, %v2848, 0
  %v2887 = vsel %vm403, %v2849, 0
  %v2890 = vsel %vm403, %v2850, 0
  %v2893 = vsel %vm403, %v2851, 0
  %v2896 = vsel %vm403, %v2852, 0
  %v2899 = vsel %vm403, %v2853, 0
  %v2902 = vsel %vm403, %v2854, 0
  %v2905 = vsel %vm403, %v2855, 0
  %v2908 = vsel %vm403, %v2856, 0
  %v2911 = vsel %vm403, %v2857, 0
  %v2914 = vsel %vm403, %v2858, 0
  %2916 = vmatprep.subr.mxu0 0.0
  %2917 = vmatpush1.msra.mxu0 %v2859
  %2918 = vmatprep.subr.mxu0 0.0
  %2919 = vmatpush1.msra.mxu0 %v2860
  %2920 = vmatprep.subr.mxu0 0.0
  %2921 = vmatpush1.msra.mxu0 %v2861
  %2922 = vmatprep.subr.mxu0 0.0
  %2923 = vmatpush1.msra.mxu0 %v2862
  %2924 = vmatprep.subr.mxu0 0.0
  %2925 = vmatpush1.msra.mxu0 0.0
  %2926 = vmatprep.subr.mxu0 0.0
  %2927 = vmatpush1.msra.mxu0 0.0
  %2928 = vmatprep.subr.mxu0 0.0
  %2929 = vmatpush1.msra.mxu0 0.0
  %2930 = vmatprep.subr.mxu0 0.0
  %2931 = vmatpush1.msra.mxu0 0.0
  %2932 = vmatprep.subr.mxu0 0.0
  %2933 = vmatpush1.msra.mxu0 0.0
  %2934 = vmatprep.subr.mxu0 0.0
  %2935 = vmatpush1.msra.mxu0 0.0
  %2936 = vmatprep.subr.mxu0 0.0
  %2937 = vmatpush1.msra.mxu0 0.0
  %2938 = vmatprep.subr.mxu0 0.0
  %2939 = vmatpush1.msra.mxu0 0.0
  %2940 = vmatprep.subr.mxu0 0.0
  %2941 = vmatpush1.msra.mxu0 0.0
  %2942 = vmatprep.subr.mxu0 0.0
  %2943 = vmatpush1.msra.mxu0 0.0
  %2944 = vmatprep.subr.mxu0 0.0
  %2945 = vmatpush1.msra.mxu0 0.0
  %2946 = vmatprep.subr.mxu0 0.0
  %2947 = vmatpush1.msra.mxu0 0.0
  %2948 = vmatprep.subr.mxu0 0.0
  %2949 = vmatpush1.msra.mxu0 0.0
  %2950 = vmatprep.subr.mxu0 0.0
  %2951 = vmatpush1.msra.mxu0 0.0
  %2952 = vmatprep.subr.mxu0 0.0
  %2953 = vmatpush1.msra.mxu0 0.0
  %2954 = vmatprep.subr.mxu0 0.0
  %2955 = vmatpush1.msra.mxu0 0.0
  %2956 = vmatprep.subr.mxu0 0.0
  %2957 = vmatpush1.msra.mxu0 0.0
  %2958 = vmatprep.subr.mxu0 0.0
  %2959 = vmatpush1.msra.mxu0 0.0
  %2960 = vmatprep.subr.mxu0 0.0
  %2961 = vmatpush1.msra.mxu0 0.0
  %2962 = vmatprep.subr.mxu0 0.0
  %2963 = vmatpush1.msra.mxu0 0.0
  %2964 = vmatprep.subr.mxu0 0.0
  %2965 = vmatpush1.msra.mxu0 0.0
  %2966 = vmatprep.subr.mxu0 0.0
  %2967 = vmatpush1.msra.mxu0 0.0
  %2968 = vmatprep.subr.mxu0 0.0
  %2969 = vmatpush1.msra.mxu0 0.0
  %2970 = vmatprep.subr.mxu0 0.0
  %2971 = vmatpush1.msra.mxu0 0.0
  %2972 = vmatprep.subr.mxu0 0.0
  %2973 = vmatpush1.msra.mxu0 0.0
  %2974 = vmatprep.subr.mxu0 0.0
  %2975 = vmatpush1.msra.mxu0 0.0
  %2976 = vmatprep.subr.mxu0 0.0
  %2977 = vmatpush1.msra.mxu0 0.0
  %2978 = vmatprep.subr.mxu0 0.0
  %2979 = vmatpush1.msra.mxu0 0.0
  %2980 = vmatprep.mubr.f32.mxu0 0.0
  %2981 = vmatmul.mubr.f32.gmra.mrb[0].mxu0 %v2869
  %v2982 = vpop.f32.mrb[0].mxu0
  %v2983 = vadd.f32 %v2867, %v2982
  %v2984 = vpop.f32.mrb[0].mxu0
  %2985 = vmatprep.mubr.f32.mxu0 0.0
  %2986 = vmatmul.mubr.f32.gmra.mrb[0].mxu0 %v2872
  %v2987 = vpop.f32.mrb[0].mxu0
  %v2988 = vadd.f32 %v2867, %v2987
  %v2989 = vpop.f32.mrb[0].mxu0
  %2990 = vmatprep.mubr.f32.mxu0 0.0
  %2991 = vmatmul.mubr.f32.gmra.mrb[0].mxu0 %v2875
  %v2992 = vpop.f32.mrb[0].mxu0
  %v2993 = vadd.f32 %v2867, %v2992
  %v2994 = vpop.f32.mrb[0].mxu0
  %2995 = vmatprep.mubr.f32.mxu0 0.0
  %2996 = vmatmul.mubr.f32.gmra.mrb[0].mxu0 %v2878
  %v2997 = vpop.f32.mrb[0].mxu0
  %v2998 = vadd.f32 %v2867, %v2997
  %v2999 = vpop.f32.mrb[0].mxu0
  %3000 = vmatprep.mubr.f32.mxu0 0.0
  %3001 = vmatmul.mubr.f32.gmra.mrb[0].mxu0 %v2881
  %v3002 = vpop.f32.mrb[0].mxu0
  %v3003 = vadd.f32 %v2867, %v3002
  %v3004 = vpop.f32.mrb[0].mxu0
  %3005 = vmatprep.mubr.f32.mxu0 0.0
  %3006 = vmatmul.mubr.f32.gmra.mrb[0].mxu0 %v2884
  %v3007 = vpop.f32.mrb[0].mxu0
  %v3008 = vadd.f32 %v2867, %v3007
  %v3009 = vpop.f32.mrb[0].mxu0
  %3010 = vmatprep.mubr.f32.mxu0 0.0
  %3011 = vmatmul.mubr.f32.gmra.mrb[0].mxu0 %v2887
  %v3012 = vpop.f32.mrb[0].mxu0
  %v3013 = vadd.f32 %v2867, %v3012
  %v3014 = vpop.f32.mrb[0].mxu0
  %3015 = vmatprep.mubr.f32.mxu0 0.0
  %3016 = vmatmul.mubr.f32.gmra.mrb[0].mxu0 %v2890
  %v3017 = vpop.f32.mrb[0].mxu0
  %v3018 = vadd.f32 %v2867, %v3017
  %v3019 = vpop.f32.mrb[0].mxu0
  %3020 = vmatprep.mubr.f32.mxu0 0.0
  %3021 = vmatmul.mubr.f32.gmra.mrb[0].mxu0 %v2893
  %v3022 = vpop.f32.mrb[0].mxu0
  %v3023 = vadd.f32 %v2867, %v3022
  %v3024 = vpop.f32.mrb[0].mxu0
  %3025 = vmatprep.mubr.f32.mxu0 0.0
  %3026 = vmatmul.mubr.f32.gmra.mrb[0].mxu0 %v2896
  %v3027 = vpop.f32.mrb[0].mxu0
  %v3028 = vadd.f32 %v2867, %v3027
  %v3029 = vpop.f32.mrb[0].mxu0
  %3030 = vmatprep.mubr.f32.mxu0 0.0
  %3031 = vmatmul.mubr.f32.gmra.mrb[0].mxu0 %v2899
  %v3032 = vpop.f32.mrb[0].mxu0
  %v3033 = vadd.f32 %v2867, %v3032
  %v3034 = vpop.f32.mrb[0].mxu0
  %3035 = vmatprep.mubr.f32.mxu0 0.0
  %3036 = vmatmul.mubr.f32.gmra.mrb[0].mxu0 %v2902
  %v3037 = vpop.f32.mrb[0].mxu0
  %v3038 = vadd.f32 %v2867, %v3037
  %v3039 = vpop.f32.mrb[0].mxu0
  %3040 = vmatprep.mubr.f32.mxu0 0.0
  %3041 = vmatmul.mubr.f32.gmra.mrb[0].mxu0 %v2905
  %v3042 = vpop.f32.mrb[0].mxu0
  %v3043 = vadd.f32 %v2867, %v3042
  %v3044 = vpop.f32.mrb[0].mxu0
  %3045 = vmatprep.mubr.f32.mxu0 0.0
  %3046 = vmatmul.mubr.f32.gmra.mrb[0].mxu0 %v2908
  %v3047 = vpop.f32.mrb[0].mxu0
  %v3048 = vadd.f32 %v2867, %v3047
  %v3049 = vpop.f32.mrb[0].mxu0
  %3050 = vmatprep.mubr.f32.mxu0 0.0
  %3051 = vmatmul.mubr.f32.gmra.mrb[0].mxu0 %v2911
  %v3052 = vpop.f32.mrb[0].mxu0
  %v3053 = vadd.f32 %v2867, %v3052
  %v3054 = vpop.f32.mrb[0].mxu0
  %3055 = vmatprep.mubr.f32.mxu0 0.0
  %3056 = vmatmul.mubr.f32.gmra.mrb[0].mxu0 %v2914
  %v3057 = vpop.f32.mrb[0].mxu0
  %v3058 = vadd.f32 %v2867, %v3057
  %v3059 = vpop.f32.mrb[0].mxu0
  %3060 = vdwg.mxu0
  %v3061 = vmul.f32 %v2983, %v2983
  %v3062 = vmul.f32 %v2988, %v2988
  %v3063 = vmul.f32 %v2993, %v2993
  %v3064 = vmul.f32 %v2998, %v2998
  %v3065 = vmul.f32 %v3003, %v3003
  %v3066 = vmul.f32 %v3008, %v3008
  %v3067 = vmul.f32 %v3013, %v3013
  %v3068 = vmul.f32 %v3018, %v3018
  %v3069 = vmul.f32 %v3023, %v3023
  %v3070 = vmul.f32 %v3028, %v3028
  %v3071 = vmul.f32 %v3033, %v3033
  %v3072 = vmul.f32 %v3038, %v3038
  %v3073 = vmul.f32 %v3043, %v3043
  %v3074 = vmul.f32 %v3048, %v3048
  %v3075 = vmul.f32 %v3053, %v3053
  %v3076 = vmul.f32 %v3058, %v3058
  %v3077 = vmul.f32 %v2983, %v3061
  %v3078 = vmul.f32 %v2988, %v3062
  %v3079 = vmul.f32 %v2993, %v3063
  %v3080 = vmul.f32 %v2998, %v3064
  %v3081 = vmul.f32 %v3003, %v3065
  %v3082 = vmul.f32 %v3008, %v3066
  %v3083 = vmul.f32 %v3013, %v3067
  %v3084 = vmul.f32 %v3018, %v3068
  %v3085 = vmul.f32 %v3023, %v3069
  %v3086 = vmul.f32 %v3028, %v3070
  %v3087 = vmul.f32 %v3033, %v3071
  %v3088 = vmul.f32 %v3038, %v3072
  %v3089 = vmul.f32 %v3043, %v3073
  %v3090 = vmul.f32 %v3048, %v3074
  %v3091 = vmul.f32 %v3053, %v3075
  %v3092 = vmul.f32 %v3058, %v3076
  %v3093 = vmul.f32 %v3077, 0.044715
  %v3094 = vmul.f32 %v3078, 0.044715
  %v3095 = vmul.f32 %v3079, 0.044715
  %v3096 = vmul.f32 %v3080, 0.044715
  %v3097 = vmul.f32 %v3081, 0.044715
  %v3098 = vmul.f32 %v3082, 0.044715
  %v3099 = vmul.f32 %v3083, 0.044715
  %v3100 = vmul.f32 %v3084, 0.044715
  %v3101 = vmul.f32 %v3085, 0.044715
  %v3102 = vmul.f32 %v3086, 0.044715
  %v3103 = vmul.f32 %v3087, 0.044715
  %v3104 = vmul.f32 %v3088, 0.044715
  %v3105 = vmul.f32 %v3089, 0.044715
  %v3106 = vmul.f32 %v3090, 0.044715
  %v3107 = vmul.f32 %v3091, 0.044715
  %v3108 = vmul.f32 %v3092, 0.044715
  %v3109 = vadd.f32 %v2983, %v3093
  %v3110 = vadd.f32 %v2988, %v3094
  %v3111 = vadd.f32 %v2993, %v3095
  %v3112 = vadd.f32 %v2998, %v3096
  %v3113 = vadd.f32 %v3003, %v3097
  %v3114 = vadd.f32 %v3008, %v3098
  %v3115 = vadd.f32 %v3013, %v3099
  %v3116 = vadd.f32 %v3018, %v3100
  %v3117 = vadd.f32 %v3023, %v3101
  %v3118 = vadd.f32 %v3028, %v3102
  %v3119 = vadd.f32 %v3033, %v3103
  %v3120 = vadd.f32 %v3038, %v3104
  %v3121 = vadd.f32 %v3043, %v3105
  %v3122 = vadd.f32 %v3048, %v3106
  %v3123 = vadd.f32 %v3053, %v3107
  %v3124 = vadd.f32 %v3058, %v3108
  %v3125 = vmul.f32 %v3109, 0.7978846
  %v3126 = vmul.f32 %v3110, 0.7978846
  %v3127 = vmul.f32 %v3111, 0.7978846
  %v3128 = vmul.f32 %v3112, 0.7978846
  %v3129 = vmul.f32 %v3113, 0.7978846
  %v3130 = vmul.f32 %v3114, 0.7978846
  %v3131 = vmul.f32 %v3115, 0.7978846
  %v3132 = vmul.f32 %v3116, 0.7978846
  %v3133 = vmul.f32 %v3117, 0.7978846
  %v3134 = vmul.f32 %v3118, 0.7978846
  %v3135 = vmul.f32 %v3119, 0.7978846
  %v3136 = vmul.f32 %v3120, 0.7978846
  %v3137 = vmul.f32 %v3121, 0.7978846
  %v3138 = vmul.f32 %v3122, 0.7978846
  %v3139 = vmul.f32 %v3123, 0.7978846
  %v3140 = vmul.f32 %v3124, 0.7978846
  %v3141 = vtanh.pop %v3125
  %v3142 = vtanh.pop %v3126
  %v3143 = vtanh.pop %v3127
  %v3144 = vtanh.pop %v3128
  %v3145 = vtanh.pop %v3129
  %v3146 = vtanh.pop %v3130
  %v3147 = vtanh.pop %v3131
  %v3148 = vtanh.pop %v3132
  %v3149 = vtanh.pop %v3133
  %v3150 = vtanh.pop %v3134
  %v3151 = vtanh.pop %v3135
  %v3152 = vtanh.pop %v3136
  %v3153 = vtanh.pop %v3137
  %v3154 = vtanh.pop %v3138
  %v3155 = vtanh.pop %v3139
  %v3156 = vtanh.pop %v3140
  %v3157 = vadd.f32 %v3141, 1.0
  %v3158 = vadd.f32 %v3142, 1.0
  %v3159 = vadd.f32 %v3143, 1.0
  %v3160 = vadd.f32 %v3144, 1.0
  %v3161 = vadd.f32 %v3145, 1.0
  %v3162 = vadd.f32 %v3146, 1.0
  %v3163 = vadd.f32 %v3147, 1.0
  %v3164 = vadd.f32 %v3148, 1.0
  %v3165 = vadd.f32 %v3149, 1.0
  %v3166 = vadd.f32 %v3150, 1.0
  %v3167 = vadd.f32 %v3151, 1.0
  %v3168 = vadd.f32 %v3152, 1.0
  %v3169 = vadd.f32 %v3153, 1.0
  %v3170 = vadd.f32 %v3154, 1.0
  %v3171 = vadd.f32 %v3155, 1.0
  %v3172 = vadd.f32 %v3156, 1.0
  %v3173 = vmul.f32 %v3157, 0.5
  %v3174 = vmul.f32 %v3158, 0.5
  %v3175 = vmul.f32 %v3159, 0.5
  %v3176 = vmul.f32 %v3160, 0.5
  %v3177 = vmul.f32 %v3161, 0.5
  %v3178 = vmul.f32 %v3162, 0.5
  %v3179 = vmul.f32 %v3163, 0.5
  %v3180 = vmul.f32 %v3164, 0.5
  %v3181 = vmul.f32 %v3165, 0.5
  %v3182 = vmul.f32 %v3166, 0.5
  %v3183 = vmul.f32 %v3167, 0.5
  %v3184 = vmul.f32 %v3168, 0.5
  %v3185 = vmul.f32 %v3169, 0.5
  %v3186 = vmul.f32 %v3170, 0.5
  %v3187 = vmul.f32 %v3171, 0.5
  %v3188 = vmul.f32 %v3172, 0.5
  %v3189 = vmul.f32 %v2983, %v3173
  %v3190 = vmul.f32 %v2988, %v3174
  %v3191 = vmul.f32 %v2993, %v3175
  %v3192 = vmul.f32 %v2998, %v3176
  %v3193 = vmul.f32 %v3003, %v3177
  %v3194 = vmul.f32 %v3008, %v3178
  %v3195 = vmul.f32 %v3013, %v3179
  %v3196 = vmul.f32 %v3018, %v3180
  %v3197 = vmul.f32 %v3023, %v3181
  %v3198 = vmul.f32 %v3028, %v3182
  %v3199 = vmul.f32 %v3033, %v3183
  %v3200 = vmul.f32 %v3038, %v3184
  %v3201 = vmul.f32 %v3043, %v3185
  %v3202 = vmul.f32 %v3048, %v3186
  %v3203 = vmul.f32 %v3053, %v3187
  %v3204 = vmul.f32 %v3058, %v3188
  %v3205 = vld [vmem:[%s0 + $0x130] sm:$0xff]
  %v3206 = vld [vmem:[%s0 + $0x138] sm:$0xff]
  %v3207 = vld [vmem:[%s0 + $0x140] sm:$0xff]
  %v3208 = vld [vmem:[%s0 + $0x148] sm:$0xff]
  %v3209 = vld [vmem:[%s0 + $0x150] sm:$0xff]
  %v3210 = vld [vmem:[%s0 + $0x158] sm:$0xff]
  %v3211 = vld [vmem:[%s0 + $0x160] sm:$0xff]
  %v3212 = vld [vmem:[%s0 + $0x168] sm:$0xff]
  %v3213 = vld [vmem:[%s0 + $0x170] sm:$0xff]
  %v3214 = vld [vmem:[%s0 + $0x178] sm:$0xff]
  %v3215 = vld [vmem:[%s0 + $0x180] sm:$0xff]
  %v3216 = vld [vmem:[%s0 + $0x188] sm:$0xff]
  %v3217 = vld [vmem:[%s0 + $0x190] sm:$0xff]
  %v3218 = vld [vmem:[%s0 + $0x198] sm:$0xff]
  %v3219 = vld [vmem:[%s0 + $0x1a0] sm:$0xff]
  %v3220 = vld [vmem:[%s0 + $0x1a8] sm:$0xff]
  %3221 = vmatprep.subr.mxu0 0.0
  %3222 = vmatpush1.msra.mxu0 %v3205
  %3223 = vmatprep.subr.mxu0 0.0
  %3224 = vmatpush1.msra.mxu0 %v3206
  %3225 = vmatprep.subr.mxu0 0.0
  %3226 = vmatpush1.msra.mxu0 %v3207
  %3227 = vmatprep.subr.mxu0 0.0
  %3228 = vmatpush1.msra.mxu0 %v3208
  %3229 = vmatprep.subr.mxu0 0.0
  %3230 = vmatpush1.msra.mxu0 %v3209
  %3231 = vmatprep.subr.mxu0 0.0
  %3232 = vmatpush1.msra.mxu0 %v3210
  %3233 = vmatprep.subr.mxu0 0.0
  %3234 = vmatpush1.msra.mxu0 %v3211
  %3235 = vmatprep.subr.mxu0 0.0
  %3236 = vmatpush1.msra.mxu0 %v3212
  %3237 = vmatprep.subr.mxu0 0.0
  %3238 = vmatpush1.msra.mxu0 %v3213
  %3239 = vmatprep.subr.mxu0 0.0
  %3240 = vmatpush1.msra.mxu0 %v3214
  %3241 = vmatprep.subr.mxu0 0.0
  %3242 = vmatpush1.msra.mxu0 %v3215
  %3243 = vmatprep.subr.mxu0 0.0
  %3244 = vmatpush1.msra.mxu0 %v3216
  %3245 = vmatprep.subr.mxu0 0.0
  %3246 = vmatpush1.msra.mxu0 %v3217
  %3247 = vmatprep.subr.mxu0 0.0
  %3248 = vmatpush1.msra.mxu0 %v3218
  %3249 = vmatprep.subr.mxu0 0.0
  %3250 = vmatpush1.msra.mxu0 %v3219
  %3251 = vmatprep.subr.mxu0 0.0
  %3252 = vmatpush1.msra.mxu0 %v3220
  %3253 = vmatprep.subr.mxu0 0.0
  %3254 = vmatpush1.msra.mxu0 0.0
  %3255 = vmatprep.subr.mxu0 0.0
  %3256 = vmatpush1.msra.mxu0 0.0
  %3257 = vmatprep.subr.mxu0 0.0
  %3258 = vmatpush1.msra.mxu0 0.0
  %3259 = vmatprep.subr.mxu0 0.0
  %3260 = vmatpush1.msra.mxu0 0.0
  %3261 = vmatprep.subr.mxu0 0.0
  %3262 = vmatpush1.msra.mxu0 0.0
  %3263 = vmatprep.subr.mxu0 0.0
  %3264 = vmatpush1.msra.mxu0 0.0
  %3265 = vmatprep.subr.mxu0 0.0
  %3266 = vmatpush1.msra.mxu0 0.0
  %3267 = vmatprep.subr.mxu0 0.0
  %3268 = vmatpush1.msra.mxu0 0.0
  %3269 = vmatprep.subr.mxu0 0.0
  %3270 = vmatpush1.msra.mxu0 0.0
  %3271 = vmatprep.subr.mxu0 0.0
  %3272 = vmatpush1.msra.mxu0 0.0
  %3273 = vmatprep.subr.mxu0 0.0
  %3274 = vmatpush1.msra.mxu0 0.0
  %3275 = vmatprep.subr.mxu0 0.0
  %3276 = vmatpush1.msra.mxu0 0.0
  %3277 = vmatprep.subr.mxu0 0.0
  %3278 = vmatpush1.msra.mxu0 0.0
  %3279 = vmatprep.subr.mxu0 0.0
  %3280 = vmatpush1.msra.mxu0 0.0
  %3281 = vmatprep.subr.mxu0 0.0
  %3282 = vmatpush1.msra.mxu0 0.0
  %3283 = vmatprep.subr.mxu0 0.0
  %3284 = vmatpush1.msra.mxu0 0.0
  %3285 = vmatprep.mubr.f32.mxu0 0.0
  %3286 = vmatmul.mubr.f32.gmra.mrb[0].mxu0 %v3189
  %v3287 = vpop.f32.mrb[0].mxu0
  %v3288 = vadd.f32 0.0, %v3287
  %v3289 = vpop.f32.mrb[0].mxu0
  %3290 = vmatprep.mubr.f32.mxu0 0.0
  %3291 = vmatmul.mubr.f32.gmra.mrb[0].mxu0 %v3190
  %v3292 = vpop.f32.mrb[0].mxu0
  %v3293 = vadd.f32 0.0, %v3292
  %v3294 = vpop.f32.mrb[0].mxu0
  %3295 = vmatprep.mubr.f32.mxu0 0.0
  %3296 = vmatmul.mubr.f32.gmra.mrb[0].mxu0 %v3191
  %v3297 = vpop.f32.mrb[0].mxu0
  %v3298 = vadd.f32 0.0, %v3297
  %v3299 = vpop.f32.mrb[0].mxu0
  %3300 = vmatprep.mubr.f32.mxu0 0.0
  %3301 = vmatmul.mubr.f32.gmra.mrb[0].mxu0 %v3192
  %v3302 = vpop.f32.mrb[0].mxu0
  %v3303 = vadd.f32 0.0, %v3302
  %v3304 = vpop.f32.mrb[0].mxu0
  %3305 = vmatprep.mubr.f32.mxu0 0.0
  %3306 = vmatmul.mubr.f32.gmra.mrb[0].mxu0 %v3193
  %v3307 = vpop.f32.mrb[0].mxu0
  %v3308 = vadd.f32 0.0, %v3307
  %v3309 = vpop.f32.mrb[0].mxu0
  %3310 = vmatprep.mubr.f32.mxu0 0.0
  %3311 = vmatmul.mubr.f32.gmra.mrb[0].mxu0 %v3194
  %v3312 = vpop.f32.mrb[0].mxu0
  %v3313 = vadd.f32 0.0, %v3312
  %v3314 = vpop.f32.mrb[0].mxu0
  %3315 = vmatprep.mubr.f32.mxu0 0.0
  %3316 = vmatmul.mubr.f32.gmra.mrb[0].mxu0 %v3195
  %v3317 = vpop.f32.mrb[0].mxu0
  %v3318 = vadd.f32 0.0, %v3317
  %v3319 = vpop.f32.mrb[0].mxu0
  %3320 = vmatprep.mubr.f32.mxu0 0.0
  %3321 = vmatmul.mubr.f32.gmra.mrb[0].mxu0 %v3196
  %v3322 = vpop.f32.mrb[0].mxu0
  %v3323 = vadd.f32 0.0, %v3322
  %v3324 = vpop.f32.mrb[0].mxu0
  %3325 = vmatprep.mubr.f32.mxu0 0.0
  %3326 = vmatmul.mubr.f32.gmra.mrb[0].mxu0 %v3197
  %v3327 = vpop.f32.mrb[0].mxu0
  %v3328 = vadd.f32 0.0, %v3327
  %v3329 = vpop.f32.mrb[0].mxu0
  %3330 = vmatprep.mubr.f32.mxu0 0.0
  %3331 = vmatmul.mubr.f32.gmra.mrb[0].mxu0 %v3198
  %v3332 = vpop.f32.mrb[0].mxu0
  %v3333 = vadd.f32 0.0, %v3332
  %v3334 = vpop.f32.mrb[0].mxu0
  %3335 = vmatprep.mubr.f32.mxu0 0.0
  %3336 = vmatmul.mubr.f32.gmra.mrb[0].mxu0 %v3199
  %v3337 = vpop.f32.mrb[0].mxu0
  %v3338 = vadd.f32 0.0, %v3337
  %v3339 = vpop.f32.mrb[0].mxu0
  %3340 = vmatprep.mubr.f32.mxu0 0.0
  %3341 = vmatmul.mubr.f32.gmra.mrb[0].mxu0 %v3200
  %v3342 = vpop.f32.mrb[0].mxu0
  %v3343 = vadd.f32 0.0, %v3342
  %v3344 = vpop.f32.mrb[0].mxu0
  %3345 = vmatprep.mubr.f32.mxu0 0.0
  %3346 = vmatmul.mubr.f32.gmra.mrb[0].mxu0 %v3201
  %v3347 = vpop.f32.mrb[0].mxu0
  %v3348 = vadd.f32 0.0, %v3347
  %v3349 = vpop.f32.mrb[0].mxu0
  %3350 = vmatprep.mubr.f32.mxu0 0.0
  %3351 = vmatmul.mubr.f32.gmra.mrb[0].mxu0 %v3202
  %v3352 = vpop.f32.mrb[0].mxu0
  %v3353 = vadd.f32 0.0, %v3352
  %v3354 = vpop.f32.mrb[0].mxu0
  %3355 = vmatprep.mubr.f32.mxu0 0.0
  %3356 = vmatmul.mubr.f32.gmra.mrb[0].mxu0 %v3203
  %v3357 = vpop.f32.mrb[0].mxu0
  %v3358 = vadd.f32 0.0, %v3357
  %v3359 = vpop.f32.mrb[0].mxu0
  %3360 = vmatprep.mubr.f32.mxu0 0.0
  %3361 = vmatmul.mubr.f32.gmra.mrb[0].mxu0 %v3204
  %v3362 = vpop.f32.mrb[0].mxu0
  %v3363 = vadd.f32 0.0, %v3362
  %v3364 = vpop.f32.mrb[0].mxu0
  %3365 = vdwg.mxu0
  %v3366 = vadd.f32 %v2593, %v3288
  %v3367 = vadd.f32 %v2594, %v3293
  %v3368 = vadd.f32 %v2595, %v3298
  %v3369 = vadd.f32 %v2596, %v3303
  %v3370 = vadd.f32 %v2597, %v3308
  %v3371 = vadd.f32 %v2598, %v3313
  %v3372 = vadd.f32 %v2599, %v3318
  %v3373 = vadd.f32 %v2600, %v3323
  %v3374 = vadd.f32 %v2601, %v3328
  %v3375 = vadd.f32 %v2602, %v3333
  %v3376 = vadd.f32 %v2603, %v3338
  %v3377 = vadd.f32 %v2604, %v3343
  %v3378 = vadd.f32 %v2605, %v3348
  %v3379 = vadd.f32 %v2606, %v3353
  %v3380 = vadd.f32 %v2607, %v3358
  %v3381 = vadd.f32 %v2608, %v3363
  %v3382 = vld [vmem:[%s0 + $0x2c4] sm:$0x1]
  %v3383 = vlaneseq
  %v3384 = vshrl.u32 %v3383, 7
  %v3385 = vsub.s32 0, %v3384
  %v3386 = vrot.slane %v3382, %v3385
  %v3387 = vadd.f32 %v3366, %v3386
  %v3388 = vadd.f32 %v3367, %v3386
  %v3389 = vadd.f32 %v3368, %v3386
  %v3390 = vadd.f32 %v3369, %v3386
  %v3391 = vadd.f32 %v3370, %v3386
  %v3392 = vadd.f32 %v3371, %v3386
  %v3393 = vadd.f32 %v3372, %v3386
  %v3394 = vadd.f32 %v3373, %v3386
  %v3395 = vadd.f32 %v3374, %v3386
  %v3396 = vadd.f32 %v3375, %v3386
  %v3397 = vadd.f32 %v3376, %v3386
  %v3398 = vadd.f32 %v3377, %v3386
  %v3399 = vadd.f32 %v3378, %v3386
  %v3400 = vadd.f32 %v3379, %v3386
  %v3401 = vadd.f32 %v3380, %v3386
  %v3402 = vadd.f32 %v3381, %v3386
  %v3403 = vsel %vm403, %v3387, 0.0
  %3404 = vadd.xlane.f32.xlu0 %v3403
  %v3405 = vpop.xlane.xlu0 %3404
  %v3406 = vsel %vm403, %v3388, 0.0
  %3407 = vadd.xlane.f32.xlu0 %v3406
  %v3408 = vpop.xlane.xlu0 %3407
  %v3409 = vsel %vm403, %v3389, 0.0
  %3410 = vadd.xlane.f32.xlu0 %v3409
  %v3411 = vpop.xlane.xlu0 %3410
  %v3412 = vsel %vm403, %v3390, 0.0
  %3413 = vadd.xlane.f32.xlu0 %v3412
  %v3414 = vpop.xlane.xlu0 %3413
  %v3415 = vsel %vm403, %v3391, 0.0
  %3416 = vadd.xlane.f32.xlu0 %v3415
  %v3417 = vpop.xlane.xlu0 %3416
  %v3418 = vsel %vm403, %v3392, 0.0
  %3419 = vadd.xlane.f32.xlu0 %v3418
  %v3420 = vpop.xlane.xlu0 %3419
  %v3421 = vsel %vm403, %v3393, 0.0
  %3422 = vadd.xlane.f32.xlu0 %v3421
  %v3423 = vpop.xlane.xlu0 %3422
  %v3424 = vsel %vm403, %v3394, 0.0
  %3425 = vadd.xlane.f32.xlu0 %v3424
  %v3426 = vpop.xlane.xlu0 %3425
  %v3427 = vsel %vm403, %v3395, 0.0
  %3428 = vadd.xlane.f32.xlu0 %v3427
  %v3429 = vpop.xlane.xlu0 %3428
  %v3430 = vsel %vm403, %v3396, 0.0
  %3431 = vadd.xlane.f32.xlu0 %v3430
  %v3432 = vpop.xlane.xlu0 %3431
  %v3433 = vsel %vm403, %v3397, 0.0
  %3434 = vadd.xlane.f32.xlu0 %v3433
  %v3435 = vpop.xlane.xlu0 %3434
  %v3436 = vsel %vm403, %v3398, 0.0
  %3437 = vadd.xlane.f32.xlu0 %v3436
  %v3438 = vpop.xlane.xlu0 %3437
  %v3439 = vsel %vm403, %v3399, 0.0
  %3440 = vadd.xlane.f32.xlu0 %v3439
  %v3441 = vpop.xlane.xlu0 %3440
  %v3442 = vsel %vm403, %v3400, 0.0
  %3443 = vadd.xlane.f32.xlu0 %v3442
  %v3444 = vpop.xlane.xlu0 %3443
  %v3445 = vsel %vm403, %v3401, 0.0
  %3446 = vadd.xlane.f32.xlu0 %v3445
  %v3447 = vpop.xlane.xlu0 %3446
  %v3448 = vsel %vm403, %v3402, 0.0
  %3449 = vadd.xlane.f32.xlu0 %v3448
  %v3450 = vpop.xlane.xlu0 %3449
  %v3451 = vmul.f32 %v3405, %v868
  %v3452 = vmul.f32 %v3408, %v868
  %v3453 = vmul.f32 %v3411, %v868
  %v3454 = vmul.f32 %v3414, %v868
  %v3455 = vmul.f32 %v3417, %v868
  %v3456 = vmul.f32 %v3420, %v868
  %v3457 = vmul.f32 %v3423, %v868
  %v3458 = vmul.f32 %v3426, %v868
  %v3459 = vmul.f32 %v3429, %v868
  %v3460 = vmul.f32 %v3432, %v868
  %v3461 = vmul.f32 %v3435, %v868
  %v3462 = vmul.f32 %v3438, %v868
  %v3463 = vmul.f32 %v3441, %v868
  %v3464 = vmul.f32 %v3444, %v868
  %v3465 = vmul.f32 %v3447, %v868
  %v3466 = vmul.f32 %v3450, %v868
  %v3467 = vsub.f32 %v3387, %v3451
  %v3468 = vsub.f32 %v3388, %v3452
  %v3469 = vsub.f32 %v3389, %v3453
  %v3470 = vsub.f32 %v3390, %v3454
  %v3471 = vsub.f32 %v3391, %v3455
  %v3472 = vsub.f32 %v3392, %v3456
  %v3473 = vsub.f32 %v3393, %v3457
  %v3474 = vsub.f32 %v3394, %v3458
  %v3475 = vsub.f32 %v3395, %v3459
  %v3476 = vsub.f32 %v3396, %v3460
  %v3477 = vsub.f32 %v3397, %v3461
  %v3478 = vsub.f32 %v3398, %v3462
  %v3479 = vsub.f32 %v3399, %v3463
  %v3480 = vsub.f32 %v3400, %v3464
  %v3481 = vsub.f32 %v3401, %v3465
  %v3482 = vsub.f32 %v3402, %v3466
  %v3483 = vmul.f32 %v3467, %v3467
  %v3484 = vmul.f32 %v3468, %v3468
  %v3485 = vmul.f32 %v3469, %v3469
  %v3486 = vmul.f32 %v3470, %v3470
  %v3487 = vmul.f32 %v3471, %v3471
  %v3488 = vmul.f32 %v3472, %v3472
  %v3489 = vmul.f32 %v3473, %v3473
  %v3490 = vmul.f32 %v3474, %v3474
  %v3491 = vmul.f32 %v3475, %v3475
  %v3492 = vmul.f32 %v3476, %v3476
  %v3493 = vmul.f32 %v3477, %v3477
  %v3494 = vmul.f32 %v3478, %v3478
  %v3495 = vmul.f32 %v3479, %v3479
  %v3496 = vmul.f32 %v3480, %v3480
  %v3497 = vmul.f32 %v3481, %v3481
  %v3498 = vmul.f32 %v3482, %v3482
  %v3499 = vsel %vm403, %v3483, 0.0
  %3500 = vadd.xlane.f32.xlu0 %v3499
  %v3501 = vpop.xlane.xlu0 %3500
  %v3502 = vsel %vm403, %v3484, 0.0
  %3503 = vadd.xlane.f32.xlu0 %v3502
  %v3504 = vpop.xlane.xlu0 %3503
  %v3505 = vsel %vm403, %v3485, 0.0
  %3506 = vadd.xlane.f32.xlu0 %v3505
  %v3507 = vpop.xlane.xlu0 %3506
  %v3508 = vsel %vm403, %v3486, 0.0
  %3509 = vadd.xlane.f32.xlu0 %v3508
  %v3510 = vpop.xlane.xlu0 %3509
  %v3511 = vsel %vm403, %v3487, 0.0
  %3512 = vadd.xlane.f32.xlu0 %v3511
  %v3513 = vpop.xlane.xlu0 %3512
  %v3514 = vsel %vm403, %v3488, 0.0
  %3515 = vadd.xlane.f32.xlu0 %v3514
  %v3516 = vpop.xlane.xlu0 %3515
  %v3517 = vsel %vm403, %v3489, 0.0
  %3518 = vadd.xlane.f32.xlu0 %v3517
  %v3519 = vpop.xlane.xlu0 %3518
  %v3520 = vsel %vm403, %v3490, 0.0
  %3521 = vadd.xlane.f32.xlu0 %v3520
  %v3522 = vpop.xlane.xlu0 %3521
  %v3523 = vsel %vm403, %v3491, 0.0
  %3524 = vadd.xlane.f32.xlu0 %v3523
  %v3525 = vpop.xlane.xlu0 %3524
  %v3526 = vsel %vm403, %v3492, 0.0
  %3527 = vadd.xlane.f32.xlu0 %v3526
  %v3528 = vpop.xlane.xlu0 %3527
  %v3529 = vsel %vm403, %v3493, 0.0
  %3530 = vadd.xlane.f32.xlu0 %v3529
  %v3531 = vpop.xlane.xlu0 %3530
  %v3532 = vsel %vm403, %v3494, 0.0
  %3533 = vadd.xlane.f32.xlu0 %v3532
  %v3534 = vpop.xlane.xlu0 %3533
  %v3535 = vsel %vm403, %v3495, 0.0
  %3536 = vadd.xlane.f32.xlu0 %v3535
  %v3537 = vpop.xlane.xlu0 %3536
  %v3538 = vsel %vm403, %v3496, 0.0
  %3539 = vadd.xlane.f32.xlu0 %v3538
  %v3540 = vpop.xlane.xlu0 %3539
  %v3541 = vsel %vm403, %v3497, 0.0
  %3542 = vadd.xlane.f32.xlu0 %v3541
  %v3543 = vpop.xlane.xlu0 %3542
  %v3544 = vsel %vm403, %v3498, 0.0
  %3545 = vadd.xlane.f32.xlu0 %v3544
  %v3546 = vpop.xlane.xlu0 %3545
  %v3547 = vmul.f32 %v3501, %v868
  %v3548 = vmul.f32 %v3504, %v868
  %v3549 = vmul.f32 %v3507, %v868
  %v3550 = vmul.f32 %v3510, %v868
  %v3551 = vmul.f32 %v3513, %v868
  %v3552 = vmul.f32 %v3516, %v868
  %v3553 = vmul.f32 %v3519, %v868
  %v3554 = vmul.f32 %v3522, %v868
  %v3555 = vmul.f32 %v3525, %v868
  %v3556 = vmul.f32 %v3528, %v868
  %v3557 = vmul.f32 %v3531, %v868
  %v3558 = vmul.f32 %v3534, %v868
  %v3559 = vmul.f32 %v3537, %v868
  %v3560 = vmul.f32 %v3540, %v868
  %v3561 = vmul.f32 %v3543, %v868
  %v3562 = vmul.f32 %v3546, %v868
  %v3563 = vadd.f32 %v3547, 1e-06
  %v3564 = vadd.f32 %v3548, 1e-06
  %v3565 = vadd.f32 %v3549, 1e-06
  %v3566 = vadd.f32 %v3550, 1e-06
  %v3567 = vadd.f32 %v3551, 1e-06
  %v3568 = vadd.f32 %v3552, 1e-06
  %v3569 = vadd.f32 %v3553, 1e-06
  %v3570 = vadd.f32 %v3554, 1e-06
  %v3571 = vadd.f32 %v3555, 1e-06
  %v3572 = vadd.f32 %v3556, 1e-06
  %v3573 = vadd.f32 %v3557, 1e-06
  %v3574 = vadd.f32 %v3558, 1e-06
  %v3575 = vadd.f32 %v3559, 1e-06
  %v3576 = vadd.f32 %v3560, 1e-06
  %v3577 = vadd.f32 %v3561, 1e-06
  %v3578 = vadd.f32 %v3562, 1e-06
  %v3579 = vrsqrt.pop %v3563
  %v3580 = vrsqrt.pop %v3564
  %v3581 = vrsqrt.pop %v3565
  %v3582 = vrsqrt.pop %v3566
  %v3583 = vrsqrt.pop %v3567
  %v3584 = vrsqrt.pop %v3568
  %v3585 = vrsqrt.pop %v3569
  %v3586 = vrsqrt.pop %v3570
  %v3587 = vrsqrt.pop %v3571
  %v3588 = vrsqrt.pop %v3572
  %v3589 = vrsqrt.pop %v3573
  %v3590 = vrsqrt.pop %v3574
  %v3591 = vrsqrt.pop %v3575
  %v3592 = vrsqrt.pop %v3576
  %v3593 = vrsqrt.pop %v3577
  %v3594 = vrsqrt.pop %v3578
  %v3595 = vmul.f32 %v3467, %v3579
  %v3596 = vmul.f32 %v3468, %v3580
  %v3597 = vmul.f32 %v3469, %v3581
  %v3598 = vmul.f32 %v3470, %v3582
  %v3599 = vmul.f32 %v3471, %v3583
  %v3600 = vmul.f32 %v3472, %v3584
  %v3601 = vmul.f32 %v3473, %v3585
  %v3602 = vmul.f32 %v3474, %v3586
  %v3603 = vmul.f32 %v3475, %v3587
  %v3604 = vmul.f32 %v3476, %v3588
  %v3605 = vmul.f32 %v3477, %v3589
  %v3606 = vmul.f32 %v3478, %v3590
  %v3607 = vmul.f32 %v3479, %v3591
  %v3608 = vmul.f32 %v3480, %v3592
  %v3609 = vmul.f32 %v3481, %v3593
  %v3610 = vmul.f32 %v3482, %v3594
  %v3611 = vld [vmem:[%s0 + $0x2c5] sm:$0x1]
  %v3612 = vlaneseq
  %v3613 = vshrl.u32 %v3612, 7
  %v3614 = vsub.s32 0, %v3613
  %v3615 = vrot.slane %v3611, %v3614
  %v3616 = vmul.f32 %v3595, %v3615
  %v3617 = vmul.f32 %v3596, %v3615
  %v3618 = vmul.f32 %v3597, %v3615
  %v3619 = vmul.f32 %v3598, %v3615
  %v3620 = vmul.f32 %v3599, %v3615
  %v3621 = vmul.f32 %v3600, %v3615
  %v3622 = vmul.f32 %v3601, %v3615
  %v3623 = vmul.f32 %v3602, %v3615
  %v3624 = vmul.f32 %v3603, %v3615
  %v3625 = vmul.f32 %v3604, %v3615
  %v3626 = vmul.f32 %v3605, %v3615
  %v3627 = vmul.f32 %v3606, %v3615
  %v3628 = vmul.f32 %v3607, %v3615
  %v3629 = vmul.f32 %v3608, %v3615
  %v3630 = vmul.f32 %v3609, %v3615
  %v3631 = vmul.f32 %v3610, %v3615
  %v3632 = vld [vmem:[%s0 + $0x2c6] sm:$0x1]
  %v3633 = vlaneseq
  %v3634 = vshrl.u32 %v3633, 7
  %v3635 = vsub.s32 0, %v3634
  %v3636 = vrot.slane %v3632, %v3635
  %v3637 = vadd.f32 %v3616, %v3636
  %v3638 = vadd.f32 %v3617, %v3636
  %v3639 = vadd.f32 %v3618, %v3636
  %v3640 = vadd.f32 %v3619, %v3636
  %v3641 = vadd.f32 %v3620, %v3636
  %v3642 = vadd.f32 %v3621, %v3636
  %v3643 = vadd.f32 %v3622, %v3636
  %v3644 = vadd.f32 %v3623, %v3636
  %v3645 = vadd.f32 %v3624, %v3636
  %v3646 = vadd.f32 %v3625, %v3636
  %v3647 = vadd.f32 %v3626, %v3636
  %v3648 = vadd.f32 %v3627, %v3636
  %v3649 = vadd.f32 %v3628, %v3636
  %v3650 = vadd.f32 %v3629, %v3636
  %v3651 = vadd.f32 %v3630, %v3636
  %v3652 = vadd.f32 %v3631, %v3636
  %v3653 = vld [vmem:[%s0 + $0x1b0] sm:$0xff]
  %v3654 = vld [vmem:[%s0 + $0x1b8] sm:$0xff]
  %v3655 = vld [vmem:[%s0 + $0x2d0] sm:$0xff]
  %v3656 = vld [vmem:[%s0 + $0x2d8] sm:$0xff]
  %3658 = vset.pattern.permute.xlu0 0
  %3659 = vperm.xlu0 %3658, %v3655
  %v3660 = vpop.permute.xlu0 %3659
  %3663 = vset.pattern.permute.xlu0 0
  %3664 = vperm.xlu0 %3663, %v3656
  %v3665 = vpop.permute.xlu0 %3664
  %v3668 = vsel %vm403, %v3653, 0
  %v3671 = vsel %vm403, %v3654, 0
  %v3674 = vsel %vm403, %v3637, 0
  %v3677 = vsel %vm403, %v3638, 0
  %v3680 = vsel %vm403, %v3639, 0
  %v3683 = vsel %vm403, %v3640, 0
  %v3686 = vsel %vm403, %v3641, 0
  %v3689 = vsel %vm403, %v3642, 0
  %v3692 = vsel %vm403, %v3643, 0
  %v3695 = vsel %vm403, %v3644, 0
  %v3698 = vsel %vm403, %v3645, 0
  %v3701 = vsel %vm403, %v3646, 0
  %v3704 = vsel %vm403, %v3647, 0
  %v3707 = vsel %vm403, %v3648, 0
  %v3710 = vsel %vm403, %v3649, 0
  %v3713 = vsel %vm403, %v3650, 0
  %v3716 = vsel %vm403, %v3651, 0
  %v3719 = vsel %vm403, %v3652, 0
  %3721 = vmatprep.subr.mxu0 0.0
  %3722 = vmatpush1.xpose.msra.mxu0 %v3674
  %3723 = vmatprep.subr.mxu0 0.0
  %3724 = vmatpush1.xpose.msra.mxu0 %v3677
  %3725 = vmatprep.subr.mxu0 0.0
  %3726 = vmatpush1.xpose.msra.mxu0 %v3680
  %3727 = vmatprep.subr.mxu0 0.0
  %3728 = vmatpush1.xpose.msra.mxu0 %v3683
  %3729 = vmatprep.subr.mxu0 0.0
  %3730 = vmatpush1.xpose.msra.mxu0 %v3686
  %3731 = vmatprep.subr.mxu0 0.0
  %3732 = vmatpush1.xpose.msra.mxu0 %v3689
  %3733 = vmatprep.subr.mxu0 0.0
  %3734 = vmatpush1.xpose.msra.mxu0 %v3692
  %3735 = vmatprep.subr.mxu0 0.0
  %3736 = vmatpush1.xpose.msra.mxu0 %v3695
  %3737 = vmatprep.subr.mxu0 0.0
  %3738 = vmatpush1.xpose.msra.mxu0 %v3698
  %3739 = vmatprep.subr.mxu0 0.0
  %3740 = vmatpush1.xpose.msra.mxu0 %v3701
  %3741 = vmatprep.subr.mxu0 0.0
  %3742 = vmatpush1.xpose.msra.mxu0 %v3704
  %3743 = vmatprep.subr.mxu0 0.0
  %3744 = vmatpush1.xpose.msra.mxu0 %v3707
  %3745 = vmatprep.subr.mxu0 0.0
  %3746 = vmatpush1.xpose.msra.mxu0 %v3710
  %3747 = vmatprep.subr.mxu0 0.0
  %3748 = vmatpush1.xpose.msra.mxu0 %v3713
  %3749 = vmatprep.subr.mxu0 0.0
  %3750 = vmatpush1.xpose.msra.mxu0 %v3716
  %3751 = vmatprep.subr.mxu0 0.0
  %3752 = vmatpush1.xpose.msra.mxu0 %v3719
  %3753 = vmatprep.subr.mxu0 0.0
  %3754 = vmatpush1.xpose.msra.mxu0 0.0
  %3755 = vmatprep.subr.mxu0 0.0
  %3756 = vmatpush1.xpose.msra.mxu0 0.0
  %3757 = vmatprep.subr.mxu0 0.0
  %3758 = vmatpush1.xpose.msra.mxu0 0.0
  %3759 = vmatprep.subr.mxu0 0.0
  %3760 = vmatpush1.xpose.msra.mxu0 0.0
  %3761 = vmatprep.subr.mxu0 0.0
  %3762 = vmatpush1.xpose.msra.mxu0 0.0
  %3763 = vmatprep.subr.mxu0 0.0
  %3764 = vmatpush1.xpose.msra.mxu0 0.0
  %3765 = vmatprep.subr.mxu0 0.0
  %3766 = vmatpush1.xpose.msra.mxu0 0.0
  %3767 = vmatprep.subr.mxu0 0.0
  %3768 = vmatpush1.xpose.msra.mxu0 0.0
  %3769 = vmatprep.subr.mxu0 0.0
  %3770 = vmatpush1.xpose.msra.mxu0 0.0
  %3771 = vmatprep.subr.mxu0 0.0
  %3772 = vmatpush1.xpose.msra.mxu0 0.0
  %3773 = vmatprep.subr.mxu0 0.0
  %3774 = vmatpush1.xpose.msra.mxu0 0.0
  %3775 = vmatprep.subr.mxu0 0.0
  %3776 = vmatpush1.xpose.msra.mxu0 0.0
  %3777 = vmatprep.subr.mxu0 0.0
  %3778 = vmatpush1.xpose.msra.mxu0 0.0
  %3779 = vmatprep.subr.mxu0 0.0
  %3780 = vmatpush1.xpose.msra.mxu0 0.0
  %3781 = vmatprep.subr.mxu0 0.0
  %3782 = vmatpush1.xpose.msra.mxu0 0.0
  %3783 = vmatprep.subr.mxu0 0.0
  %3784 = vmatpush1.xpose.msra.mxu0 0.0
  %3785 = vmatprep.mubr.f32.mxu0 0.0
  %3786 = vmatmul.mubr.f32.gmra.mrb[0].mxu0 %v3668
  %v3787 = vpop.f32.mrb[0].mxu0
  %v3788 = vadd.f32 %v3660, %v3787
  %v3789 = vpop.f32.mrb[0].mxu0
  %3790 = vmatprep.mubr.f32.mxu0 0.0
  %3791 = vmatmul.mubr.f32.gmra.mrb[0].mxu0 %v3671
  %v3792 = vpop.f32.mrb[0].mxu0
  %v3793 = vadd.f32 %v3665, %v3792
  %v3794 = vpop.f32.mrb[0].mxu0
  %3795 = vdwg.mxu0
  %3796 = vst [vmem:[%s2] sm:$0xff] %v3788
  %3797 = vst [vmem:[%s2 + $0x8] sm:$0xff] %v3793
  // Predicated region
  $region10: #{ip_adapter_forward.1} parent=0 // pred_check
    _
  $region11: #{ip_adapter_forward.1} parent=0 // pred_check_branch
    %3799 = sbr.rel (0) target = $region13
  $region12: #{ip_adapter_forward.1} parent=0 // pred_region
    _
  $region13: #{ip_adapter_forward.1} parent=0 // pred_fallthru
    _
  // Predicated region
  $region14: #{ip_adapter_forward.1} parent=0 // pred_check
    _
  $region15: #{ip_adapter_forward.1} parent=0 // pred_check_branch
    %3801 = sbr.rel (0) target = $region17
  $region16: #{ip_adapter_forward.1} parent=0 // pred_region
    _
  $region17: #{ip_adapter_forward.1} parent=0 // pred_fallthru
    _

</llo_original>
